<compile_context>
chip_gen: v5e
topology: v5e:2x2
jax: 0.10.0
libtpu: 0.0.40
codegen_flags: <defaults>
</compile_context>

<pallas_src>
import random

import jax
import jax.numpy as jnp
from jax.experimental import pallas as pl
from jax.experimental.pallas import tpu as pltpu


B_PAD = 8      # sublane-aligned batch
V_PAD = 128    # lane-aligned (padded) vocab for the decoder head / one-hots

_VMEM = pl.BlockSpec(memory_space=pltpu.MemorySpace.VMEM)


# --------------------------- fused seq2seq kernel -----------------------------

def _seq2seq_kernel(x_enc_ref, trg_oh_ref, tf_ref,
                    enc_w_ref, enc_b_ref, dec_w_ref, dec_b_ref,
                    dec_emb_ref, out_w_ref, out_b_ref,
                    out_ref):
    src_len, b_pad, _ = x_enc_ref.shape
    trg_len, _, v_pad = out_ref.shape
    n_layers = enc_w_ref.shape[0]
    hid = enc_w_ref.shape[2] // 4

    def lstm_cell(x, h, c, w, b):
        # Fused gate matmul: single MXU push with contraction dim (E + H).
        xh = jnp.concatenate([x, h], axis=1)                      # (B, E+H)
        gates = jnp.dot(xh, w, preferred_element_type=jnp.float32) + b
        i = jax.nn.sigmoid(gates[:, 0 * hid:1 * hid])
        f = jax.nn.sigmoid(gates[:, 1 * hid:2 * hid])
        g = jnp.tanh(gates[:, 2 * hid:3 * hid])
        o = jax.nn.sigmoid(gates[:, 3 * hid:4 * hid])
        c_new = f * c + i * g
        h_new = o * jnp.tanh(c_new)
        return h_new, c_new

    # Hidden/cell state stays on-chip for the entire kernel.
    hs = [jnp.zeros((b_pad, hid), jnp.float32) for _ in range(n_layers)]
    cs = [jnp.zeros((b_pad, hid), jnp.float32) for _ in range(n_layers)]

    # ------------------------------ encoder -----------------------------------
    for t in range(src_len):                    # static trip count -> straight-line
        x = x_enc_ref[t]                        # (B, E) pre-embedded src token
        for l in range(n_layers):
            hs[l], cs[l] = lstm_cell(x, hs[l], cs[l], enc_w_ref[l], enc_b_ref[l])
            x = hs[l]                           # inter-layer dropout == identity

    # ------------------------------ decoder -----------------------------------
    out_ref[0] = jnp.zeros((b_pad, v_pad), jnp.float32)   # outputs[0] stays zero
    col = jax.lax.broadcasted_iota(jnp.int32, (b_pad, v_pad), 1)

    inp_oh = trg_oh_ref[0]                      # one-hot of trg[0] over padded vocab
    for t in range(1, trg_len):
        # Embedding lookup as a one-hot matmul (keeps the gather on the MXU).
        x = jnp.dot(inp_oh, dec_emb_ref[...], preferred_element_type=jnp.float32)
        for l in range(n_layers):
            hs[l], cs[l] = lstm_cell(x, hs[l], cs[l], dec_w_ref[l], dec_b_ref[l])
            x = hs[l]
        # Linear head; padded vocab columns carry a -1e9 bias so they never win.
        logits = (jnp.dot(x, out_w_ref[...], preferred_element_type=jnp.float32)
                  + out_b_ref[...])
        out_ref[t] = logits                     # lane-dense (v_pad = 128) store

        # argmax -> one-hot of the FIRST max index (PyTorch output.max(1)[1]).
        mx = jnp.max(logits, axis=1, keepdims=True)
        idx = jnp.min(jnp.where(logits == mx, col, v_pad), axis=1, keepdims=True)
        pred_oh = (col == idx).astype(jnp.float32)

        # Teacher-forcing select: tf is exactly 0.0 or 1.0, so this is exact.
        tf = tf_ref[t]                          # (1, 1)
        inp_oh = tf * trg_oh_ref[t] + (1.0 - tf) * pred_oh


def _seq2seq_pallas(x_enc, trg_oh, tf, enc_w, enc_b, dec_w, dec_b,
                    dec_emb_p, out_w_p, out_b_p):
    trg_len, b_pad, v_pad = trg_oh.shape
    return pl.pallas_call(
        _seq2seq_kernel,
        out_shape=jax.ShapeDtypeStruct((trg_len, b_pad, v_pad), jnp.float32),
        in_specs=[_VMEM] * 10,
        out_specs=_VMEM,
    )(x_enc, trg_oh, tf, enc_w, enc_b, dec_w, dec_b, dec_emb_p, out_w_p, out_b_p)


# ----------------------------- parameter setup ---------------------------------

def init_lstm_params(key, input_size, hid_dim, n_layers, scale=0.1):
    """Stacked per-layer fused weights [W_ih^T ; W_hh^T] -> (L, in+H, 4H), bias (L, 1, 4H)."""
    assert input_size == hid_dim, "fused [x|h] weight stacking assumes emb_dim == hid_dim"
    ws, bs = [], []
    for layer in range(n_layers):
        in_sz = input_size if layer == 0 else hid_dim
        key, k1, k2, k3, k4 = jax.random.split(key, 5)
        w_ih = jax.random.normal(k1, (4 * hid_dim, in_sz), jnp.float32) * scale
        w_hh = jax.random.normal(k2, (4 * hid_dim, hid_dim), jnp.float32) * scale
        b_ih = jax.random.normal(k3, (4 * hid_dim,), jnp.float32) * scale
        b_hh = jax.random.normal(k4, (4 * hid_dim,), jnp.float32) * scale
        ws.append(jnp.concatenate([w_ih.T, w_hh.T], axis=0))     # (in+H, 4H)
        bs.append((b_ih + b_hh).reshape(1, -1))                  # (1, 4H)
    return key, jnp.stack(ws), jnp.stack(bs)


# ----------------------------- seq2seq forward ---------------------------------

@jax.jit
def seq2seq_forward(src, trg, tf_mask, params):
    """src: (S, B) int32; trg: (T, B) int32; tf_mask: (T,) int 0/1 -> (T, B, vocab) f32."""
    enc_emb, enc_w, enc_b, dec_emb, dec_w, dec_b, out_w_t, out_b = params
    batch = src.shape[1]
    trg_len = trg.shape[0]
    vocab = out_w_t.shape[1]

    # Pad batch to 8 sublanes (padding rows compute garbage and are sliced off).
    pad_b = B_PAD - batch
    src_p = jnp.pad(src, ((0, 0), (0, pad_b)))
    trg_p = jnp.pad(trg, ((0, 0), (0, pad_b)))

    # Encoder embedding lookup is data-independent -> done once outside the kernel.
    x_enc = jnp.take(enc_emb, src_p, axis=0)                     # (S, B_PAD, E)

    # Teacher-forced decoder tokens as one-hots over the padded (lane-dense) vocab.
    trg_oh = jax.nn.one_hot(trg_p, V_PAD, dtype=jnp.float32)     # (T, B_PAD, V_PAD)
    tf = tf_mask.astype(jnp.float32).reshape(trg_len, 1, 1)

    # Pad vocab-sized params to 128 lanes; padded head columns get a -1e9 bias so
    # argmax can never select a padded token, padded embedding rows are zero.
    dec_emb_p = jnp.pad(dec_emb, ((0, V_PAD - vocab), (0, 0)))
    out_w_p = jnp.pad(out_w_t, ((0, 0), (0, V_PAD - vocab)))
    out_b_p = jnp.pad(out_b, ((0, 0), (0, V_PAD - vocab)), constant_values=-1e9)

    out_pad = _seq2seq_pallas(x_enc, trg_oh, tf, enc_w, enc_b, dec_w, dec_b,
                              dec_emb_p, out_w_p, out_b_p)
    return out_pad[:, :batch, :vocab]


# ----------------------------------- main ---------------------------------------

if __name__ == "__main__":
    random.seed(0)

    # Small, (8,128)-friendly sizes: 4*H = 128 (lane-aligned gate block).
    INPUT_DIM = 16      # encoder (src) vocab
    OUTPUT_DIM = 16     # decoder (trg) vocab
    EMB_DIM = 32
    HID_DIM = 32
    N_LAYERS = 2
    B = 2
    SRC_LEN = 8
    TRG_LEN = 8
    TEACHER_FORCING_RATIO = 0.5

    key = jax.random.PRNGKey(0)
    key, k_ee, k_de, k_ow, k_ob, k_src, k_trg = jax.random.split(key, 7)

    enc_emb = jax.random.normal(k_ee, (INPUT_DIM, EMB_DIM), jnp.float32) * 0.1
    dec_emb = jax.random.normal(k_de, (OUTPUT_DIM, EMB_DIM), jnp.float32) * 0.1
    out_w = jax.random.normal(k_ow, (OUTPUT_DIM, HID_DIM), jnp.float32) * 0.1
    out_b = jax.random.normal(k_ob, (OUTPUT_DIM,), jnp.float32) * 0.1

    key, enc_w, enc_b = init_lstm_params(key, EMB_DIM, HID_DIM, N_LAYERS)
    key, dec_w, dec_b = init_lstm_params(key, EMB_DIM, HID_DIM, N_LAYERS)

    params = (enc_emb, enc_w, enc_b, dec_emb, dec_w, dec_b,
              out_w.T, out_b.reshape(1, -1))

    src = jax.random.randint(k_src, (SRC_LEN, B), 0, INPUT_DIM, dtype=jnp.int32)
    trg = jax.random.randint(k_trg, (TRG_LEN, B), 0, OUTPUT_DIM, dtype=jnp.int32)

    # Teacher-forcing decisions: Python-level randomness per call (module semantics),
    # passed as data so the jitted/compiled program is reused across calls.
    tf_mask = jnp.array(
        [0] + [int(random.random() < TEACHER_FORCING_RATIO) for _ in range(1, TRG_LEN)],
        dtype=jnp.int32)

    outputs = seq2seq_forward(src, trg, tf_mask, params)
    outputs = jax.block_until_ready(outputs)

    assert outputs.shape == (TRG_LEN, B, OUTPUT_DIM)
    assert bool(jnp.all(jnp.isfinite(outputs)))
    print("KERNEL_OK")
</pallas_src>

<mosaic_0001>
module attributes {stable_mosaic.version = 11 : i64} {
  func.func @_seq2seq_kernel(%arg0: memref<8x8x32xf32, #tpu.memory_space<vmem>>, %arg1: memref<8x8x128xf32, #tpu.memory_space<vmem>>, %arg2: memref<8x1x1xf32, #tpu.memory_space<vmem>>, %arg3: memref<2x64x128xf32, #tpu.memory_space<vmem>>, %arg4: memref<2x1x128xf32, #tpu.memory_space<vmem>>, %arg5: memref<2x64x128xf32, #tpu.memory_space<vmem>>, %arg6: memref<2x1x128xf32, #tpu.memory_space<vmem>>, %arg7: memref<128x32xf32, #tpu.memory_space<vmem>>, %arg8: memref<32x128xf32, #tpu.memory_space<vmem>>, %arg9: memref<1x128xf32, #tpu.memory_space<vmem>>, %arg10: memref<8x8x128xf32, #tpu.memory_space<vmem>>) attributes {dimension_semantics = [], scalar_prefetch = 0 : i64, scratch_operands = 0 : i64, tpu.core_type = #tpu.core_type<tc>} {
    %cst = arith.constant 0.000000e+00 : f32
    %0 = vector.broadcast %cst : f32 to vector<8x32xf32>
    %cst_0 = arith.constant 0.000000e+00 : f32
    %1 = vector.broadcast %cst_0 : f32 to vector<8x32xf32>
    %cst_1 = arith.constant 0.000000e+00 : f32
    %2 = vector.broadcast %cst_1 : f32 to vector<8x32xf32>
    %cst_2 = arith.constant 0.000000e+00 : f32
    %3 = vector.broadcast %cst_2 : f32 to vector<8x32xf32>
    %c0 = arith.constant 0 : index
    %c0_3 = arith.constant 0 : index
    %c0_4 = arith.constant 0 : index
    %4 = vector.load %arg0[%c0, %c0_3, %c0_4] : memref<8x8x32xf32, #tpu.memory_space<vmem>>, vector<1x8x32xf32>
    %5 = vector.shape_cast %4 : vector<1x8x32xf32> to vector<8x32xf32>
    %c0_5 = arith.constant 0 : index
    %c0_6 = arith.constant 0 : index
    %c0_7 = arith.constant 0 : index
    %6 = vector.load %arg3[%c0_5, %c0_6, %c0_7] : memref<2x64x128xf32, #tpu.memory_space<vmem>>, vector<1x64x128xf32>
    %7 = vector.shape_cast %6 : vector<1x64x128xf32> to vector<64x128xf32>
    %c0_8 = arith.constant 0 : index
    %c0_9 = arith.constant 0 : index
    %c0_10 = arith.constant 0 : index
    %8 = vector.load %arg4[%c0_8, %c0_9, %c0_10] : memref<2x1x128xf32, #tpu.memory_space<vmem>>, vector<1x1x128xf32>
    %9 = vector.shape_cast %8 : vector<1x1x128xf32> to vector<1x128xf32>
    %10 = tpu.concatenate %5, %0 in 1 : vector<8x32xf32>, vector<8x32xf32> -> vector<8x64xf32>
    %cst_11 = arith.constant dense<0.000000e+00> : vector<8x128xf32>
    %11 = tpu.matmul %10, %7, %cst_11 {dimension_numbers = #tpu.dot_dimension_numbers<[1], [0], [0], [1], [0, 0, 1, 1], [], []>} : vector<8x64xf32>, vector<64x128xf32>, vector<8x128xf32> -> vector<8x128xf32>
    %12 = vector.broadcast %9 : vector<1x128xf32> to vector<8x128xf32>
    %13 = arith.addf %11, %12 : vector<8x128xf32>
    %14 = vector.extract_strided_slice %13 {offsets = [0, 0], sizes = [8, 32], strides = [1, 1]} : vector<8x128xf32> to vector<8x32xf32>
    %15 = arith.negf %14 : vector<8x32xf32>
    %16 = math.exp %15 : vector<8x32xf32>
    %cst_12 = arith.constant 1.000000e+00 : f32
    %17 = vector.broadcast %cst_12 : f32 to vector<8x32xf32>
    %18 = arith.addf %17, %16 : vector<8x32xf32>
    %19 = arith.divf %17, %18 : vector<8x32xf32>
    %20 = vector.extract_strided_slice %13 {offsets = [0, 32], sizes = [8, 32], strides = [1, 1]} : vector<8x128xf32> to vector<8x32xf32>
    %21 = arith.negf %20 : vector<8x32xf32>
    %22 = math.exp %21 : vector<8x32xf32>
    %cst_13 = arith.constant 1.000000e+00 : f32
    %23 = vector.broadcast %cst_13 : f32 to vector<8x32xf32>
    %24 = arith.addf %23, %22 : vector<8x32xf32>
    %25 = arith.divf %23, %24 : vector<8x32xf32>
    %26 = vector.extract_strided_slice %13 {offsets = [0, 64], sizes = [8, 32], strides = [1, 1]} : vector<8x128xf32> to vector<8x32xf32>
    %27 = math.tanh %26 : vector<8x32xf32>
    %28 = vector.extract_strided_slice %13 {offsets = [0, 96], sizes = [8, 32], strides = [1, 1]} : vector<8x128xf32> to vector<8x32xf32>
    %29 = arith.negf %28 : vector<8x32xf32>
    %30 = math.exp %29 : vector<8x32xf32>
    %cst_14 = arith.constant 1.000000e+00 : f32
    %31 = vector.broadcast %cst_14 : f32 to vector<8x32xf32>
    %32 = arith.addf %31, %30 : vector<8x32xf32>
    %33 = arith.divf %31, %32 : vector<8x32xf32>
    %34 = arith.mulf %25, %2 : vector<8x32xf32>
    %35 = arith.mulf %19, %27 : vector<8x32xf32>
    %36 = arith.addf %34, %35 : vector<8x32xf32>
    %37 = math.tanh %36 : vector<8x32xf32>
    %38 = arith.mulf %33, %37 : vector<8x32xf32>
    %c1 = arith.constant 1 : index
    %c0_15 = arith.constant 0 : index
    %c0_16 = arith.constant 0 : index
    %39 = vector.load %arg3[%c1, %c0_15, %c0_16] : memref<2x64x128xf32, #tpu.memory_space<vmem>>, vector<1x64x128xf32>
    %40 = vector.shape_cast %39 : vector<1x64x128xf32> to vector<64x128xf32>
    %c1_17 = arith.constant 1 : index
    %c0_18 = arith.constant 0 : index
    %c0_19 = arith.constant 0 : index
    %41 = vector.load %arg4[%c1_17, %c0_18, %c0_19] : memref<2x1x128xf32, #tpu.memory_space<vmem>>, vector<1x1x128xf32>
    %42 = vector.shape_cast %41 : vector<1x1x128xf32> to vector<1x128xf32>
    %43 = tpu.concatenate %38, %1 in 1 : vector<8x32xf32>, vector<8x32xf32> -> vector<8x64xf32>
    %cst_20 = arith.constant dense<0.000000e+00> : vector<8x128xf32>
    %44 = tpu.matmul %43, %40, %cst_20 {dimension_numbers = #tpu.dot_dimension_numbers<[1], [0], [0], [1], [0, 0, 1, 1], [], []>} : vector<8x64xf32>, vector<64x128xf32>, vector<8x128xf32> -> vector<8x128xf32>
    %45 = vector.broadcast %42 : vector<1x128xf32> to vector<8x128xf32>
    %46 = arith.addf %44, %45 : vector<8x128xf32>
    %47 = vector.extract_strided_slice %46 {offsets = [0, 0], sizes = [8, 32], strides = [1, 1]} : vector<8x128xf32> to vector<8x32xf32>
    %48 = arith.negf %47 : vector<8x32xf32>
    %49 = math.exp %48 : vector<8x32xf32>
    %cst_21 = arith.constant 1.000000e+00 : f32
    %50 = vector.broadcast %cst_21 : f32 to vector<8x32xf32>
    %51 = arith.addf %50, %49 : vector<8x32xf32>
    %52 = arith.divf %50, %51 : vector<8x32xf32>
    %53 = vector.extract_strided_slice %46 {offsets = [0, 32], sizes = [8, 32], strides = [1, 1]} : vector<8x128xf32> to vector<8x32xf32>
    %54 = arith.negf %53 : vector<8x32xf32>
    %55 = math.exp %54 : vector<8x32xf32>
    %cst_22 = arith.constant 1.000000e+00 : f32
    %56 = vector.broadcast %cst_22 : f32 to vector<8x32xf32>
    %57 = arith.addf %56, %55 : vector<8x32xf32>
    %58 = arith.divf %56, %57 : vector<8x32xf32>
    %59 = vector.extract_strided_slice %46 {offsets = [0, 64], sizes = [8, 32], strides = [1, 1]} : vector<8x128xf32> to vector<8x32xf32>
    %60 = math.tanh %59 : vector<8x32xf32>
    %61 = vector.extract_strided_slice %46 {offsets = [0, 96], sizes = [8, 32], strides = [1, 1]} : vector<8x128xf32> to vector<8x32xf32>
    %62 = arith.negf %61 : vector<8x32xf32>
    %63 = math.exp %62 : vector<8x32xf32>
    %cst_23 = arith.constant 1.000000e+00 : f32
    %64 = vector.broadcast %cst_23 : f32 to vector<8x32xf32>
    %65 = arith.addf %64, %63 : vector<8x32xf32>
    %66 = arith.divf %64, %65 : vector<8x32xf32>
    %67 = arith.mulf %58, %3 : vector<8x32xf32>
    %68 = arith.mulf %52, %60 : vector<8x32xf32>
    %69 = arith.addf %67, %68 : vector<8x32xf32>
    %70 = math.tanh %69 : vector<8x32xf32>
    %71 = arith.mulf %66, %70 : vector<8x32xf32>
    %c1_24 = arith.constant 1 : index
    %c0_25 = arith.constant 0 : index
    %c0_26 = arith.constant 0 : index
    %72 = vector.load %arg0[%c1_24, %c0_25, %c0_26] : memref<8x8x32xf32, #tpu.memory_space<vmem>>, vector<1x8x32xf32>
    %73 = vector.shape_cast %72 : vector<1x8x32xf32> to vector<8x32xf32>
    %c0_27 = arith.constant 0 : index
    %c0_28 = arith.constant 0 : index
    %c0_29 = arith.constant 0 : index
    %74 = vector.load %arg3[%c0_27, %c0_28, %c0_29] : memref<2x64x128xf32, #tpu.memory_space<vmem>>, vector<1x64x128xf32>
    %75 = vector.shape_cast %74 : vector<1x64x128xf32> to vector<64x128xf32>
    %c0_30 = arith.constant 0 : index
    %c0_31 = arith.constant 0 : index
    %c0_32 = arith.constant 0 : index
    %76 = vector.load %arg4[%c0_30, %c0_31, %c0_32] : memref<2x1x128xf32, #tpu.memory_space<vmem>>, vector<1x1x128xf32>
    %77 = vector.shape_cast %76 : vector<1x1x128xf32> to vector<1x128xf32>
    %78 = tpu.concatenate %73, %38 in 1 : vector<8x32xf32>, vector<8x32xf32> -> vector<8x64xf32>
    %cst_33 = arith.constant dense<0.000000e+00> : vector<8x128xf32>
    %79 = tpu.matmul %78, %75, %cst_33 {dimension_numbers = #tpu.dot_dimension_numbers<[1], [0], [0], [1], [0, 0, 1, 1], [], []>} : vector<8x64xf32>, vector<64x128xf32>, vector<8x128xf32> -> vector<8x128xf32>
    %80 = vector.broadcast %77 : vector<1x128xf32> to vector<8x128xf32>
    %81 = arith.addf %79, %80 : vector<8x128xf32>
    %82 = vector.extract_strided_slice %81 {offsets = [0, 0], sizes = [8, 32], strides = [1, 1]} : vector<8x128xf32> to vector<8x32xf32>
    %83 = arith.negf %82 : vector<8x32xf32>
    %84 = math.exp %83 : vector<8x32xf32>
    %cst_34 = arith.constant 1.000000e+00 : f32
    %85 = vector.broadcast %cst_34 : f32 to vector<8x32xf32>
    %86 = arith.addf %85, %84 : vector<8x32xf32>
    %87 = arith.divf %85, %86 : vector<8x32xf32>
    %88 = vector.extract_strided_slice %81 {offsets = [0, 32], sizes = [8, 32], strides = [1, 1]} : vector<8x128xf32> to vector<8x32xf32>
    %89 = arith.negf %88 : vector<8x32xf32>
    %90 = math.exp %89 : vector<8x32xf32>
    %cst_35 = arith.constant 1.000000e+00 : f32
    %91 = vector.broadcast %cst_35 : f32 to vector<8x32xf32>
    %92 = arith.addf %91, %90 : vector<8x32xf32>
    %93 = arith.divf %91, %92 : vector<8x32xf32>
    %94 = vector.extract_strided_slice %81 {offsets = [0, 64], sizes = [8, 32], strides = [1, 1]} : vector<8x128xf32> to vector<8x32xf32>
    %95 = math.tanh %94 : vector<8x32xf32>
    %96 = vector.extract_strided_slice %81 {offsets = [0, 96], sizes = [8, 32], strides = [1, 1]} : vector<8x128xf32> to vector<8x32xf32>
    %97 = arith.negf %96 : vector<8x32xf32>
    %98 = math.exp %97 : vector<8x32xf32>
    %cst_36 = arith.constant 1.000000e+00 : f32
    %99 = vector.broadcast %cst_36 : f32 to vector<8x32xf32>
    %100 = arith.addf %99, %98 : vector<8x32xf32>
    %101 = arith.divf %99, %100 : vector<8x32xf32>
    %102 = arith.mulf %93, %36 : vector<8x32xf32>
    %103 = arith.mulf %87, %95 : vector<8x32xf32>
    %104 = arith.addf %102, %103 : vector<8x32xf32>
    %105 = math.tanh %104 : vector<8x32xf32>
    %106 = arith.mulf %101, %105 : vector<8x32xf32>
    %c1_37 = arith.constant 1 : index
    %c0_38 = arith.constant 0 : index
    %c0_39 = arith.constant 0 : index
    %107 = vector.load %arg3[%c1_37, %c0_38, %c0_39] : memref<2x64x128xf32, #tpu.memory_space<vmem>>, vector<1x64x128xf32>
    %108 = vector.shape_cast %107 : vector<1x64x128xf32> to vector<64x128xf32>
    %c1_40 = arith.constant 1 : index
    %c0_41 = arith.constant 0 : index
    %c0_42 = arith.constant 0 : index
    %109 = vector.load %arg4[%c1_40, %c0_41, %c0_42] : memref<2x1x128xf32, #tpu.memory_space<vmem>>, vector<1x1x128xf32>
    %110 = vector.shape_cast %109 : vector<1x1x128xf32> to vector<1x128xf32>
    %111 = tpu.concatenate %106, %71 in 1 : vector<8x32xf32>, vector<8x32xf32> -> vector<8x64xf32>
    %cst_43 = arith.constant dense<0.000000e+00> : vector<8x128xf32>
    %112 = tpu.matmul %111, %108, %cst_43 {dimension_numbers = #tpu.dot_dimension_numbers<[1], [0], [0], [1], [0, 0, 1, 1], [], []>} : vector<8x64xf32>, vector<64x128xf32>, vector<8x128xf32> -> vector<8x128xf32>
    %113 = vector.broadcast %110 : vector<1x128xf32> to vector<8x128xf32>
    %114 = arith.addf %112, %113 : vector<8x128xf32>
    %115 = vector.extract_strided_slice %114 {offsets = [0, 0], sizes = [8, 32], strides = [1, 1]} : vector<8x128xf32> to vector<8x32xf32>
    %116 = arith.negf %115 : vector<8x32xf32>
    %117 = math.exp %116 : vector<8x32xf32>
    %cst_44 = arith.constant 1.000000e+00 : f32
    %118 = vector.broadcast %cst_44 : f32 to vector<8x32xf32>
    %119 = arith.addf %118, %117 : vector<8x32xf32>
    %120 = arith.divf %118, %119 : vector<8x32xf32>
    %121 = vector.extract_strided_slice %114 {offsets = [0, 32], sizes = [8, 32], strides = [1, 1]} : vector<8x128xf32> to vector<8x32xf32>
    %122 = arith.negf %121 : vector<8x32xf32>
    %123 = math.exp %122 : vector<8x32xf32>
    %cst_45 = arith.constant 1.000000e+00 : f32
    %124 = vector.broadcast %cst_45 : f32 to vector<8x32xf32>
    %125 = arith.addf %124, %123 : vector<8x32xf32>
    %126 = arith.divf %124, %125 : vector<8x32xf32>
    %127 = vector.extract_strided_slice %114 {offsets = [0, 64], sizes = [8, 32], strides = [1, 1]} : vector<8x128xf32> to vector<8x32xf32>
    %128 = math.tanh %127 : vector<8x32xf32>
    %129 = vector.extract_strided_slice %114 {offsets = [0, 96], sizes = [8, 32], strides = [1, 1]} : vector<8x128xf32> to vector<8x32xf32>
    %130 = arith.negf %129 : vector<8x32xf32>
    %131 = math.exp %130 : vector<8x32xf32>
    %cst_46 = arith.constant 1.000000e+00 : f32
    %132 = vector.broadcast %cst_46 : f32 to vector<8x32xf32>
    %133 = arith.addf %132, %131 : vector<8x32xf32>
    %134 = arith.divf %132, %133 : vector<8x32xf32>
    %135 = arith.mulf %126, %69 : vector<8x32xf32>
    %136 = arith.mulf %120, %128 : vector<8x32xf32>
    %137 = arith.addf %135, %136 : vector<8x32xf32>
    %138 = math.tanh %137 : vector<8x32xf32>
    %139 = arith.mulf %134, %138 : vector<8x32xf32>
    %c2 = arith.constant 2 : index
    %c0_47 = arith.constant 0 : index
    %c0_48 = arith.constant 0 : index
    %140 = vector.load %arg0[%c2, %c0_47, %c0_48] : memref<8x8x32xf32, #tpu.memory_space<vmem>>, vector<1x8x32xf32>
    %141 = vector.shape_cast %140 : vector<1x8x32xf32> to vector<8x32xf32>
    %c0_49 = arith.constant 0 : index
    %c0_50 = arith.constant 0 : index
    %c0_51 = arith.constant 0 : index
    %142 = vector.load %arg3[%c0_49, %c0_50, %c0_51] : memref<2x64x128xf32, #tpu.memory_space<vmem>>, vector<1x64x128xf32>
    %143 = vector.shape_cast %142 : vector<1x64x128xf32> to vector<64x128xf32>
    %c0_52 = arith.constant 0 : index
    %c0_53 = arith.constant 0 : index
    %c0_54 = arith.constant 0 : index
    %144 = vector.load %arg4[%c0_52, %c0_53, %c0_54] : memref<2x1x128xf32, #tpu.memory_space<vmem>>, vector<1x1x128xf32>
    %145 = vector.shape_cast %144 : vector<1x1x128xf32> to vector<1x128xf32>
    %146 = tpu.concatenate %141, %106 in 1 : vector<8x32xf32>, vector<8x32xf32> -> vector<8x64xf32>
    %cst_55 = arith.constant dense<0.000000e+00> : vector<8x128xf32>
    %147 = tpu.matmul %146, %143, %cst_55 {dimension_numbers = #tpu.dot_dimension_numbers<[1], [0], [0], [1], [0, 0, 1, 1], [], []>} : vector<8x64xf32>, vector<64x128xf32>, vector<8x128xf32> -> vector<8x128xf32>
    %148 = vector.broadcast %145 : vector<1x128xf32> to vector<8x128xf32>
    %149 = arith.addf %147, %148 : vector<8x128xf32>
    %150 = vector.extract_strided_slice %149 {offsets = [0, 0], sizes = [8, 32], strides = [1, 1]} : vector<8x128xf32> to vector<8x32xf32>
    %151 = arith.negf %150 : vector<8x32xf32>
    %152 = math.exp %151 : vector<8x32xf32>
    %cst_56 = arith.constant 1.000000e+00 : f32
    %153 = vector.broadcast %cst_56 : f32 to vector<8x32xf32>
    %154 = arith.addf %153, %152 : vector<8x32xf32>
    %155 = arith.divf %153, %154 : vector<8x32xf32>
    %156 = vector.extract_strided_slice %149 {offsets = [0, 32], sizes = [8, 32], strides = [1, 1]} : vector<8x128xf32> to vector<8x32xf32>
    %157 = arith.negf %156 : vector<8x32xf32>
    %158 = math.exp %157 : vector<8x32xf32>
    %cst_57 = arith.constant 1.000000e+00 : f32
    %159 = vector.broadcast %cst_57 : f32 to vector<8x32xf32>
    %160 = arith.addf %159, %158 : vector<8x32xf32>
    %161 = arith.divf %159, %160 : vector<8x32xf32>
    %162 = vector.extract_strided_slice %149 {offsets = [0, 64], sizes = [8, 32], strides = [1, 1]} : vector<8x128xf32> to vector<8x32xf32>
    %163 = math.tanh %162 : vector<8x32xf32>
    %164 = vector.extract_strided_slice %149 {offsets = [0, 96], sizes = [8, 32], strides = [1, 1]} : vector<8x128xf32> to vector<8x32xf32>
    %165 = arith.negf %164 : vector<8x32xf32>
    %166 = math.exp %165 : vector<8x32xf32>
    %cst_58 = arith.constant 1.000000e+00 : f32
    %167 = vector.broadcast %cst_58 : f32 to vector<8x32xf32>
    %168 = arith.addf %167, %166 : vector<8x32xf32>
    %169 = arith.divf %167, %168 : vector<8x32xf32>
    %170 = arith.mulf %161, %104 : vector<8x32xf32>
    %171 = arith.mulf %155, %163 : vector<8x32xf32>
    %172 = arith.addf %170, %171 : vector<8x32xf32>
    %173 = math.tanh %172 : vector<8x32xf32>
    %174 = arith.mulf %169, %173 : vector<8x32xf32>
    %c1_59 = arith.constant 1 : index
    %c0_60 = arith.constant 0 : index
    %c0_61 = arith.constant 0 : index
    %175 = vector.load %arg3[%c1_59, %c0_60, %c0_61] : memref<2x64x128xf32, #tpu.memory_space<vmem>>, vector<1x64x128xf32>
    %176 = vector.shape_cast %175 : vector<1x64x128xf32> to vector<64x128xf32>
    %c1_62 = arith.constant 1 : index
    %c0_63 = arith.constant 0 : index
    %c0_64 = arith.constant 0 : index
    %177 = vector.load %arg4[%c1_62, %c0_63, %c0_64] : memref<2x1x128xf32, #tpu.memory_space<vmem>>, vector<1x1x128xf32>
    %178 = vector.shape_cast %177 : vector<1x1x128xf32> to vector<1x128xf32>
    %179 = tpu.concatenate %174, %139 in 1 : vector<8x32xf32>, vector<8x32xf32> -> vector<8x64xf32>
    %cst_65 = arith.constant dense<0.000000e+00> : vector<8x128xf32>
    %180 = tpu.matmul %179, %176, %cst_65 {dimension_numbers = #tpu.dot_dimension_numbers<[1], [0], [0], [1], [0, 0, 1, 1], [], []>} : vector<8x64xf32>, vector<64x128xf32>, vector<8x128xf32> -> vector<8x128xf32>
    %181 = vector.broadcast %178 : vector<1x128xf32> to vector<8x128xf32>
    %182 = arith.addf %180, %181 : vector<8x128xf32>
    %183 = vector.extract_strided_slice %182 {offsets = [0, 0], sizes = [8, 32], strides = [1, 1]} : vector<8x128xf32> to vector<8x32xf32>
    %184 = arith.negf %183 : vector<8x32xf32>
    %185 = math.exp %184 : vector<8x32xf32>
    %cst_66 = arith.constant 1.000000e+00 : f32
    %186 = vector.broadcast %cst_66 : f32 to vector<8x32xf32>
    %187 = arith.addf %186, %185 : vector<8x32xf32>
    %188 = arith.divf %186, %187 : vector<8x32xf32>
    %189 = vector.extract_strided_slice %182 {offsets = [0, 32], sizes = [8, 32], strides = [1, 1]} : vector<8x128xf32> to vector<8x32xf32>
    %190 = arith.negf %189 : vector<8x32xf32>
    %191 = math.exp %190 : vector<8x32xf32>
    %cst_67 = arith.constant 1.000000e+00 : f32
    %192 = vector.broadcast %cst_67 : f32 to vector<8x32xf32>
    %193 = arith.addf %192, %191 : vector<8x32xf32>
    %194 = arith.divf %192, %193 : vector<8x32xf32>
    %195 = vector.extract_strided_slice %182 {offsets = [0, 64], sizes = [8, 32], strides = [1, 1]} : vector<8x128xf32> to vector<8x32xf32>
    %196 = math.tanh %195 : vector<8x32xf32>
    %197 = vector.extract_strided_slice %182 {offsets = [0, 96], sizes = [8, 32], strides = [1, 1]} : vector<8x128xf32> to vector<8x32xf32>
    %198 = arith.negf %197 : vector<8x32xf32>
    %199 = math.exp %198 : vector<8x32xf32>
    %cst_68 = arith.constant 1.000000e+00 : f32
    %200 = vector.broadcast %cst_68 : f32 to vector<8x32xf32>
    %201 = arith.addf %200, %199 : vector<8x32xf32>
    %202 = arith.divf %200, %201 : vector<8x32xf32>
    %203 = arith.mulf %194, %137 : vector<8x32xf32>
    %204 = arith.mulf %188, %196 : vector<8x32xf32>
    %205 = arith.addf %203, %204 : vector<8x32xf32>
    %206 = math.tanh %205 : vector<8x32xf32>
    %207 = arith.mulf %202, %206 : vector<8x32xf32>
    %c3 = arith.constant 3 : index
    %c0_69 = arith.constant 0 : index
    %c0_70 = arith.constant 0 : index
    %208 = vector.load %arg0[%c3, %c0_69, %c0_70] : memref<8x8x32xf32, #tpu.memory_space<vmem>>, vector<1x8x32xf32>
    %209 = vector.shape_cast %208 : vector<1x8x32xf32> to vector<8x32xf32>
    %c0_71 = arith.constant 0 : index
    %c0_72 = arith.constant 0 : index
    %c0_73 = arith.constant 0 : index
    %210 = vector.load %arg3[%c0_71, %c0_72, %c0_73] : memref<2x64x128xf32, #tpu.memory_space<vmem>>, vector<1x64x128xf32>
    %211 = vector.shape_cast %210 : vector<1x64x128xf32> to vector<64x128xf32>
    %c0_74 = arith.constant 0 : index
    %c0_75 = arith.constant 0 : index
    %c0_76 = arith.constant 0 : index
    %212 = vector.load %arg4[%c0_74, %c0_75, %c0_76] : memref<2x1x128xf32, #tpu.memory_space<vmem>>, vector<1x1x128xf32>
    %213 = vector.shape_cast %212 : vector<1x1x128xf32> to vector<1x128xf32>
    %214 = tpu.concatenate %209, %174 in 1 : vector<8x32xf32>, vector<8x32xf32> -> vector<8x64xf32>
    %cst_77 = arith.constant dense<0.000000e+00> : vector<8x128xf32>
    %215 = tpu.matmul %214, %211, %cst_77 {dimension_numbers = #tpu.dot_dimension_numbers<[1], [0], [0], [1], [0, 0, 1, 1], [], []>} : vector<8x64xf32>, vector<64x128xf32>, vector<8x128xf32> -> vector<8x128xf32>
    %216 = vector.broadcast %213 : vector<1x128xf32> to vector<8x128xf32>
    %217 = arith.addf %215, %216 : vector<8x128xf32>
    %218 = vector.extract_strided_slice %217 {offsets = [0, 0], sizes = [8, 32], strides = [1, 1]} : vector<8x128xf32> to vector<8x32xf32>
    %219 = arith.negf %218 : vector<8x32xf32>
    %220 = math.exp %219 : vector<8x32xf32>
    %cst_78 = arith.constant 1.000000e+00 : f32
    %221 = vector.broadcast %cst_78 : f32 to vector<8x32xf32>
    %222 = arith.addf %221, %220 : vector<8x32xf32>
    %223 = arith.divf %221, %222 : vector<8x32xf32>
    %224 = vector.extract_strided_slice %217 {offsets = [0, 32], sizes = [8, 32], strides = [1, 1]} : vector<8x128xf32> to vector<8x32xf32>
    %225 = arith.negf %224 : vector<8x32xf32>
    %226 = math.exp %225 : vector<8x32xf32>
    %cst_79 = arith.constant 1.000000e+00 : f32
    %227 = vector.broadcast %cst_79 : f32 to vector<8x32xf32>
    %228 = arith.addf %227, %226 : vector<8x32xf32>
    %229 = arith.divf %227, %228 : vector<8x32xf32>
    %230 = vector.extract_strided_slice %217 {offsets = [0, 64], sizes = [8, 32], strides = [1, 1]} : vector<8x128xf32> to vector<8x32xf32>
    %231 = math.tanh %230 : vector<8x32xf32>
    %232 = vector.extract_strided_slice %217 {offsets = [0, 96], sizes = [8, 32], strides = [1, 1]} : vector<8x128xf32> to vector<8x32xf32>
    %233 = arith.negf %232 : vector<8x32xf32>
    %234 = math.exp %233 : vector<8x32xf32>
    %cst_80 = arith.constant 1.000000e+00 : f32
    %235 = vector.broadcast %cst_80 : f32 to vector<8x32xf32>
    %236 = arith.addf %235, %234 : vector<8x32xf32>
    %237 = arith.divf %235, %236 : vector<8x32xf32>
    %238 = arith.mulf %229, %172 : vector<8x32xf32>
    %239 = arith.mulf %223, %231 : vector<8x32xf32>
    %240 = arith.addf %238, %239 : vector<8x32xf32>
    %241 = math.tanh %240 : vector<8x32xf32>
    %242 = arith.mulf %237, %241 : vector<8x32xf32>
    %c1_81 = arith.constant 1 : index
    %c0_82 = arith.constant 0 : index
    %c0_83 = arith.constant 0 : index
    %243 = vector.load %arg3[%c1_81, %c0_82, %c0_83] : memref<2x64x128xf32, #tpu.memory_space<vmem>>, vector<1x64x128xf32>
    %244 = vector.shape_cast %243 : vector<1x64x128xf32> to vector<64x128xf32>
    %c1_84 = arith.constant 1 : index
    %c0_85 = arith.constant 0 : index
    %c0_86 = arith.constant 0 : index
    %245 = vector.load %arg4[%c1_84, %c0_85, %c0_86] : memref<2x1x128xf32, #tpu.memory_space<vmem>>, vector<1x1x128xf32>
    %246 = vector.shape_cast %245 : vector<1x1x128xf32> to vector<1x128xf32>
    %247 = tpu.concatenate %242, %207 in 1 : vector<8x32xf32>, vector<8x32xf32> -> vector<8x64xf32>
    %cst_87 = arith.constant dense<0.000000e+00> : vector<8x128xf32>
    %248 = tpu.matmul %247, %244, %cst_87 {dimension_numbers = #tpu.dot_dimension_numbers<[1], [0], [0], [1], [0, 0, 1, 1], [], []>} : vector<8x64xf32>, vector<64x128xf32>, vector<8x128xf32> -> vector<8x128xf32>
    %249 = vector.broadcast %246 : vector<1x128xf32> to vector<8x128xf32>
    %250 = arith.addf %248, %249 : vector<8x128xf32>
    %251 = vector.extract_strided_slice %250 {offsets = [0, 0], sizes = [8, 32], strides = [1, 1]} : vector<8x128xf32> to vector<8x32xf32>
    %252 = arith.negf %251 : vector<8x32xf32>
    %253 = math.exp %252 : vector<8x32xf32>
    %cst_88 = arith.constant 1.000000e+00 : f32
    %254 = vector.broadcast %cst_88 : f32 to vector<8x32xf32>
    %255 = arith.addf %254, %253 : vector<8x32xf32>
    %256 = arith.divf %254, %255 : vector<8x32xf32>
    %257 = vector.extract_strided_slice %250 {offsets = [0, 32], sizes = [8, 32], strides = [1, 1]} : vector<8x128xf32> to vector<8x32xf32>
    %258 = arith.negf %257 : vector<8x32xf32>
    %259 = math.exp %258 : vector<8x32xf32>
    %cst_89 = arith.constant 1.000000e+00 : f32
    %260 = vector.broadcast %cst_89 : f32 to vector<8x32xf32>
    %261 = arith.addf %260, %259 : vector<8x32xf32>
    %262 = arith.divf %260, %261 : vector<8x32xf32>
    %263 = vector.extract_strided_slice %250 {offsets = [0, 64], sizes = [8, 32], strides = [1, 1]} : vector<8x128xf32> to vector<8x32xf32>
    %264 = math.tanh %263 : vector<8x32xf32>
    %265 = vector.extract_strided_slice %250 {offsets = [0, 96], sizes = [8, 32], strides = [1, 1]} : vector<8x128xf32> to vector<8x32xf32>
    %266 = arith.negf %265 : vector<8x32xf32>
    %267 = math.exp %266 : vector<8x32xf32>
    %cst_90 = arith.constant 1.000000e+00 : f32
    %268 = vector.broadcast %cst_90 : f32 to vector<8x32xf32>
    %269 = arith.addf %268, %267 : vector<8x32xf32>
    %270 = arith.divf %268, %269 : vector<8x32xf32>
    %271 = arith.mulf %262, %205 : vector<8x32xf32>
    %272 = arith.mulf %256, %264 : vector<8x32xf32>
    %273 = arith.addf %271, %272 : vector<8x32xf32>
    %274 = math.tanh %273 : vector<8x32xf32>
    %275 = arith.mulf %270, %274 : vector<8x32xf32>
    %c4 = arith.constant 4 : index
    %c0_91 = arith.constant 0 : index
    %c0_92 = arith.constant 0 : index
    %276 = vector.load %arg0[%c4, %c0_91, %c0_92] : memref<8x8x32xf32, #tpu.memory_space<vmem>>, vector<1x8x32xf32>
    %277 = vector.shape_cast %276 : vector<1x8x32xf32> to vector<8x32xf32>
    %c0_93 = arith.constant 0 : index
    %c0_94 = arith.constant 0 : index
    %c0_95 = arith.constant 0 : index
    %278 = vector.load %arg3[%c0_93, %c0_94, %c0_95] : memref<2x64x128xf32, #tpu.memory_space<vmem>>, vector<1x64x128xf32>
    %279 = vector.shape_cast %278 : vector<1x64x128xf32> to vector<64x128xf32>
    %c0_96 = arith.constant 0 : index
    %c0_97 = arith.constant 0 : index
    %c0_98 = arith.constant 0 : index
    %280 = vector.load %arg4[%c0_96, %c0_97, %c0_98] : memref<2x1x128xf32, #tpu.memory_space<vmem>>, vector<1x1x128xf32>
    %281 = vector.shape_cast %280 : vector<1x1x128xf32> to vector<1x128xf32>
    %282 = tpu.concatenate %277, %242 in 1 : vector<8x32xf32>, vector<8x32xf32> -> vector<8x64xf32>
    %cst_99 = arith.constant dense<0.000000e+00> : vector<8x128xf32>
    %283 = tpu.matmul %282, %279, %cst_99 {dimension_numbers = #tpu.dot_dimension_numbers<[1], [0], [0], [1], [0, 0, 1, 1], [], []>} : vector<8x64xf32>, vector<64x128xf32>, vector<8x128xf32> -> vector<8x128xf32>
    %284 = vector.broadcast %281 : vector<1x128xf32> to vector<8x128xf32>
    %285 = arith.addf %283, %284 : vector<8x128xf32>
    %286 = vector.extract_strided_slice %285 {offsets = [0, 0], sizes = [8, 32], strides = [1, 1]} : vector<8x128xf32> to vector<8x32xf32>
    %287 = arith.negf %286 : vector<8x32xf32>
    %288 = math.exp %287 : vector<8x32xf32>
    %cst_100 = arith.constant 1.000000e+00 : f32
    %289 = vector.broadcast %cst_100 : f32 to vector<8x32xf32>
    %290 = arith.addf %289, %288 : vector<8x32xf32>
    %291 = arith.divf %289, %290 : vector<8x32xf32>
    %292 = vector.extract_strided_slice %285 {offsets = [0, 32], sizes = [8, 32], strides = [1, 1]} : vector<8x128xf32> to vector<8x32xf32>
    %293 = arith.negf %292 : vector<8x32xf32>
    %294 = math.exp %293 : vector<8x32xf32>
    %cst_101 = arith.constant 1.000000e+00 : f32
    %295 = vector.broadcast %cst_101 : f32 to vector<8x32xf32>
    %296 = arith.addf %295, %294 : vector<8x32xf32>
    %297 = arith.divf %295, %296 : vector<8x32xf32>
    %298 = vector.extract_strided_slice %285 {offsets = [0, 64], sizes = [8, 32], strides = [1, 1]} : vector<8x128xf32> to vector<8x32xf32>
    %299 = math.tanh %298 : vector<8x32xf32>
    %300 = vector.extract_strided_slice %285 {offsets = [0, 96], sizes = [8, 32], strides = [1, 1]} : vector<8x128xf32> to vector<8x32xf32>
    %301 = arith.negf %300 : vector<8x32xf32>
    %302 = math.exp %301 : vector<8x32xf32>
    %cst_102 = arith.constant 1.000000e+00 : f32
    %303 = vector.broadcast %cst_102 : f32 to vector<8x32xf32>
    %304 = arith.addf %303, %302 : vector<8x32xf32>
    %305 = arith.divf %303, %304 : vector<8x32xf32>
    %306 = arith.mulf %297, %240 : vector<8x32xf32>
    %307 = arith.mulf %291, %299 : vector<8x32xf32>
    %308 = arith.addf %306, %307 : vector<8x32xf32>
    %309 = math.tanh %308 : vector<8x32xf32>
    %310 = arith.mulf %305, %309 : vector<8x32xf32>
    %c1_103 = arith.constant 1 : index
    %c0_104 = arith.constant 0 : index
    %c0_105 = arith.constant 0 : index
    %311 = vector.load %arg3[%c1_103, %c0_104, %c0_105] : memref<2x64x128xf32, #tpu.memory_space<vmem>>, vector<1x64x128xf32>
    %312 = vector.shape_cast %311 : vector<1x64x128xf32> to vector<64x128xf32>
    %c1_106 = arith.constant 1 : index
    %c0_107 = arith.constant 0 : index
    %c0_108 = arith.constant 0 : index
    %313 = vector.load %arg4[%c1_106, %c0_107, %c0_108] : memref<2x1x128xf32, #tpu.memory_space<vmem>>, vector<1x1x128xf32>
    %314 = vector.shape_cast %313 : vector<1x1x128xf32> to vector<1x128xf32>
    %315 = tpu.concatenate %310, %275 in 1 : vector<8x32xf32>, vector<8x32xf32> -> vector<8x64xf32>
    %cst_109 = arith.constant dense<0.000000e+00> : vector<8x128xf32>
    %316 = tpu.matmul %315, %312, %cst_109 {dimension_numbers = #tpu.dot_dimension_numbers<[1], [0], [0], [1], [0, 0, 1, 1], [], []>} : vector<8x64xf32>, vector<64x128xf32>, vector<8x128xf32> -> vector<8x128xf32>
    %317 = vector.broadcast %314 : vector<1x128xf32> to vector<8x128xf32>
    %318 = arith.addf %316, %317 : vector<8x128xf32>
    %319 = vector.extract_strided_slice %318 {offsets = [0, 0], sizes = [8, 32], strides = [1, 1]} : vector<8x128xf32> to vector<8x32xf32>
    %320 = arith.negf %319 : vector<8x32xf32>
    %321 = math.exp %320 : vector<8x32xf32>
    %cst_110 = arith.constant 1.000000e+00 : f32
    %322 = vector.broadcast %cst_110 : f32 to vector<8x32xf32>
    %323 = arith.addf %322, %321 : vector<8x32xf32>
    %324 = arith.divf %322, %323 : vector<8x32xf32>
    %325 = vector.extract_strided_slice %318 {offsets = [0, 32], sizes = [8, 32], strides = [1, 1]} : vector<8x128xf32> to vector<8x32xf32>
    %326 = arith.negf %325 : vector<8x32xf32>
    %327 = math.exp %326 : vector<8x32xf32>
    %cst_111 = arith.constant 1.000000e+00 : f32
    %328 = vector.broadcast %cst_111 : f32 to vector<8x32xf32>
    %329 = arith.addf %328, %327 : vector<8x32xf32>
    %330 = arith.divf %328, %329 : vector<8x32xf32>
    %331 = vector.extract_strided_slice %318 {offsets = [0, 64], sizes = [8, 32], strides = [1, 1]} : vector<8x128xf32> to vector<8x32xf32>
    %332 = math.tanh %331 : vector<8x32xf32>
    %333 = vector.extract_strided_slice %318 {offsets = [0, 96], sizes = [8, 32], strides = [1, 1]} : vector<8x128xf32> to vector<8x32xf32>
    %334 = arith.negf %333 : vector<8x32xf32>
    %335 = math.exp %334 : vector<8x32xf32>
    %cst_112 = arith.constant 1.000000e+00 : f32
    %336 = vector.broadcast %cst_112 : f32 to vector<8x32xf32>
    %337 = arith.addf %336, %335 : vector<8x32xf32>
    %338 = arith.divf %336, %337 : vector<8x32xf32>
    %339 = arith.mulf %330, %273 : vector<8x32xf32>
    %340 = arith.mulf %324, %332 : vector<8x32xf32>
    %341 = arith.addf %339, %340 : vector<8x32xf32>
    %342 = math.tanh %341 : vector<8x32xf32>
    %343 = arith.mulf %338, %342 : vector<8x32xf32>
    %c5 = arith.constant 5 : index
    %c0_113 = arith.constant 0 : index
    %c0_114 = arith.constant 0 : index
    %344 = vector.load %arg0[%c5, %c0_113, %c0_114] : memref<8x8x32xf32, #tpu.memory_space<vmem>>, vector<1x8x32xf32>
    %345 = vector.shape_cast %344 : vector<1x8x32xf32> to vector<8x32xf32>
    %c0_115 = arith.constant 0 : index
    %c0_116 = arith.constant 0 : index
    %c0_117 = arith.constant 0 : index
    %346 = vector.load %arg3[%c0_115, %c0_116, %c0_117] : memref<2x64x128xf32, #tpu.memory_space<vmem>>, vector<1x64x128xf32>
    %347 = vector.shape_cast %346 : vector<1x64x128xf32> to vector<64x128xf32>
    %c0_118 = arith.constant 0 : index
    %c0_119 = arith.constant 0 : index
    %c0_120 = arith.constant 0 : index
    %348 = vector.load %arg4[%c0_118, %c0_119, %c0_120] : memref<2x1x128xf32, #tpu.memory_space<vmem>>, vector<1x1x128xf32>
    %349 = vector.shape_cast %348 : vector<1x1x128xf32> to vector<1x128xf32>
    %350 = tpu.concatenate %345, %310 in 1 : vector<8x32xf32>, vector<8x32xf32> -> vector<8x64xf32>
    %cst_121 = arith.constant dense<0.000000e+00> : vector<8x128xf32>
    %351 = tpu.matmul %350, %347, %cst_121 {dimension_numbers = #tpu.dot_dimension_numbers<[1], [0], [0], [1], [0, 0, 1, 1], [], []>} : vector<8x64xf32>, vector<64x128xf32>, vector<8x128xf32> -> vector<8x128xf32>
    %352 = vector.broadcast %349 : vector<1x128xf32> to vector<8x128xf32>
    %353 = arith.addf %351, %352 : vector<8x128xf32>
    %354 = vector.extract_strided_slice %353 {offsets = [0, 0], sizes = [8, 32], strides = [1, 1]} : vector<8x128xf32> to vector<8x32xf32>
    %355 = arith.negf %354 : vector<8x32xf32>
    %356 = math.exp %355 : vector<8x32xf32>
    %cst_122 = arith.constant 1.000000e+00 : f32
    %357 = vector.broadcast %cst_122 : f32 to vector<8x32xf32>
    %358 = arith.addf %357, %356 : vector<8x32xf32>
    %359 = arith.divf %357, %358 : vector<8x32xf32>
    %360 = vector.extract_strided_slice %353 {offsets = [0, 32], sizes = [8, 32], strides = [1, 1]} : vector<8x128xf32> to vector<8x32xf32>
    %361 = arith.negf %360 : vector<8x32xf32>
    %362 = math.exp %361 : vector<8x32xf32>
    %cst_123 = arith.constant 1.000000e+00 : f32
    %363 = vector.broadcast %cst_123 : f32 to vector<8x32xf32>
    %364 = arith.addf %363, %362 : vector<8x32xf32>
    %365 = arith.divf %363, %364 : vector<8x32xf32>
    %366 = vector.extract_strided_slice %353 {offsets = [0, 64], sizes = [8, 32], strides = [1, 1]} : vector<8x128xf32> to vector<8x32xf32>
    %367 = math.tanh %366 : vector<8x32xf32>
    %368 = vector.extract_strided_slice %353 {offsets = [0, 96], sizes = [8, 32], strides = [1, 1]} : vector<8x128xf32> to vector<8x32xf32>
    %369 = arith.negf %368 : vector<8x32xf32>
    %370 = math.exp %369 : vector<8x32xf32>
    %cst_124 = arith.constant 1.000000e+00 : f32
    %371 = vector.broadcast %cst_124 : f32 to vector<8x32xf32>
    %372 = arith.addf %371, %370 : vector<8x32xf32>
    %373 = arith.divf %371, %372 : vector<8x32xf32>
    %374 = arith.mulf %365, %308 : vector<8x32xf32>
    %375 = arith.mulf %359, %367 : vector<8x32xf32>
    %376 = arith.addf %374, %375 : vector<8x32xf32>
    %377 = math.tanh %376 : vector<8x32xf32>
    %378 = arith.mulf %373, %377 : vector<8x32xf32>
    %c1_125 = arith.constant 1 : index
    %c0_126 = arith.constant 0 : index
    %c0_127 = arith.constant 0 : index
    %379 = vector.load %arg3[%c1_125, %c0_126, %c0_127] : memref<2x64x128xf32, #tpu.memory_space<vmem>>, vector<1x64x128xf32>
    %380 = vector.shape_cast %379 : vector<1x64x128xf32> to vector<64x128xf32>
    %c1_128 = arith.constant 1 : index
    %c0_129 = arith.constant 0 : index
    %c0_130 = arith.constant 0 : index
    %381 = vector.load %arg4[%c1_128, %c0_129, %c0_130] : memref<2x1x128xf32, #tpu.memory_space<vmem>>, vector<1x1x128xf32>
    %382 = vector.shape_cast %381 : vector<1x1x128xf32> to vector<1x128xf32>
    %383 = tpu.concatenate %378, %343 in 1 : vector<8x32xf32>, vector<8x32xf32> -> vector<8x64xf32>
    %cst_131 = arith.constant dense<0.000000e+00> : vector<8x128xf32>
    %384 = tpu.matmul %383, %380, %cst_131 {dimension_numbers = #tpu.dot_dimension_numbers<[1], [0], [0], [1], [0, 0, 1, 1], [], []>} : vector<8x64xf32>, vector<64x128xf32>, vector<8x128xf32> -> vector<8x128xf32>
    %385 = vector.broadcast %382 : vector<1x128xf32> to vector<8x128xf32>
    %386 = arith.addf %384, %385 : vector<8x128xf32>
    %387 = vector.extract_strided_slice %386 {offsets = [0, 0], sizes = [8, 32], strides = [1, 1]} : vector<8x128xf32> to vector<8x32xf32>
    %388 = arith.negf %387 : vector<8x32xf32>
    %389 = math.exp %388 : vector<8x32xf32>
    %cst_132 = arith.constant 1.000000e+00 : f32
    %390 = vector.broadcast %cst_132 : f32 to vector<8x32xf32>
    %391 = arith.addf %390, %389 : vector<8x32xf32>
    %392 = arith.divf %390, %391 : vector<8x32xf32>
    %393 = vector.extract_strided_slice %386 {offsets = [0, 32], sizes = [8, 32], strides = [1, 1]} : vector<8x128xf32> to vector<8x32xf32>
    %394 = arith.negf %393 : vector<8x32xf32>
    %395 = math.exp %394 : vector<8x32xf32>
    %cst_133 = arith.constant 1.000000e+00 : f32
    %396 = vector.broadcast %cst_133 : f32 to vector<8x32xf32>
    %397 = arith.addf %396, %395 : vector<8x32xf32>
    %398 = arith.divf %396, %397 : vector<8x32xf32>
    %399 = vector.extract_strided_slice %386 {offsets = [0, 64], sizes = [8, 32], strides = [1, 1]} : vector<8x128xf32> to vector<8x32xf32>
    %400 = math.tanh %399 : vector<8x32xf32>
    %401 = vector.extract_strided_slice %386 {offsets = [0, 96], sizes = [8, 32], strides = [1, 1]} : vector<8x128xf32> to vector<8x32xf32>
    %402 = arith.negf %401 : vector<8x32xf32>
    %403 = math.exp %402 : vector<8x32xf32>
    %cst_134 = arith.constant 1.000000e+00 : f32
    %404 = vector.broadcast %cst_134 : f32 to vector<8x32xf32>
    %405 = arith.addf %404, %403 : vector<8x32xf32>
    %406 = arith.divf %404, %405 : vector<8x32xf32>
    %407 = arith.mulf %398, %341 : vector<8x32xf32>
    %408 = arith.mulf %392, %400 : vector<8x32xf32>
    %409 = arith.addf %407, %408 : vector<8x32xf32>
    %410 = math.tanh %409 : vector<8x32xf32>
    %411 = arith.mulf %406, %410 : vector<8x32xf32>
    %c6 = arith.constant 6 : index
    %c0_135 = arith.constant 0 : index
    %c0_136 = arith.constant 0 : index
    %412 = vector.load %arg0[%c6, %c0_135, %c0_136] : memref<8x8x32xf32, #tpu.memory_space<vmem>>, vector<1x8x32xf32>
    %413 = vector.shape_cast %412 : vector<1x8x32xf32> to vector<8x32xf32>
    %c0_137 = arith.constant 0 : index
    %c0_138 = arith.constant 0 : index
    %c0_139 = arith.constant 0 : index
    %414 = vector.load %arg3[%c0_137, %c0_138, %c0_139] : memref<2x64x128xf32, #tpu.memory_space<vmem>>, vector<1x64x128xf32>
    %415 = vector.shape_cast %414 : vector<1x64x128xf32> to vector<64x128xf32>
    %c0_140 = arith.constant 0 : index
    %c0_141 = arith.constant 0 : index
    %c0_142 = arith.constant 0 : index
    %416 = vector.load %arg4[%c0_140, %c0_141, %c0_142] : memref<2x1x128xf32, #tpu.memory_space<vmem>>, vector<1x1x128xf32>
    %417 = vector.shape_cast %416 : vector<1x1x128xf32> to vector<1x128xf32>
    %418 = tpu.concatenate %413, %378 in 1 : vector<8x32xf32>, vector<8x32xf32> -> vector<8x64xf32>
    %cst_143 = arith.constant dense<0.000000e+00> : vector<8x128xf32>
    %419 = tpu.matmul %418, %415, %cst_143 {dimension_numbers = #tpu.dot_dimension_numbers<[1], [0], [0], [1], [0, 0, 1, 1], [], []>} : vector<8x64xf32>, vector<64x128xf32>, vector<8x128xf32> -> vector<8x128xf32>
    %420 = vector.broadcast %417 : vector<1x128xf32> to vector<8x128xf32>
    %421 = arith.addf %419, %420 : vector<8x128xf32>
    %422 = vector.extract_strided_slice %421 {offsets = [0, 0], sizes = [8, 32], strides = [1, 1]} : vector<8x128xf32> to vector<8x32xf32>
    %423 = arith.negf %422 : vector<8x32xf32>
    %424 = math.exp %423 : vector<8x32xf32>
    %cst_144 = arith.constant 1.000000e+00 : f32
    %425 = vector.broadcast %cst_144 : f32 to vector<8x32xf32>
    %426 = arith.addf %425, %424 : vector<8x32xf32>
    %427 = arith.divf %425, %426 : vector<8x32xf32>
    %428 = vector.extract_strided_slice %421 {offsets = [0, 32], sizes = [8, 32], strides = [1, 1]} : vector<8x128xf32> to vector<8x32xf32>
    %429 = arith.negf %428 : vector<8x32xf32>
    %430 = math.exp %429 : vector<8x32xf32>
    %cst_145 = arith.constant 1.000000e+00 : f32
    %431 = vector.broadcast %cst_145 : f32 to vector<8x32xf32>
    %432 = arith.addf %431, %430 : vector<8x32xf32>
    %433 = arith.divf %431, %432 : vector<8x32xf32>
    %434 = vector.extract_strided_slice %421 {offsets = [0, 64], sizes = [8, 32], strides = [1, 1]} : vector<8x128xf32> to vector<8x32xf32>
    %435 = math.tanh %434 : vector<8x32xf32>
    %436 = vector.extract_strided_slice %421 {offsets = [0, 96], sizes = [8, 32], strides = [1, 1]} : vector<8x128xf32> to vector<8x32xf32>
    %437 = arith.negf %436 : vector<8x32xf32>
    %438 = math.exp %437 : vector<8x32xf32>
    %cst_146 = arith.constant 1.000000e+00 : f32
    %439 = vector.broadcast %cst_146 : f32 to vector<8x32xf32>
    %440 = arith.addf %439, %438 : vector<8x32xf32>
    %441 = arith.divf %439, %440 : vector<8x32xf32>
    %442 = arith.mulf %433, %376 : vector<8x32xf32>
    %443 = arith.mulf %427, %435 : vector<8x32xf32>
    %444 = arith.addf %442, %443 : vector<8x32xf32>
    %445 = math.tanh %444 : vector<8x32xf32>
    %446 = arith.mulf %441, %445 : vector<8x32xf32>
    %c1_147 = arith.constant 1 : index
    %c0_148 = arith.constant 0 : index
    %c0_149 = arith.constant 0 : index
    %447 = vector.load %arg3[%c1_147, %c0_148, %c0_149] : memref<2x64x128xf32, #tpu.memory_space<vmem>>, vector<1x64x128xf32>
    %448 = vector.shape_cast %447 : vector<1x64x128xf32> to vector<64x128xf32>
    %c1_150 = arith.constant 1 : index
    %c0_151 = arith.constant 0 : index
    %c0_152 = arith.constant 0 : index
    %449 = vector.load %arg4[%c1_150, %c0_151, %c0_152] : memref<2x1x128xf32, #tpu.memory_space<vmem>>, vector<1x1x128xf32>
    %450 = vector.shape_cast %449 : vector<1x1x128xf32> to vector<1x128xf32>
    %451 = tpu.concatenate %446, %411 in 1 : vector<8x32xf32>, vector<8x32xf32> -> vector<8x64xf32>
    %cst_153 = arith.constant dense<0.000000e+00> : vector<8x128xf32>
    %452 = tpu.matmul %451, %448, %cst_153 {dimension_numbers = #tpu.dot_dimension_numbers<[1], [0], [0], [1], [0, 0, 1, 1], [], []>} : vector<8x64xf32>, vector<64x128xf32>, vector<8x128xf32> -> vector<8x128xf32>
    %453 = vector.broadcast %450 : vector<1x128xf32> to vector<8x128xf32>
    %454 = arith.addf %452, %453 : vector<8x128xf32>
    %455 = vector.extract_strided_slice %454 {offsets = [0, 0], sizes = [8, 32], strides = [1, 1]} : vector<8x128xf32> to vector<8x32xf32>
    %456 = arith.negf %455 : vector<8x32xf32>
    %457 = math.exp %456 : vector<8x32xf32>
    %cst_154 = arith.constant 1.000000e+00 : f32
    %458 = vector.broadcast %cst_154 : f32 to vector<8x32xf32>
    %459 = arith.addf %458, %457 : vector<8x32xf32>
    %460 = arith.divf %458, %459 : vector<8x32xf32>
    %461 = vector.extract_strided_slice %454 {offsets = [0, 32], sizes = [8, 32], strides = [1, 1]} : vector<8x128xf32> to vector<8x32xf32>
    %462 = arith.negf %461 : vector<8x32xf32>
    %463 = math.exp %462 : vector<8x32xf32>
    %cst_155 = arith.constant 1.000000e+00 : f32
    %464 = vector.broadcast %cst_155 : f32 to vector<8x32xf32>
    %465 = arith.addf %464, %463 : vector<8x32xf32>
    %466 = arith.divf %464, %465 : vector<8x32xf32>
    %467 = vector.extract_strided_slice %454 {offsets = [0, 64], sizes = [8, 32], strides = [1, 1]} : vector<8x128xf32> to vector<8x32xf32>
    %468 = math.tanh %467 : vector<8x32xf32>
    %469 = vector.extract_strided_slice %454 {offsets = [0, 96], sizes = [8, 32], strides = [1, 1]} : vector<8x128xf32> to vector<8x32xf32>
    %470 = arith.negf %469 : vector<8x32xf32>
    %471 = math.exp %470 : vector<8x32xf32>
    %cst_156 = arith.constant 1.000000e+00 : f32
    %472 = vector.broadcast %cst_156 : f32 to vector<8x32xf32>
    %473 = arith.addf %472, %471 : vector<8x32xf32>
    %474 = arith.divf %472, %473 : vector<8x32xf32>
    %475 = arith.mulf %466, %409 : vector<8x32xf32>
    %476 = arith.mulf %460, %468 : vector<8x32xf32>
    %477 = arith.addf %475, %476 : vector<8x32xf32>
    %478 = math.tanh %477 : vector<8x32xf32>
    %479 = arith.mulf %474, %478 : vector<8x32xf32>
    %c7 = arith.constant 7 : index
    %c0_157 = arith.constant 0 : index
    %c0_158 = arith.constant 0 : index
    %480 = vector.load %arg0[%c7, %c0_157, %c0_158] : memref<8x8x32xf32, #tpu.memory_space<vmem>>, vector<1x8x32xf32>
    %481 = vector.shape_cast %480 : vector<1x8x32xf32> to vector<8x32xf32>
    %c0_159 = arith.constant 0 : index
    %c0_160 = arith.constant 0 : index
    %c0_161 = arith.constant 0 : index
    %482 = vector.load %arg3[%c0_159, %c0_160, %c0_161] : memref<2x64x128xf32, #tpu.memory_space<vmem>>, vector<1x64x128xf32>
    %483 = vector.shape_cast %482 : vector<1x64x128xf32> to vector<64x128xf32>
    %c0_162 = arith.constant 0 : index
    %c0_163 = arith.constant 0 : index
    %c0_164 = arith.constant 0 : index
    %484 = vector.load %arg4[%c0_162, %c0_163, %c0_164] : memref<2x1x128xf32, #tpu.memory_space<vmem>>, vector<1x1x128xf32>
    %485 = vector.shape_cast %484 : vector<1x1x128xf32> to vector<1x128xf32>
    %486 = tpu.concatenate %481, %446 in 1 : vector<8x32xf32>, vector<8x32xf32> -> vector<8x64xf32>
    %cst_165 = arith.constant dense<0.000000e+00> : vector<8x128xf32>
    %487 = tpu.matmul %486, %483, %cst_165 {dimension_numbers = #tpu.dot_dimension_numbers<[1], [0], [0], [1], [0, 0, 1, 1], [], []>} : vector<8x64xf32>, vector<64x128xf32>, vector<8x128xf32> -> vector<8x128xf32>
    %488 = vector.broadcast %485 : vector<1x128xf32> to vector<8x128xf32>
    %489 = arith.addf %487, %488 : vector<8x128xf32>
    %490 = vector.extract_strided_slice %489 {offsets = [0, 0], sizes = [8, 32], strides = [1, 1]} : vector<8x128xf32> to vector<8x32xf32>
    %491 = arith.negf %490 : vector<8x32xf32>
    %492 = math.exp %491 : vector<8x32xf32>
    %cst_166 = arith.constant 1.000000e+00 : f32
    %493 = vector.broadcast %cst_166 : f32 to vector<8x32xf32>
    %494 = arith.addf %493, %492 : vector<8x32xf32>
    %495 = arith.divf %493, %494 : vector<8x32xf32>
    %496 = vector.extract_strided_slice %489 {offsets = [0, 32], sizes = [8, 32], strides = [1, 1]} : vector<8x128xf32> to vector<8x32xf32>
    %497 = arith.negf %496 : vector<8x32xf32>
    %498 = math.exp %497 : vector<8x32xf32>
    %cst_167 = arith.constant 1.000000e+00 : f32
    %499 = vector.broadcast %cst_167 : f32 to vector<8x32xf32>
    %500 = arith.addf %499, %498 : vector<8x32xf32>
    %501 = arith.divf %499, %500 : vector<8x32xf32>
    %502 = vector.extract_strided_slice %489 {offsets = [0, 64], sizes = [8, 32], strides = [1, 1]} : vector<8x128xf32> to vector<8x32xf32>
    %503 = math.tanh %502 : vector<8x32xf32>
    %504 = vector.extract_strided_slice %489 {offsets = [0, 96], sizes = [8, 32], strides = [1, 1]} : vector<8x128xf32> to vector<8x32xf32>
    %505 = arith.negf %504 : vector<8x32xf32>
    %506 = math.exp %505 : vector<8x32xf32>
    %cst_168 = arith.constant 1.000000e+00 : f32
    %507 = vector.broadcast %cst_168 : f32 to vector<8x32xf32>
    %508 = arith.addf %507, %506 : vector<8x32xf32>
    %509 = arith.divf %507, %508 : vector<8x32xf32>
    %510 = arith.mulf %501, %444 : vector<8x32xf32>
    %511 = arith.mulf %495, %503 : vector<8x32xf32>
    %512 = arith.addf %510, %511 : vector<8x32xf32>
    %513 = math.tanh %512 : vector<8x32xf32>
    %514 = arith.mulf %509, %513 : vector<8x32xf32>
    %c1_169 = arith.constant 1 : index
    %c0_170 = arith.constant 0 : index
    %c0_171 = arith.constant 0 : index
    %515 = vector.load %arg3[%c1_169, %c0_170, %c0_171] : memref<2x64x128xf32, #tpu.memory_space<vmem>>, vector<1x64x128xf32>
    %516 = vector.shape_cast %515 : vector<1x64x128xf32> to vector<64x128xf32>
    %c1_172 = arith.constant 1 : index
    %c0_173 = arith.constant 0 : index
    %c0_174 = arith.constant 0 : index
    %517 = vector.load %arg4[%c1_172, %c0_173, %c0_174] : memref<2x1x128xf32, #tpu.memory_space<vmem>>, vector<1x1x128xf32>
    %518 = vector.shape_cast %517 : vector<1x1x128xf32> to vector<1x128xf32>
    %519 = tpu.concatenate %514, %479 in 1 : vector<8x32xf32>, vector<8x32xf32> -> vector<8x64xf32>
    %cst_175 = arith.constant dense<0.000000e+00> : vector<8x128xf32>
    %520 = tpu.matmul %519, %516, %cst_175 {dimension_numbers = #tpu.dot_dimension_numbers<[1], [0], [0], [1], [0, 0, 1, 1], [], []>} : vector<8x64xf32>, vector<64x128xf32>, vector<8x128xf32> -> vector<8x128xf32>
    %521 = vector.broadcast %518 : vector<1x128xf32> to vector<8x128xf32>
    %522 = arith.addf %520, %521 : vector<8x128xf32>
    %523 = vector.extract_strided_slice %522 {offsets = [0, 0], sizes = [8, 32], strides = [1, 1]} : vector<8x128xf32> to vector<8x32xf32>
    %524 = arith.negf %523 : vector<8x32xf32>
    %525 = math.exp %524 : vector<8x32xf32>
    %cst_176 = arith.constant 1.000000e+00 : f32
    %526 = vector.broadcast %cst_176 : f32 to vector<8x32xf32>
    %527 = arith.addf %526, %525 : vector<8x32xf32>
    %528 = arith.divf %526, %527 : vector<8x32xf32>
    %529 = vector.extract_strided_slice %522 {offsets = [0, 32], sizes = [8, 32], strides = [1, 1]} : vector<8x128xf32> to vector<8x32xf32>
    %530 = arith.negf %529 : vector<8x32xf32>
    %531 = math.exp %530 : vector<8x32xf32>
    %cst_177 = arith.constant 1.000000e+00 : f32
    %532 = vector.broadcast %cst_177 : f32 to vector<8x32xf32>
    %533 = arith.addf %532, %531 : vector<8x32xf32>
    %534 = arith.divf %532, %533 : vector<8x32xf32>
    %535 = vector.extract_strided_slice %522 {offsets = [0, 64], sizes = [8, 32], strides = [1, 1]} : vector<8x128xf32> to vector<8x32xf32>
    %536 = math.tanh %535 : vector<8x32xf32>
    %537 = vector.extract_strided_slice %522 {offsets = [0, 96], sizes = [8, 32], strides = [1, 1]} : vector<8x128xf32> to vector<8x32xf32>
    %538 = arith.negf %537 : vector<8x32xf32>
    %539 = math.exp %538 : vector<8x32xf32>
    %cst_178 = arith.constant 1.000000e+00 : f32
    %540 = vector.broadcast %cst_178 : f32 to vector<8x32xf32>
    %541 = arith.addf %540, %539 : vector<8x32xf32>
    %542 = arith.divf %540, %541 : vector<8x32xf32>
    %543 = arith.mulf %534, %477 : vector<8x32xf32>
    %544 = arith.mulf %528, %536 : vector<8x32xf32>
    %545 = arith.addf %543, %544 : vector<8x32xf32>
    %546 = math.tanh %545 : vector<8x32xf32>
    %547 = arith.mulf %542, %546 : vector<8x32xf32>
    %cst_179 = arith.constant 0.000000e+00 : f32
    %548 = vector.broadcast %cst_179 : f32 to vector<8x128xf32>
    %c0_180 = arith.constant 0 : index
    %c0_181 = arith.constant 0 : index
    %c0_182 = arith.constant 0 : index
    %549 = vector.load %arg10[%c0_180, %c0_181, %c0_182] : memref<8x8x128xf32, #tpu.memory_space<vmem>>, vector<1x8x128xf32>
    %550 = vector.shape_cast %549 : vector<1x8x128xf32> to vector<8x128xf32>
    %551 = vector.shape_cast %548 : vector<8x128xf32> to vector<1x8x128xf32>
    tpu.vector_store %arg10[%c0_180, %c0_181, %c0_182], %551 {strides = array<i32>} : memref<8x8x128xf32, #tpu.memory_space<vmem>>, vector<1x8x128xf32>,
    %552 = tpu.iota {dimensions = array<i32: 1>} : vector<8x128xi32>
    %c0_183 = arith.constant 0 : index
    %c0_184 = arith.constant 0 : index
    %c0_185 = arith.constant 0 : index
    %553 = vector.load %arg1[%c0_183, %c0_184, %c0_185] : memref<8x8x128xf32, #tpu.memory_space<vmem>>, vector<1x8x128xf32>
    %554 = vector.shape_cast %553 : vector<1x8x128xf32> to vector<8x128xf32>
    %c0_186 = arith.constant 0 : index
    %c0_187 = arith.constant 0 : index
    %555 = vector.load %arg7[%c0_186, %c0_187] : memref<128x32xf32, #tpu.memory_space<vmem>>, vector<128x32xf32>
    %cst_188 = arith.constant dense<0.000000e+00> : vector<8x32xf32>
    %556 = tpu.matmul %554, %555, %cst_188 {dimension_numbers = #tpu.dot_dimension_numbers<[1], [0], [0], [1], [0, 0, 1, 1], [], []>} : vector<8x128xf32>, vector<128x32xf32>, vector<8x32xf32> -> vector<8x32xf32>
    %c0_189 = arith.constant 0 : index
    %c0_190 = arith.constant 0 : index
    %c0_191 = arith.constant 0 : index
    %557 = vector.load %arg5[%c0_189, %c0_190, %c0_191] : memref<2x64x128xf32, #tpu.memory_space<vmem>>, vector<1x64x128xf32>
    %558 = vector.shape_cast %557 : vector<1x64x128xf32> to vector<64x128xf32>
    %c0_192 = arith.constant 0 : index
    %c0_193 = arith.constant 0 : index
    %c0_194 = arith.constant 0 : index
    %559 = vector.load %arg6[%c0_192, %c0_193, %c0_194] : memref<2x1x128xf32, #tpu.memory_space<vmem>>, vector<1x1x128xf32>
    %560 = vector.shape_cast %559 : vector<1x1x128xf32> to vector<1x128xf32>
    %561 = tpu.concatenate %556, %514 in 1 : vector<8x32xf32>, vector<8x32xf32> -> vector<8x64xf32>
    %cst_195 = arith.constant dense<0.000000e+00> : vector<8x128xf32>
    %562 = tpu.matmul %561, %558, %cst_195 {dimension_numbers = #tpu.dot_dimension_numbers<[1], [0], [0], [1], [0, 0, 1, 1], [], []>} : vector<8x64xf32>, vector<64x128xf32>, vector<8x128xf32> -> vector<8x128xf32>
    %563 = vector.broadcast %560 : vector<1x128xf32> to vector<8x128xf32>
    %564 = arith.addf %562, %563 : vector<8x128xf32>
    %565 = vector.extract_strided_slice %564 {offsets = [0, 0], sizes = [8, 32], strides = [1, 1]} : vector<8x128xf32> to vector<8x32xf32>
    %566 = arith.negf %565 : vector<8x32xf32>
    %567 = math.exp %566 : vector<8x32xf32>
    %cst_196 = arith.constant 1.000000e+00 : f32
    %568 = vector.broadcast %cst_196 : f32 to vector<8x32xf32>
    %569 = arith.addf %568, %567 : vector<8x32xf32>
    %570 = arith.divf %568, %569 : vector<8x32xf32>
    %571 = vector.extract_strided_slice %564 {offsets = [0, 32], sizes = [8, 32], strides = [1, 1]} : vector<8x128xf32> to vector<8x32xf32>
    %572 = arith.negf %571 : vector<8x32xf32>
    %573 = math.exp %572 : vector<8x32xf32>
    %cst_197 = arith.constant 1.000000e+00 : f32
    %574 = vector.broadcast %cst_197 : f32 to vector<8x32xf32>
    %575 = arith.addf %574, %573 : vector<8x32xf32>
    %576 = arith.divf %574, %575 : vector<8x32xf32>
    %577 = vector.extract_strided_slice %564 {offsets = [0, 64], sizes = [8, 32], strides = [1, 1]} : vector<8x128xf32> to vector<8x32xf32>
    %578 = math.tanh %577 : vector<8x32xf32>
    %579 = vector.extract_strided_slice %564 {offsets = [0, 96], sizes = [8, 32], strides = [1, 1]} : vector<8x128xf32> to vector<8x32xf32>
    %580 = arith.negf %579 : vector<8x32xf32>
    %581 = math.exp %580 : vector<8x32xf32>
    %cst_198 = arith.constant 1.000000e+00 : f32
    %582 = vector.broadcast %cst_198 : f32 to vector<8x32xf32>
    %583 = arith.addf %582, %581 : vector<8x32xf32>
    %584 = arith.divf %582, %583 : vector<8x32xf32>
    %585 = arith.mulf %576, %512 : vector<8x32xf32>
    %586 = arith.mulf %570, %578 : vector<8x32xf32>
    %587 = arith.addf %585, %586 : vector<8x32xf32>
    %588 = math.tanh %587 : vector<8x32xf32>
    %589 = arith.mulf %584, %588 : vector<8x32xf32>
    %c1_199 = arith.constant 1 : index
    %c0_200 = arith.constant 0 : index
    %c0_201 = arith.constant 0 : index
    %590 = vector.load %arg5[%c1_199, %c0_200, %c0_201] : memref<2x64x128xf32, #tpu.memory_space<vmem>>, vector<1x64x128xf32>
    %591 = vector.shape_cast %590 : vector<1x64x128xf32> to vector<64x128xf32>
    %c1_202 = arith.constant 1 : index
    %c0_203 = arith.constant 0 : index
    %c0_204 = arith.constant 0 : index
    %592 = vector.load %arg6[%c1_202, %c0_203, %c0_204] : memref<2x1x128xf32, #tpu.memory_space<vmem>>, vector<1x1x128xf32>
    %593 = vector.shape_cast %592 : vector<1x1x128xf32> to vector<1x128xf32>
    %594 = tpu.concatenate %589, %547 in 1 : vector<8x32xf32>, vector<8x32xf32> -> vector<8x64xf32>
    %cst_205 = arith.constant dense<0.000000e+00> : vector<8x128xf32>
    %595 = tpu.matmul %594, %591, %cst_205 {dimension_numbers = #tpu.dot_dimension_numbers<[1], [0], [0], [1], [0, 0, 1, 1], [], []>} : vector<8x64xf32>, vector<64x128xf32>, vector<8x128xf32> -> vector<8x128xf32>
    %596 = vector.broadcast %593 : vector<1x128xf32> to vector<8x128xf32>
    %597 = arith.addf %595, %596 : vector<8x128xf32>
    %598 = vector.extract_strided_slice %597 {offsets = [0, 0], sizes = [8, 32], strides = [1, 1]} : vector<8x128xf32> to vector<8x32xf32>
    %599 = arith.negf %598 : vector<8x32xf32>
    %600 = math.exp %599 : vector<8x32xf32>
    %cst_206 = arith.constant 1.000000e+00 : f32
    %601 = vector.broadcast %cst_206 : f32 to vector<8x32xf32>
    %602 = arith.addf %601, %600 : vector<8x32xf32>
    %603 = arith.divf %601, %602 : vector<8x32xf32>
    %604 = vector.extract_strided_slice %597 {offsets = [0, 32], sizes = [8, 32], strides = [1, 1]} : vector<8x128xf32> to vector<8x32xf32>
    %605 = arith.negf %604 : vector<8x32xf32>
    %606 = math.exp %605 : vector<8x32xf32>
    %cst_207 = arith.constant 1.000000e+00 : f32
    %607 = vector.broadcast %cst_207 : f32 to vector<8x32xf32>
    %608 = arith.addf %607, %606 : vector<8x32xf32>
    %609 = arith.divf %607, %608 : vector<8x32xf32>
    %610 = vector.extract_strided_slice %597 {offsets = [0, 64], sizes = [8, 32], strides = [1, 1]} : vector<8x128xf32> to vector<8x32xf32>
    %611 = math.tanh %610 : vector<8x32xf32>
    %612 = vector.extract_strided_slice %597 {offsets = [0, 96], sizes = [8, 32], strides = [1, 1]} : vector<8x128xf32> to vector<8x32xf32>
    %613 = arith.negf %612 : vector<8x32xf32>
    %614 = math.exp %613 : vector<8x32xf32>
    %cst_208 = arith.constant 1.000000e+00 : f32
    %615 = vector.broadcast %cst_208 : f32 to vector<8x32xf32>
    %616 = arith.addf %615, %614 : vector<8x32xf32>
    %617 = arith.divf %615, %616 : vector<8x32xf32>
    %618 = arith.mulf %609, %545 : vector<8x32xf32>
    %619 = arith.mulf %603, %611 : vector<8x32xf32>
    %620 = arith.addf %618, %619 : vector<8x32xf32>
    %621 = math.tanh %620 : vector<8x32xf32>
    %622 = arith.mulf %617, %621 : vector<8x32xf32>
    %c0_209 = arith.constant 0 : index
    %c0_210 = arith.constant 0 : index
    %623 = vector.load %arg8[%c0_209, %c0_210] : memref<32x128xf32, #tpu.memory_space<vmem>>, vector<32x128xf32>
    %cst_211 = arith.constant dense<0.000000e+00> : vector<8x128xf32>
    %624 = tpu.matmul %622, %623, %cst_211 {dimension_numbers = #tpu.dot_dimension_numbers<[1], [0], [0], [1], [0, 0, 1, 1], [], []>} : vector<8x32xf32>, vector<32x128xf32>, vector<8x128xf32> -> vector<8x128xf32>
    %c0_212 = arith.constant 0 : index
    %c0_213 = arith.constant 0 : index
    %625 = vector.load %arg9[%c0_212, %c0_213] : memref<1x128xf32, #tpu.memory_space<vmem>>, vector<1x128xf32>
    %626 = vector.broadcast %625 : vector<1x128xf32> to vector<8x128xf32>
    %627 = arith.addf %624, %626 : vector<8x128xf32>
    %c1_214 = arith.constant 1 : index
    %c0_215 = arith.constant 0 : index
    %c0_216 = arith.constant 0 : index
    %628 = vector.load %arg10[%c1_214, %c0_215, %c0_216] : memref<8x8x128xf32, #tpu.memory_space<vmem>>, vector<1x8x128xf32>
    %629 = vector.shape_cast %628 : vector<1x8x128xf32> to vector<8x128xf32>
    %630 = vector.shape_cast %627 : vector<8x128xf32> to vector<1x8x128xf32>
    tpu.vector_store %arg10[%c1_214, %c0_215, %c0_216], %630 {strides = array<i32>} : memref<8x8x128xf32, #tpu.memory_space<vmem>>, vector<1x8x128xf32>,
    %cst_217 = arith.constant dense<0xFF800000> : vector<8xf32>
    %631 = vector.multi_reduction <maximumf>, %627, %cst_217 [1] : vector<8x128xf32> to vector<8xf32>
    %632 = vector.shape_cast %631 : vector<8xf32> to vector<8x1xf32>
    %633 = vector.broadcast %632 : vector<8x1xf32> to vector<8x128xf32>
    %634 = arith.cmpf oeq, %627, %633 : vector<8x128xf32>
    %c128_i32 = arith.constant 128 : i32
    %635 = vector.broadcast %c128_i32 : i32 to vector<8x128xi32>
    %636 = arith.select %634, %552, %635 : vector<8x128xi1>, vector<8x128xi32>
    %cst_218 = arith.constant dense<2147483647> : vector<8xi32>
    %637 = vector.multi_reduction <minsi>, %636, %cst_218 [1] : vector<8x128xi32> to vector<8xi32>
    %638 = vector.shape_cast %637 : vector<8xi32> to vector<8x1xi32>
    %639 = vector.broadcast %638 : vector<8x1xi32> to vector<8x128xi32>
    %640 = arith.cmpi eq, %552, %639 : vector<8x128xi32>
    %641 = arith.extui %640 : vector<8x128xi1> to vector<8x128xi32>
    %642 = arith.sitofp %641 : vector<8x128xi32> to vector<8x128xf32>
    %c1_219 = arith.constant 1 : index
    %c0_220 = arith.constant 0 : index
    %c0_221 = arith.constant 0 : index
    %643 = vector.load %arg2[%c1_219, %c0_220, %c0_221] : memref<8x1x1xf32, #tpu.memory_space<vmem>>, vector<1x1x1xf32>
    %644 = vector.shape_cast %643 : vector<1x1x1xf32> to vector<1x1xf32>
    %c1_222 = arith.constant 1 : index
    %c0_223 = arith.constant 0 : index
    %c0_224 = arith.constant 0 : index
    %645 = vector.load %arg1[%c1_222, %c0_223, %c0_224] : memref<8x8x128xf32, #tpu.memory_space<vmem>>, vector<1x8x128xf32>
    %646 = vector.shape_cast %645 : vector<1x8x128xf32> to vector<8x128xf32>
    %647 = vector.broadcast %644 : vector<1x1xf32> to vector<8x128xf32>
    %648 = arith.mulf %647, %646 : vector<8x128xf32>
    %cst_225 = arith.constant 1.000000e+00 : f32
    %649 = vector.broadcast %cst_225 : f32 to vector<1x1xf32>
    %650 = arith.subf %649, %644 : vector<1x1xf32>
    %651 = vector.broadcast %650 : vector<1x1xf32> to vector<8x128xf32>
    %652 = arith.mulf %651, %642 : vector<8x128xf32>
    %653 = arith.addf %648, %652 : vector<8x128xf32>
    %c0_226 = arith.constant 0 : index
    %c0_227 = arith.constant 0 : index
    %654 = vector.load %arg7[%c0_226, %c0_227] : memref<128x32xf32, #tpu.memory_space<vmem>>, vector<128x32xf32>
    %cst_228 = arith.constant dense<0.000000e+00> : vector<8x32xf32>
    %655 = tpu.matmul %653, %654, %cst_228 {dimension_numbers = #tpu.dot_dimension_numbers<[1], [0], [0], [1], [0, 0, 1, 1], [], []>} : vector<8x128xf32>, vector<128x32xf32>, vector<8x32xf32> -> vector<8x32xf32>
    %c0_229 = arith.constant 0 : index
    %c0_230 = arith.constant 0 : index
    %c0_231 = arith.constant 0 : index
    %656 = vector.load %arg5[%c0_229, %c0_230, %c0_231] : memref<2x64x128xf32, #tpu.memory_space<vmem>>, vector<1x64x128xf32>
    %657 = vector.shape_cast %656 : vector<1x64x128xf32> to vector<64x128xf32>
    %c0_232 = arith.constant 0 : index
    %c0_233 = arith.constant 0 : index
    %c0_234 = arith.constant 0 : index
    %658 = vector.load %arg6[%c0_232, %c0_233, %c0_234] : memref<2x1x128xf32, #tpu.memory_space<vmem>>, vector<1x1x128xf32>
    %659 = vector.shape_cast %658 : vector<1x1x128xf32> to vector<1x128xf32>
    %660 = tpu.concatenate %655, %589 in 1 : vector<8x32xf32>, vector<8x32xf32> -> vector<8x64xf32>
    %cst_235 = arith.constant dense<0.000000e+00> : vector<8x128xf32>
    %661 = tpu.matmul %660, %657, %cst_235 {dimension_numbers = #tpu.dot_dimension_numbers<[1], [0], [0], [1], [0, 0, 1, 1], [], []>} : vector<8x64xf32>, vector<64x128xf32>, vector<8x128xf32> -> vector<8x128xf32>
    %662 = vector.broadcast %659 : vector<1x128xf32> to vector<8x128xf32>
    %663 = arith.addf %661, %662 : vector<8x128xf32>
    %664 = vector.extract_strided_slice %663 {offsets = [0, 0], sizes = [8, 32], strides = [1, 1]} : vector<8x128xf32> to vector<8x32xf32>
    %665 = arith.negf %664 : vector<8x32xf32>
    %666 = math.exp %665 : vector<8x32xf32>
    %cst_236 = arith.constant 1.000000e+00 : f32
    %667 = vector.broadcast %cst_236 : f32 to vector<8x32xf32>
    %668 = arith.addf %667, %666 : vector<8x32xf32>
    %669 = arith.divf %667, %668 : vector<8x32xf32>
    %670 = vector.extract_strided_slice %663 {offsets = [0, 32], sizes = [8, 32], strides = [1, 1]} : vector<8x128xf32> to vector<8x32xf32>
    %671 = arith.negf %670 : vector<8x32xf32>
    %672 = math.exp %671 : vector<8x32xf32>
    %cst_237 = arith.constant 1.000000e+00 : f32
    %673 = vector.broadcast %cst_237 : f32 to vector<8x32xf32>
    %674 = arith.addf %673, %672 : vector<8x32xf32>
    %675 = arith.divf %673, %674 : vector<8x32xf32>
    %676 = vector.extract_strided_slice %663 {offsets = [0, 64], sizes = [8, 32], strides = [1, 1]} : vector<8x128xf32> to vector<8x32xf32>
    %677 = math.tanh %676 : vector<8x32xf32>
    %678 = vector.extract_strided_slice %663 {offsets = [0, 96], sizes = [8, 32], strides = [1, 1]} : vector<8x128xf32> to vector<8x32xf32>
    %679 = arith.negf %678 : vector<8x32xf32>
    %680 = math.exp %679 : vector<8x32xf32>
    %cst_238 = arith.constant 1.000000e+00 : f32
    %681 = vector.broadcast %cst_238 : f32 to vector<8x32xf32>
    %682 = arith.addf %681, %680 : vector<8x32xf32>
    %683 = arith.divf %681, %682 : vector<8x32xf32>
    %684 = arith.mulf %675, %587 : vector<8x32xf32>
    %685 = arith.mulf %669, %677 : vector<8x32xf32>
    %686 = arith.addf %684, %685 : vector<8x32xf32>
    %687 = math.tanh %686 : vector<8x32xf32>
    %688 = arith.mulf %683, %687 : vector<8x32xf32>
    %c1_239 = arith.constant 1 : index
    %c0_240 = arith.constant 0 : index
    %c0_241 = arith.constant 0 : index
    %689 = vector.load %arg5[%c1_239, %c0_240, %c0_241] : memref<2x64x128xf32, #tpu.memory_space<vmem>>, vector<1x64x128xf32>
    %690 = vector.shape_cast %689 : vector<1x64x128xf32> to vector<64x128xf32>
    %c1_242 = arith.constant 1 : index
    %c0_243 = arith.constant 0 : index
    %c0_244 = arith.constant 0 : index
    %691 = vector.load %arg6[%c1_242, %c0_243, %c0_244] : memref<2x1x128xf32, #tpu.memory_space<vmem>>, vector<1x1x128xf32>
    %692 = vector.shape_cast %691 : vector<1x1x128xf32> to vector<1x128xf32>
    %693 = tpu.concatenate %688, %622 in 1 : vector<8x32xf32>, vector<8x32xf32> -> vector<8x64xf32>
    %cst_245 = arith.constant dense<0.000000e+00> : vector<8x128xf32>
    %694 = tpu.matmul %693, %690, %cst_245 {dimension_numbers = #tpu.dot_dimension_numbers<[1], [0], [0], [1], [0, 0, 1, 1], [], []>} : vector<8x64xf32>, vector<64x128xf32>, vector<8x128xf32> -> vector<8x128xf32>
    %695 = vector.broadcast %692 : vector<1x128xf32> to vector<8x128xf32>
    %696 = arith.addf %694, %695 : vector<8x128xf32>
    %697 = vector.extract_strided_slice %696 {offsets = [0, 0], sizes = [8, 32], strides = [1, 1]} : vector<8x128xf32> to vector<8x32xf32>
    %698 = arith.negf %697 : vector<8x32xf32>
    %699 = math.exp %698 : vector<8x32xf32>
    %cst_246 = arith.constant 1.000000e+00 : f32
    %700 = vector.broadcast %cst_246 : f32 to vector<8x32xf32>
    %701 = arith.addf %700, %699 : vector<8x32xf32>
    %702 = arith.divf %700, %701 : vector<8x32xf32>
    %703 = vector.extract_strided_slice %696 {offsets = [0, 32], sizes = [8, 32], strides = [1, 1]} : vector<8x128xf32> to vector<8x32xf32>
    %704 = arith.negf %703 : vector<8x32xf32>
    %705 = math.exp %704 : vector<8x32xf32>
    %cst_247 = arith.constant 1.000000e+00 : f32
    %706 = vector.broadcast %cst_247 : f32 to vector<8x32xf32>
    %707 = arith.addf %706, %705 : vector<8x32xf32>
    %708 = arith.divf %706, %707 : vector<8x32xf32>
    %709 = vector.extract_strided_slice %696 {offsets = [0, 64], sizes = [8, 32], strides = [1, 1]} : vector<8x128xf32> to vector<8x32xf32>
    %710 = math.tanh %709 : vector<8x32xf32>
    %711 = vector.extract_strided_slice %696 {offsets = [0, 96], sizes = [8, 32], strides = [1, 1]} : vector<8x128xf32> to vector<8x32xf32>
    %712 = arith.negf %711 : vector<8x32xf32>
    %713 = math.exp %712 : vector<8x32xf32>
    %cst_248 = arith.constant 1.000000e+00 : f32
    %714 = vector.broadcast %cst_248 : f32 to vector<8x32xf32>
    %715 = arith.addf %714, %713 : vector<8x32xf32>
    %716 = arith.divf %714, %715 : vector<8x32xf32>
    %717 = arith.mulf %708, %620 : vector<8x32xf32>
    %718 = arith.mulf %702, %710 : vector<8x32xf32>
    %719 = arith.addf %717, %718 : vector<8x32xf32>
    %720 = math.tanh %719 : vector<8x32xf32>
    %721 = arith.mulf %716, %720 : vector<8x32xf32>
    %c0_249 = arith.constant 0 : index
    %c0_250 = arith.constant 0 : index
    %722 = vector.load %arg8[%c0_249, %c0_250] : memref<32x128xf32, #tpu.memory_space<vmem>>, vector<32x128xf32>
    %cst_251 = arith.constant dense<0.000000e+00> : vector<8x128xf32>
    %723 = tpu.matmul %721, %722, %cst_251 {dimension_numbers = #tpu.dot_dimension_numbers<[1], [0], [0], [1], [0, 0, 1, 1], [], []>} : vector<8x32xf32>, vector<32x128xf32>, vector<8x128xf32> -> vector<8x128xf32>
    %c0_252 = arith.constant 0 : index
    %c0_253 = arith.constant 0 : index
    %724 = vector.load %arg9[%c0_252, %c0_253] : memref<1x128xf32, #tpu.memory_space<vmem>>, vector<1x128xf32>
    %725 = vector.broadcast %724 : vector<1x128xf32> to vector<8x128xf32>
    %726 = arith.addf %723, %725 : vector<8x128xf32>
    %c2_254 = arith.constant 2 : index
    %c0_255 = arith.constant 0 : index
    %c0_256 = arith.constant 0 : index
    %727 = vector.load %arg10[%c2_254, %c0_255, %c0_256] : memref<8x8x128xf32, #tpu.memory_space<vmem>>, vector<1x8x128xf32>
    %728 = vector.shape_cast %727 : vector<1x8x128xf32> to vector<8x128xf32>
    %729 = vector.shape_cast %726 : vector<8x128xf32> to vector<1x8x128xf32>
    tpu.vector_store %arg10[%c2_254, %c0_255, %c0_256], %729 {strides = array<i32>} : memref<8x8x128xf32, #tpu.memory_space<vmem>>, vector<1x8x128xf32>,
    %cst_257 = arith.constant dense<0xFF800000> : vector<8xf32>
    %730 = vector.multi_reduction <maximumf>, %726, %cst_257 [1] : vector<8x128xf32> to vector<8xf32>
    %731 = vector.shape_cast %730 : vector<8xf32> to vector<8x1xf32>
    %732 = vector.broadcast %731 : vector<8x1xf32> to vector<8x128xf32>
    %733 = arith.cmpf oeq, %726, %732 : vector<8x128xf32>
    %c128_i32_258 = arith.constant 128 : i32
    %734 = vector.broadcast %c128_i32_258 : i32 to vector<8x128xi32>
    %735 = arith.select %733, %552, %734 : vector<8x128xi1>, vector<8x128xi32>
    %cst_259 = arith.constant dense<2147483647> : vector<8xi32>
    %736 = vector.multi_reduction <minsi>, %735, %cst_259 [1] : vector<8x128xi32> to vector<8xi32>
    %737 = vector.shape_cast %736 : vector<8xi32> to vector<8x1xi32>
    %738 = vector.broadcast %737 : vector<8x1xi32> to vector<8x128xi32>
    %739 = arith.cmpi eq, %552, %738 : vector<8x128xi32>
    %740 = arith.extui %739 : vector<8x128xi1> to vector<8x128xi32>
    %741 = arith.sitofp %740 : vector<8x128xi32> to vector<8x128xf32>
    %c2_260 = arith.constant 2 : index
    %c0_261 = arith.constant 0 : index
    %c0_262 = arith.constant 0 : index
    %742 = vector.load %arg2[%c2_260, %c0_261, %c0_262] : memref<8x1x1xf32, #tpu.memory_space<vmem>>, vector<1x1x1xf32>
    %743 = vector.shape_cast %742 : vector<1x1x1xf32> to vector<1x1xf32>
    %c2_263 = arith.constant 2 : index
    %c0_264 = arith.constant 0 : index
    %c0_265 = arith.constant 0 : index
    %744 = vector.load %arg1[%c2_263, %c0_264, %c0_265] : memref<8x8x128xf32, #tpu.memory_space<vmem>>, vector<1x8x128xf32>
    %745 = vector.shape_cast %744 : vector<1x8x128xf32> to vector<8x128xf32>
    %746 = vector.broadcast %743 : vector<1x1xf32> to vector<8x128xf32>
    %747 = arith.mulf %746, %745 : vector<8x128xf32>
    %cst_266 = arith.constant 1.000000e+00 : f32
    %748 = vector.broadcast %cst_266 : f32 to vector<1x1xf32>
    %749 = arith.subf %748, %743 : vector<1x1xf32>
    %750 = vector.broadcast %749 : vector<1x1xf32> to vector<8x128xf32>
    %751 = arith.mulf %750, %741 : vector<8x128xf32>
    %752 = arith.addf %747, %751 : vector<8x128xf32>
    %c0_267 = arith.constant 0 : index
    %c0_268 = arith.constant 0 : index
    %753 = vector.load %arg7[%c0_267, %c0_268] : memref<128x32xf32, #tpu.memory_space<vmem>>, vector<128x32xf32>
    %cst_269 = arith.constant dense<0.000000e+00> : vector<8x32xf32>
    %754 = tpu.matmul %752, %753, %cst_269 {dimension_numbers = #tpu.dot_dimension_numbers<[1], [0], [0], [1], [0, 0, 1, 1], [], []>} : vector<8x128xf32>, vector<128x32xf32>, vector<8x32xf32> -> vector<8x32xf32>
    %c0_270 = arith.constant 0 : index
    %c0_271 = arith.constant 0 : index
    %c0_272 = arith.constant 0 : index
    %755 = vector.load %arg5[%c0_270, %c0_271, %c0_272] : memref<2x64x128xf32, #tpu.memory_space<vmem>>, vector<1x64x128xf32>
    %756 = vector.shape_cast %755 : vector<1x64x128xf32> to vector<64x128xf32>
    %c0_273 = arith.constant 0 : index
    %c0_274 = arith.constant 0 : index
    %c0_275 = arith.constant 0 : index
    %757 = vector.load %arg6[%c0_273, %c0_274, %c0_275] : memref<2x1x128xf32, #tpu.memory_space<vmem>>, vector<1x1x128xf32>
    %758 = vector.shape_cast %757 : vector<1x1x128xf32> to vector<1x128xf32>
    %759 = tpu.concatenate %754, %688 in 1 : vector<8x32xf32>, vector<8x32xf32> -> vector<8x64xf32>
    %cst_276 = arith.constant dense<0.000000e+00> : vector<8x128xf32>
    %760 = tpu.matmul %759, %756, %cst_276 {dimension_numbers = #tpu.dot_dimension_numbers<[1], [0], [0], [1], [0, 0, 1, 1], [], []>} : vector<8x64xf32>, vector<64x128xf32>, vector<8x128xf32> -> vector<8x128xf32>
    %761 = vector.broadcast %758 : vector<1x128xf32> to vector<8x128xf32>
    %762 = arith.addf %760, %761 : vector<8x128xf32>
    %763 = vector.extract_strided_slice %762 {offsets = [0, 0], sizes = [8, 32], strides = [1, 1]} : vector<8x128xf32> to vector<8x32xf32>
    %764 = arith.negf %763 : vector<8x32xf32>
    %765 = math.exp %764 : vector<8x32xf32>
    %cst_277 = arith.constant 1.000000e+00 : f32
    %766 = vector.broadcast %cst_277 : f32 to vector<8x32xf32>
    %767 = arith.addf %766, %765 : vector<8x32xf32>
    %768 = arith.divf %766, %767 : vector<8x32xf32>
    %769 = vector.extract_strided_slice %762 {offsets = [0, 32], sizes = [8, 32], strides = [1, 1]} : vector<8x128xf32> to vector<8x32xf32>
    %770 = arith.negf %769 : vector<8x32xf32>
    %771 = math.exp %770 : vector<8x32xf32>
    %cst_278 = arith.constant 1.000000e+00 : f32
    %772 = vector.broadcast %cst_278 : f32 to vector<8x32xf32>
    %773 = arith.addf %772, %771 : vector<8x32xf32>
    %774 = arith.divf %772, %773 : vector<8x32xf32>
    %775 = vector.extract_strided_slice %762 {offsets = [0, 64], sizes = [8, 32], strides = [1, 1]} : vector<8x128xf32> to vector<8x32xf32>
    %776 = math.tanh %775 : vector<8x32xf32>
    %777 = vector.extract_strided_slice %762 {offsets = [0, 96], sizes = [8, 32], strides = [1, 1]} : vector<8x128xf32> to vector<8x32xf32>
    %778 = arith.negf %777 : vector<8x32xf32>
    %779 = math.exp %778 : vector<8x32xf32>
    %cst_279 = arith.constant 1.000000e+00 : f32
    %780 = vector.broadcast %cst_279 : f32 to vector<8x32xf32>
    %781 = arith.addf %780, %779 : vector<8x32xf32>
    %782 = arith.divf %780, %781 : vector<8x32xf32>
    %783 = arith.mulf %774, %686 : vector<8x32xf32>
    %784 = arith.mulf %768, %776 : vector<8x32xf32>
    %785 = arith.addf %783, %784 : vector<8x32xf32>
    %786 = math.tanh %785 : vector<8x32xf32>
    %787 = arith.mulf %782, %786 : vector<8x32xf32>
    %c1_280 = arith.constant 1 : index
    %c0_281 = arith.constant 0 : index
    %c0_282 = arith.constant 0 : index
    %788 = vector.load %arg5[%c1_280, %c0_281, %c0_282] : memref<2x64x128xf32, #tpu.memory_space<vmem>>, vector<1x64x128xf32>
    %789 = vector.shape_cast %788 : vector<1x64x128xf32> to vector<64x128xf32>
    %c1_283 = arith.constant 1 : index
    %c0_284 = arith.constant 0 : index
    %c0_285 = arith.constant 0 : index
    %790 = vector.load %arg6[%c1_283, %c0_284, %c0_285] : memref<2x1x128xf32, #tpu.memory_space<vmem>>, vector<1x1x128xf32>
    %791 = vector.shape_cast %790 : vector<1x1x128xf32> to vector<1x128xf32>
    %792 = tpu.concatenate %787, %721 in 1 : vector<8x32xf32>, vector<8x32xf32> -> vector<8x64xf32>
    %cst_286 = arith.constant dense<0.000000e+00> : vector<8x128xf32>
    %793 = tpu.matmul %792, %789, %cst_286 {dimension_numbers = #tpu.dot_dimension_numbers<[1], [0], [0], [1], [0, 0, 1, 1], [], []>} : vector<8x64xf32>, vector<64x128xf32>, vector<8x128xf32> -> vector<8x128xf32>
    %794 = vector.broadcast %791 : vector<1x128xf32> to vector<8x128xf32>
    %795 = arith.addf %793, %794 : vector<8x128xf32>
    %796 = vector.extract_strided_slice %795 {offsets = [0, 0], sizes = [8, 32], strides = [1, 1]} : vector<8x128xf32> to vector<8x32xf32>
    %797 = arith.negf %796 : vector<8x32xf32>
    %798 = math.exp %797 : vector<8x32xf32>
    %cst_287 = arith.constant 1.000000e+00 : f32
    %799 = vector.broadcast %cst_287 : f32 to vector<8x32xf32>
    %800 = arith.addf %799, %798 : vector<8x32xf32>
    %801 = arith.divf %799, %800 : vector<8x32xf32>
    %802 = vector.extract_strided_slice %795 {offsets = [0, 32], sizes = [8, 32], strides = [1, 1]} : vector<8x128xf32> to vector<8x32xf32>
    %803 = arith.negf %802 : vector<8x32xf32>
    %804 = math.exp %803 : vector<8x32xf32>
    %cst_288 = arith.constant 1.000000e+00 : f32
    %805 = vector.broadcast %cst_288 : f32 to vector<8x32xf32>
    %806 = arith.addf %805, %804 : vector<8x32xf32>
    %807 = arith.divf %805, %806 : vector<8x32xf32>
    %808 = vector.extract_strided_slice %795 {offsets = [0, 64], sizes = [8, 32], strides = [1, 1]} : vector<8x128xf32> to vector<8x32xf32>
    %809 = math.tanh %808 : vector<8x32xf32>
    %810 = vector.extract_strided_slice %795 {offsets = [0, 96], sizes = [8, 32], strides = [1, 1]} : vector<8x128xf32> to vector<8x32xf32>
    %811 = arith.negf %810 : vector<8x32xf32>
    %812 = math.exp %811 : vector<8x32xf32>
    %cst_289 = arith.constant 1.000000e+00 : f32
    %813 = vector.broadcast %cst_289 : f32 to vector<8x32xf32>
    %814 = arith.addf %813, %812 : vector<8x32xf32>
    %815 = arith.divf %813, %814 : vector<8x32xf32>
    %816 = arith.mulf %807, %719 : vector<8x32xf32>
    %817 = arith.mulf %801, %809 : vector<8x32xf32>
    %818 = arith.addf %816, %817 : vector<8x32xf32>
    %819 = math.tanh %818 : vector<8x32xf32>
    %820 = arith.mulf %815, %819 : vector<8x32xf32>
    %c0_290 = arith.constant 0 : index
    %c0_291 = arith.constant 0 : index
    %821 = vector.load %arg8[%c0_290, %c0_291] : memref<32x128xf32, #tpu.memory_space<vmem>>, vector<32x128xf32>
    %cst_292 = arith.constant dense<0.000000e+00> : vector<8x128xf32>
    %822 = tpu.matmul %820, %821, %cst_292 {dimension_numbers = #tpu.dot_dimension_numbers<[1], [0], [0], [1], [0, 0, 1, 1], [], []>} : vector<8x32xf32>, vector<32x128xf32>, vector<8x128xf32> -> vector<8x128xf32>
    %c0_293 = arith.constant 0 : index
    %c0_294 = arith.constant 0 : index
    %823 = vector.load %arg9[%c0_293, %c0_294] : memref<1x128xf32, #tpu.memory_space<vmem>>, vector<1x128xf32>
    %824 = vector.broadcast %823 : vector<1x128xf32> to vector<8x128xf32>
    %825 = arith.addf %822, %824 : vector<8x128xf32>
    %c3_295 = arith.constant 3 : index
    %c0_296 = arith.constant 0 : index
    %c0_297 = arith.constant 0 : index
    %826 = vector.load %arg10[%c3_295, %c0_296, %c0_297] : memref<8x8x128xf32, #tpu.memory_space<vmem>>, vector<1x8x128xf32>
    %827 = vector.shape_cast %826 : vector<1x8x128xf32> to vector<8x128xf32>
    %828 = vector.shape_cast %825 : vector<8x128xf32> to vector<1x8x128xf32>
    tpu.vector_store %arg10[%c3_295, %c0_296, %c0_297], %828 {strides = array<i32>} : memref<8x8x128xf32, #tpu.memory_space<vmem>>, vector<1x8x128xf32>,
    %cst_298 = arith.constant dense<0xFF800000> : vector<8xf32>
    %829 = vector.multi_reduction <maximumf>, %825, %cst_298 [1] : vector<8x128xf32> to vector<8xf32>
    %830 = vector.shape_cast %829 : vector<8xf32> to vector<8x1xf32>
    %831 = vector.broadcast %830 : vector<8x1xf32> to vector<8x128xf32>
    %832 = arith.cmpf oeq, %825, %831 : vector<8x128xf32>
    %c128_i32_299 = arith.constant 128 : i32
    %833 = vector.broadcast %c128_i32_299 : i32 to vector<8x128xi32>
    %834 = arith.select %832, %552, %833 : vector<8x128xi1>, vector<8x128xi32>
    %cst_300 = arith.constant dense<2147483647> : vector<8xi32>
    %835 = vector.multi_reduction <minsi>, %834, %cst_300 [1] : vector<8x128xi32> to vector<8xi32>
    %836 = vector.shape_cast %835 : vector<8xi32> to vector<8x1xi32>
    %837 = vector.broadcast %836 : vector<8x1xi32> to vector<8x128xi32>
    %838 = arith.cmpi eq, %552, %837 : vector<8x128xi32>
    %839 = arith.extui %838 : vector<8x128xi1> to vector<8x128xi32>
    %840 = arith.sitofp %839 : vector<8x128xi32> to vector<8x128xf32>
    %c3_301 = arith.constant 3 : index
    %c0_302 = arith.constant 0 : index
    %c0_303 = arith.constant 0 : index
    %841 = vector.load %arg2[%c3_301, %c0_302, %c0_303] : memref<8x1x1xf32, #tpu.memory_space<vmem>>, vector<1x1x1xf32>
    %842 = vector.shape_cast %841 : vector<1x1x1xf32> to vector<1x1xf32>
    %c3_304 = arith.constant 3 : index
    %c0_305 = arith.constant 0 : index
    %c0_306 = arith.constant 0 : index
    %843 = vector.load %arg1[%c3_304, %c0_305, %c0_306] : memref<8x8x128xf32, #tpu.memory_space<vmem>>, vector<1x8x128xf32>
    %844 = vector.shape_cast %843 : vector<1x8x128xf32> to vector<8x128xf32>
    %845 = vector.broadcast %842 : vector<1x1xf32> to vector<8x128xf32>
    %846 = arith.mulf %845, %844 : vector<8x128xf32>
    %cst_307 = arith.constant 1.000000e+00 : f32
    %847 = vector.broadcast %cst_307 : f32 to vector<1x1xf32>
    %848 = arith.subf %847, %842 : vector<1x1xf32>
    %849 = vector.broadcast %848 : vector<1x1xf32> to vector<8x128xf32>
    %850 = arith.mulf %849, %840 : vector<8x128xf32>
    %851 = arith.addf %846, %850 : vector<8x128xf32>
    %c0_308 = arith.constant 0 : index
    %c0_309 = arith.constant 0 : index
    %852 = vector.load %arg7[%c0_308, %c0_309] : memref<128x32xf32, #tpu.memory_space<vmem>>, vector<128x32xf32>
    %cst_310 = arith.constant dense<0.000000e+00> : vector<8x32xf32>
    %853 = tpu.matmul %851, %852, %cst_310 {dimension_numbers = #tpu.dot_dimension_numbers<[1], [0], [0], [1], [0, 0, 1, 1], [], []>} : vector<8x128xf32>, vector<128x32xf32>, vector<8x32xf32> -> vector<8x32xf32>
    %c0_311 = arith.constant 0 : index
    %c0_312 = arith.constant 0 : index
    %c0_313 = arith.constant 0 : index
    %854 = vector.load %arg5[%c0_311, %c0_312, %c0_313] : memref<2x64x128xf32, #tpu.memory_space<vmem>>, vector<1x64x128xf32>
    %855 = vector.shape_cast %854 : vector<1x64x128xf32> to vector<64x128xf32>
    %c0_314 = arith.constant 0 : index
    %c0_315 = arith.constant 0 : index
    %c0_316 = arith.constant 0 : index
    %856 = vector.load %arg6[%c0_314, %c0_315, %c0_316] : memref<2x1x128xf32, #tpu.memory_space<vmem>>, vector<1x1x128xf32>
    %857 = vector.shape_cast %856 : vector<1x1x128xf32> to vector<1x128xf32>
    %858 = tpu.concatenate %853, %787 in 1 : vector<8x32xf32>, vector<8x32xf32> -> vector<8x64xf32>
    %cst_317 = arith.constant dense<0.000000e+00> : vector<8x128xf32>
    %859 = tpu.matmul %858, %855, %cst_317 {dimension_numbers = #tpu.dot_dimension_numbers<[1], [0], [0], [1], [0, 0, 1, 1], [], []>} : vector<8x64xf32>, vector<64x128xf32>, vector<8x128xf32> -> vector<8x128xf32>
    %860 = vector.broadcast %857 : vector<1x128xf32> to vector<8x128xf32>
    %861 = arith.addf %859, %860 : vector<8x128xf32>
    %862 = vector.extract_strided_slice %861 {offsets = [0, 0], sizes = [8, 32], strides = [1, 1]} : vector<8x128xf32> to vector<8x32xf32>
    %863 = arith.negf %862 : vector<8x32xf32>
    %864 = math.exp %863 : vector<8x32xf32>
    %cst_318 = arith.constant 1.000000e+00 : f32
    %865 = vector.broadcast %cst_318 : f32 to vector<8x32xf32>
    %866 = arith.addf %865, %864 : vector<8x32xf32>
    %867 = arith.divf %865, %866 : vector<8x32xf32>
    %868 = vector.extract_strided_slice %861 {offsets = [0, 32], sizes = [8, 32], strides = [1, 1]} : vector<8x128xf32> to vector<8x32xf32>
    %869 = arith.negf %868 : vector<8x32xf32>
    %870 = math.exp %869 : vector<8x32xf32>
    %cst_319 = arith.constant 1.000000e+00 : f32
    %871 = vector.broadcast %cst_319 : f32 to vector<8x32xf32>
    %872 = arith.addf %871, %870 : vector<8x32xf32>
    %873 = arith.divf %871, %872 : vector<8x32xf32>
    %874 = vector.extract_strided_slice %861 {offsets = [0, 64], sizes = [8, 32], strides = [1, 1]} : vector<8x128xf32> to vector<8x32xf32>
    %875 = math.tanh %874 : vector<8x32xf32>
    %876 = vector.extract_strided_slice %861 {offsets = [0, 96], sizes = [8, 32], strides = [1, 1]} : vector<8x128xf32> to vector<8x32xf32>
    %877 = arith.negf %876 : vector<8x32xf32>
    %878 = math.exp %877 : vector<8x32xf32>
    %cst_320 = arith.constant 1.000000e+00 : f32
    %879 = vector.broadcast %cst_320 : f32 to vector<8x32xf32>
    %880 = arith.addf %879, %878 : vector<8x32xf32>
    %881 = arith.divf %879, %880 : vector<8x32xf32>
    %882 = arith.mulf %873, %785 : vector<8x32xf32>
    %883 = arith.mulf %867, %875 : vector<8x32xf32>
    %884 = arith.addf %882, %883 : vector<8x32xf32>
    %885 = math.tanh %884 : vector<8x32xf32>
    %886 = arith.mulf %881, %885 : vector<8x32xf32>
    %c1_321 = arith.constant 1 : index
    %c0_322 = arith.constant 0 : index
    %c0_323 = arith.constant 0 : index
    %887 = vector.load %arg5[%c1_321, %c0_322, %c0_323] : memref<2x64x128xf32, #tpu.memory_space<vmem>>, vector<1x64x128xf32>
    %888 = vector.shape_cast %887 : vector<1x64x128xf32> to vector<64x128xf32>
    %c1_324 = arith.constant 1 : index
    %c0_325 = arith.constant 0 : index
    %c0_326 = arith.constant 0 : index
    %889 = vector.load %arg6[%c1_324, %c0_325, %c0_326] : memref<2x1x128xf32, #tpu.memory_space<vmem>>, vector<1x1x128xf32>
    %890 = vector.shape_cast %889 : vector<1x1x128xf32> to vector<1x128xf32>
    %891 = tpu.concatenate %886, %820 in 1 : vector<8x32xf32>, vector<8x32xf32> -> vector<8x64xf32>
    %cst_327 = arith.constant dense<0.000000e+00> : vector<8x128xf32>
    %892 = tpu.matmul %891, %888, %cst_327 {dimension_numbers = #tpu.dot_dimension_numbers<[1], [0], [0], [1], [0, 0, 1, 1], [], []>} : vector<8x64xf32>, vector<64x128xf32>, vector<8x128xf32> -> vector<8x128xf32>
    %893 = vector.broadcast %890 : vector<1x128xf32> to vector<8x128xf32>
    %894 = arith.addf %892, %893 : vector<8x128xf32>
    %895 = vector.extract_strided_slice %894 {offsets = [0, 0], sizes = [8, 32], strides = [1, 1]} : vector<8x128xf32> to vector<8x32xf32>
    %896 = arith.negf %895 : vector<8x32xf32>
    %897 = math.exp %896 : vector<8x32xf32>
    %cst_328 = arith.constant 1.000000e+00 : f32
    %898 = vector.broadcast %cst_328 : f32 to vector<8x32xf32>
    %899 = arith.addf %898, %897 : vector<8x32xf32>
    %900 = arith.divf %898, %899 : vector<8x32xf32>
    %901 = vector.extract_strided_slice %894 {offsets = [0, 32], sizes = [8, 32], strides = [1, 1]} : vector<8x128xf32> to vector<8x32xf32>
    %902 = arith.negf %901 : vector<8x32xf32>
    %903 = math.exp %902 : vector<8x32xf32>
    %cst_329 = arith.constant 1.000000e+00 : f32
    %904 = vector.broadcast %cst_329 : f32 to vector<8x32xf32>
    %905 = arith.addf %904, %903 : vector<8x32xf32>
    %906 = arith.divf %904, %905 : vector<8x32xf32>
    %907 = vector.extract_strided_slice %894 {offsets = [0, 64], sizes = [8, 32], strides = [1, 1]} : vector<8x128xf32> to vector<8x32xf32>
    %908 = math.tanh %907 : vector<8x32xf32>
    %909 = vector.extract_strided_slice %894 {offsets = [0, 96], sizes = [8, 32], strides = [1, 1]} : vector<8x128xf32> to vector<8x32xf32>
    %910 = arith.negf %909 : vector<8x32xf32>
    %911 = math.exp %910 : vector<8x32xf32>
    %cst_330 = arith.constant 1.000000e+00 : f32
    %912 = vector.broadcast %cst_330 : f32 to vector<8x32xf32>
    %913 = arith.addf %912, %911 : vector<8x32xf32>
    %914 = arith.divf %912, %913 : vector<8x32xf32>
    %915 = arith.mulf %906, %818 : vector<8x32xf32>
    %916 = arith.mulf %900, %908 : vector<8x32xf32>
    %917 = arith.addf %915, %916 : vector<8x32xf32>
    %918 = math.tanh %917 : vector<8x32xf32>
    %919 = arith.mulf %914, %918 : vector<8x32xf32>
    %c0_331 = arith.constant 0 : index
    %c0_332 = arith.constant 0 : index
    %920 = vector.load %arg8[%c0_331, %c0_332] : memref<32x128xf32, #tpu.memory_space<vmem>>, vector<32x128xf32>
    %cst_333 = arith.constant dense<0.000000e+00> : vector<8x128xf32>
    %921 = tpu.matmul %919, %920, %cst_333 {dimension_numbers = #tpu.dot_dimension_numbers<[1], [0], [0], [1], [0, 0, 1, 1], [], []>} : vector<8x32xf32>, vector<32x128xf32>, vector<8x128xf32> -> vector<8x128xf32>
    %c0_334 = arith.constant 0 : index
    %c0_335 = arith.constant 0 : index
    %922 = vector.load %arg9[%c0_334, %c0_335] : memref<1x128xf32, #tpu.memory_space<vmem>>, vector<1x128xf32>
    %923 = vector.broadcast %922 : vector<1x128xf32> to vector<8x128xf32>
    %924 = arith.addf %921, %923 : vector<8x128xf32>
    %c4_336 = arith.constant 4 : index
    %c0_337 = arith.constant 0 : index
    %c0_338 = arith.constant 0 : index
    %925 = vector.load %arg10[%c4_336, %c0_337, %c0_338] : memref<8x8x128xf32, #tpu.memory_space<vmem>>, vector<1x8x128xf32>
    %926 = vector.shape_cast %925 : vector<1x8x128xf32> to vector<8x128xf32>
    %927 = vector.shape_cast %924 : vector<8x128xf32> to vector<1x8x128xf32>
    tpu.vector_store %arg10[%c4_336, %c0_337, %c0_338], %927 {strides = array<i32>} : memref<8x8x128xf32, #tpu.memory_space<vmem>>, vector<1x8x128xf32>,
    %cst_339 = arith.constant dense<0xFF800000> : vector<8xf32>
    %928 = vector.multi_reduction <maximumf>, %924, %cst_339 [1] : vector<8x128xf32> to vector<8xf32>
    %929 = vector.shape_cast %928 : vector<8xf32> to vector<8x1xf32>
    %930 = vector.broadcast %929 : vector<8x1xf32> to vector<8x128xf32>
    %931 = arith.cmpf oeq, %924, %930 : vector<8x128xf32>
    %c128_i32_340 = arith.constant 128 : i32
    %932 = vector.broadcast %c128_i32_340 : i32 to vector<8x128xi32>
    %933 = arith.select %931, %552, %932 : vector<8x128xi1>, vector<8x128xi32>
    %cst_341 = arith.constant dense<2147483647> : vector<8xi32>
    %934 = vector.multi_reduction <minsi>, %933, %cst_341 [1] : vector<8x128xi32> to vector<8xi32>
    %935 = vector.shape_cast %934 : vector<8xi32> to vector<8x1xi32>
    %936 = vector.broadcast %935 : vector<8x1xi32> to vector<8x128xi32>
    %937 = arith.cmpi eq, %552, %936 : vector<8x128xi32>
    %938 = arith.extui %937 : vector<8x128xi1> to vector<8x128xi32>
    %939 = arith.sitofp %938 : vector<8x128xi32> to vector<8x128xf32>
    %c4_342 = arith.constant 4 : index
    %c0_343 = arith.constant 0 : index
    %c0_344 = arith.constant 0 : index
    %940 = vector.load %arg2[%c4_342, %c0_343, %c0_344] : memref<8x1x1xf32, #tpu.memory_space<vmem>>, vector<1x1x1xf32>
    %941 = vector.shape_cast %940 : vector<1x1x1xf32> to vector<1x1xf32>
    %c4_345 = arith.constant 4 : index
    %c0_346 = arith.constant 0 : index
    %c0_347 = arith.constant 0 : index
    %942 = vector.load %arg1[%c4_345, %c0_346, %c0_347] : memref<8x8x128xf32, #tpu.memory_space<vmem>>, vector<1x8x128xf32>
    %943 = vector.shape_cast %942 : vector<1x8x128xf32> to vector<8x128xf32>
    %944 = vector.broadcast %941 : vector<1x1xf32> to vector<8x128xf32>
    %945 = arith.mulf %944, %943 : vector<8x128xf32>
    %cst_348 = arith.constant 1.000000e+00 : f32
    %946 = vector.broadcast %cst_348 : f32 to vector<1x1xf32>
    %947 = arith.subf %946, %941 : vector<1x1xf32>
    %948 = vector.broadcast %947 : vector<1x1xf32> to vector<8x128xf32>
    %949 = arith.mulf %948, %939 : vector<8x128xf32>
    %950 = arith.addf %945, %949 : vector<8x128xf32>
    %c0_349 = arith.constant 0 : index
    %c0_350 = arith.constant 0 : index
    %951 = vector.load %arg7[%c0_349, %c0_350] : memref<128x32xf32, #tpu.memory_space<vmem>>, vector<128x32xf32>
    %cst_351 = arith.constant dense<0.000000e+00> : vector<8x32xf32>
    %952 = tpu.matmul %950, %951, %cst_351 {dimension_numbers = #tpu.dot_dimension_numbers<[1], [0], [0], [1], [0, 0, 1, 1], [], []>} : vector<8x128xf32>, vector<128x32xf32>, vector<8x32xf32> -> vector<8x32xf32>
    %c0_352 = arith.constant 0 : index
    %c0_353 = arith.constant 0 : index
    %c0_354 = arith.constant 0 : index
    %953 = vector.load %arg5[%c0_352, %c0_353, %c0_354] : memref<2x64x128xf32, #tpu.memory_space<vmem>>, vector<1x64x128xf32>
    %954 = vector.shape_cast %953 : vector<1x64x128xf32> to vector<64x128xf32>
    %c0_355 = arith.constant 0 : index
    %c0_356 = arith.constant 0 : index
    %c0_357 = arith.constant 0 : index
    %955 = vector.load %arg6[%c0_355, %c0_356, %c0_357] : memref<2x1x128xf32, #tpu.memory_space<vmem>>, vector<1x1x128xf32>
    %956 = vector.shape_cast %955 : vector<1x1x128xf32> to vector<1x128xf32>
    %957 = tpu.concatenate %952, %886 in 1 : vector<8x32xf32>, vector<8x32xf32> -> vector<8x64xf32>
    %cst_358 = arith.constant dense<0.000000e+00> : vector<8x128xf32>
    %958 = tpu.matmul %957, %954, %cst_358 {dimension_numbers = #tpu.dot_dimension_numbers<[1], [0], [0], [1], [0, 0, 1, 1], [], []>} : vector<8x64xf32>, vector<64x128xf32>, vector<8x128xf32> -> vector<8x128xf32>
    %959 = vector.broadcast %956 : vector<1x128xf32> to vector<8x128xf32>
    %960 = arith.addf %958, %959 : vector<8x128xf32>
    %961 = vector.extract_strided_slice %960 {offsets = [0, 0], sizes = [8, 32], strides = [1, 1]} : vector<8x128xf32> to vector<8x32xf32>
    %962 = arith.negf %961 : vector<8x32xf32>
    %963 = math.exp %962 : vector<8x32xf32>
    %cst_359 = arith.constant 1.000000e+00 : f32
    %964 = vector.broadcast %cst_359 : f32 to vector<8x32xf32>
    %965 = arith.addf %964, %963 : vector<8x32xf32>
    %966 = arith.divf %964, %965 : vector<8x32xf32>
    %967 = vector.extract_strided_slice %960 {offsets = [0, 32], sizes = [8, 32], strides = [1, 1]} : vector<8x128xf32> to vector<8x32xf32>
    %968 = arith.negf %967 : vector<8x32xf32>
    %969 = math.exp %968 : vector<8x32xf32>
    %cst_360 = arith.constant 1.000000e+00 : f32
    %970 = vector.broadcast %cst_360 : f32 to vector<8x32xf32>
    %971 = arith.addf %970, %969 : vector<8x32xf32>
    %972 = arith.divf %970, %971 : vector<8x32xf32>
    %973 = vector.extract_strided_slice %960 {offsets = [0, 64], sizes = [8, 32], strides = [1, 1]} : vector<8x128xf32> to vector<8x32xf32>
    %974 = math.tanh %973 : vector<8x32xf32>
    %975 = vector.extract_strided_slice %960 {offsets = [0, 96], sizes = [8, 32], strides = [1, 1]} : vector<8x128xf32> to vector<8x32xf32>
    %976 = arith.negf %975 : vector<8x32xf32>
    %977 = math.exp %976 : vector<8x32xf32>
    %cst_361 = arith.constant 1.000000e+00 : f32
    %978 = vector.broadcast %cst_361 : f32 to vector<8x32xf32>
    %979 = arith.addf %978, %977 : vector<8x32xf32>
    %980 = arith.divf %978, %979 : vector<8x32xf32>
    %981 = arith.mulf %972, %884 : vector<8x32xf32>
    %982 = arith.mulf %966, %974 : vector<8x32xf32>
    %983 = arith.addf %981, %982 : vector<8x32xf32>
    %984 = math.tanh %983 : vector<8x32xf32>
    %985 = arith.mulf %980, %984 : vector<8x32xf32>
    %c1_362 = arith.constant 1 : index
    %c0_363 = arith.constant 0 : index
    %c0_364 = arith.constant 0 : index
    %986 = vector.load %arg5[%c1_362, %c0_363, %c0_364] : memref<2x64x128xf32, #tpu.memory_space<vmem>>, vector<1x64x128xf32>
    %987 = vector.shape_cast %986 : vector<1x64x128xf32> to vector<64x128xf32>
    %c1_365 = arith.constant 1 : index
    %c0_366 = arith.constant 0 : index
    %c0_367 = arith.constant 0 : index
    %988 = vector.load %arg6[%c1_365, %c0_366, %c0_367] : memref<2x1x128xf32, #tpu.memory_space<vmem>>, vector<1x1x128xf32>
    %989 = vector.shape_cast %988 : vector<1x1x128xf32> to vector<1x128xf32>
    %990 = tpu.concatenate %985, %919 in 1 : vector<8x32xf32>, vector<8x32xf32> -> vector<8x64xf32>
    %cst_368 = arith.constant dense<0.000000e+00> : vector<8x128xf32>
    %991 = tpu.matmul %990, %987, %cst_368 {dimension_numbers = #tpu.dot_dimension_numbers<[1], [0], [0], [1], [0, 0, 1, 1], [], []>} : vector<8x64xf32>, vector<64x128xf32>, vector<8x128xf32> -> vector<8x128xf32>
    %992 = vector.broadcast %989 : vector<1x128xf32> to vector<8x128xf32>
    %993 = arith.addf %991, %992 : vector<8x128xf32>
    %994 = vector.extract_strided_slice %993 {offsets = [0, 0], sizes = [8, 32], strides = [1, 1]} : vector<8x128xf32> to vector<8x32xf32>
    %995 = arith.negf %994 : vector<8x32xf32>
    %996 = math.exp %995 : vector<8x32xf32>
    %cst_369 = arith.constant 1.000000e+00 : f32
    %997 = vector.broadcast %cst_369 : f32 to vector<8x32xf32>
    %998 = arith.addf %997, %996 : vector<8x32xf32>
    %999 = arith.divf %997, %998 : vector<8x32xf32>
    %1000 = vector.extract_strided_slice %993 {offsets = [0, 32], sizes = [8, 32], strides = [1, 1]} : vector<8x128xf32> to vector<8x32xf32>
    %1001 = arith.negf %1000 : vector<8x32xf32>
    %1002 = math.exp %1001 : vector<8x32xf32>
    %cst_370 = arith.constant 1.000000e+00 : f32
    %1003 = vector.broadcast %cst_370 : f32 to vector<8x32xf32>
    %1004 = arith.addf %1003, %1002 : vector<8x32xf32>
    %1005 = arith.divf %1003, %1004 : vector<8x32xf32>
    %1006 = vector.extract_strided_slice %993 {offsets = [0, 64], sizes = [8, 32], strides = [1, 1]} : vector<8x128xf32> to vector<8x32xf32>
    %1007 = math.tanh %1006 : vector<8x32xf32>
    %1008 = vector.extract_strided_slice %993 {offsets = [0, 96], sizes = [8, 32], strides = [1, 1]} : vector<8x128xf32> to vector<8x32xf32>
    %1009 = arith.negf %1008 : vector<8x32xf32>
    %1010 = math.exp %1009 : vector<8x32xf32>
    %cst_371 = arith.constant 1.000000e+00 : f32
    %1011 = vector.broadcast %cst_371 : f32 to vector<8x32xf32>
    %1012 = arith.addf %1011, %1010 : vector<8x32xf32>
    %1013 = arith.divf %1011, %1012 : vector<8x32xf32>
    %1014 = arith.mulf %1005, %917 : vector<8x32xf32>
    %1015 = arith.mulf %999, %1007 : vector<8x32xf32>
    %1016 = arith.addf %1014, %1015 : vector<8x32xf32>
    %1017 = math.tanh %1016 : vector<8x32xf32>
    %1018 = arith.mulf %1013, %1017 : vector<8x32xf32>
    %c0_372 = arith.constant 0 : index
    %c0_373 = arith.constant 0 : index
    %1019 = vector.load %arg8[%c0_372, %c0_373] : memref<32x128xf32, #tpu.memory_space<vmem>>, vector<32x128xf32>
    %cst_374 = arith.constant dense<0.000000e+00> : vector<8x128xf32>
    %1020 = tpu.matmul %1018, %1019, %cst_374 {dimension_numbers = #tpu.dot_dimension_numbers<[1], [0], [0], [1], [0, 0, 1, 1], [], []>} : vector<8x32xf32>, vector<32x128xf32>, vector<8x128xf32> -> vector<8x128xf32>
    %c0_375 = arith.constant 0 : index
    %c0_376 = arith.constant 0 : index
    %1021 = vector.load %arg9[%c0_375, %c0_376] : memref<1x128xf32, #tpu.memory_space<vmem>>, vector<1x128xf32>
    %1022 = vector.broadcast %1021 : vector<1x128xf32> to vector<8x128xf32>
    %1023 = arith.addf %1020, %1022 : vector<8x128xf32>
    %c5_377 = arith.constant 5 : index
    %c0_378 = arith.constant 0 : index
    %c0_379 = arith.constant 0 : index
    %1024 = vector.load %arg10[%c5_377, %c0_378, %c0_379] : memref<8x8x128xf32, #tpu.memory_space<vmem>>, vector<1x8x128xf32>
    %1025 = vector.shape_cast %1024 : vector<1x8x128xf32> to vector<8x128xf32>
    %1026 = vector.shape_cast %1023 : vector<8x128xf32> to vector<1x8x128xf32>
    tpu.vector_store %arg10[%c5_377, %c0_378, %c0_379], %1026 {strides = array<i32>} : memref<8x8x128xf32, #tpu.memory_space<vmem>>, vector<1x8x128xf32>,
    %cst_380 = arith.constant dense<0xFF800000> : vector<8xf32>
    %1027 = vector.multi_reduction <maximumf>, %1023, %cst_380 [1] : vector<8x128xf32> to vector<8xf32>
    %1028 = vector.shape_cast %1027 : vector<8xf32> to vector<8x1xf32>
    %1029 = vector.broadcast %1028 : vector<8x1xf32> to vector<8x128xf32>
    %1030 = arith.cmpf oeq, %1023, %1029 : vector<8x128xf32>
    %c128_i32_381 = arith.constant 128 : i32
    %1031 = vector.broadcast %c128_i32_381 : i32 to vector<8x128xi32>
    %1032 = arith.select %1030, %552, %1031 : vector<8x128xi1>, vector<8x128xi32>
    %cst_382 = arith.constant dense<2147483647> : vector<8xi32>
    %1033 = vector.multi_reduction <minsi>, %1032, %cst_382 [1] : vector<8x128xi32> to vector<8xi32>
    %1034 = vector.shape_cast %1033 : vector<8xi32> to vector<8x1xi32>
    %1035 = vector.broadcast %1034 : vector<8x1xi32> to vector<8x128xi32>
    %1036 = arith.cmpi eq, %552, %1035 : vector<8x128xi32>
    %1037 = arith.extui %1036 : vector<8x128xi1> to vector<8x128xi32>
    %1038 = arith.sitofp %1037 : vector<8x128xi32> to vector<8x128xf32>
    %c5_383 = arith.constant 5 : index
    %c0_384 = arith.constant 0 : index
    %c0_385 = arith.constant 0 : index
    %1039 = vector.load %arg2[%c5_383, %c0_384, %c0_385] : memref<8x1x1xf32, #tpu.memory_space<vmem>>, vector<1x1x1xf32>
    %1040 = vector.shape_cast %1039 : vector<1x1x1xf32> to vector<1x1xf32>
    %c5_386 = arith.constant 5 : index
    %c0_387 = arith.constant 0 : index
    %c0_388 = arith.constant 0 : index
    %1041 = vector.load %arg1[%c5_386, %c0_387, %c0_388] : memref<8x8x128xf32, #tpu.memory_space<vmem>>, vector<1x8x128xf32>
    %1042 = vector.shape_cast %1041 : vector<1x8x128xf32> to vector<8x128xf32>
    %1043 = vector.broadcast %1040 : vector<1x1xf32> to vector<8x128xf32>
    %1044 = arith.mulf %1043, %1042 : vector<8x128xf32>
    %cst_389 = arith.constant 1.000000e+00 : f32
    %1045 = vector.broadcast %cst_389 : f32 to vector<1x1xf32>
    %1046 = arith.subf %1045, %1040 : vector<1x1xf32>
    %1047 = vector.broadcast %1046 : vector<1x1xf32> to vector<8x128xf32>
    %1048 = arith.mulf %1047, %1038 : vector<8x128xf32>
    %1049 = arith.addf %1044, %1048 : vector<8x128xf32>
    %c0_390 = arith.constant 0 : index
    %c0_391 = arith.constant 0 : index
    %1050 = vector.load %arg7[%c0_390, %c0_391] : memref<128x32xf32, #tpu.memory_space<vmem>>, vector<128x32xf32>
    %cst_392 = arith.constant dense<0.000000e+00> : vector<8x32xf32>
    %1051 = tpu.matmul %1049, %1050, %cst_392 {dimension_numbers = #tpu.dot_dimension_numbers<[1], [0], [0], [1], [0, 0, 1, 1], [], []>} : vector<8x128xf32>, vector<128x32xf32>, vector<8x32xf32> -> vector<8x32xf32>
    %c0_393 = arith.constant 0 : index
    %c0_394 = arith.constant 0 : index
    %c0_395 = arith.constant 0 : index
    %1052 = vector.load %arg5[%c0_393, %c0_394, %c0_395] : memref<2x64x128xf32, #tpu.memory_space<vmem>>, vector<1x64x128xf32>
    %1053 = vector.shape_cast %1052 : vector<1x64x128xf32> to vector<64x128xf32>
    %c0_396 = arith.constant 0 : index
    %c0_397 = arith.constant 0 : index
    %c0_398 = arith.constant 0 : index
    %1054 = vector.load %arg6[%c0_396, %c0_397, %c0_398] : memref<2x1x128xf32, #tpu.memory_space<vmem>>, vector<1x1x128xf32>
    %1055 = vector.shape_cast %1054 : vector<1x1x128xf32> to vector<1x128xf32>
    %1056 = tpu.concatenate %1051, %985 in 1 : vector<8x32xf32>, vector<8x32xf32> -> vector<8x64xf32>
    %cst_399 = arith.constant dense<0.000000e+00> : vector<8x128xf32>
    %1057 = tpu.matmul %1056, %1053, %cst_399 {dimension_numbers = #tpu.dot_dimension_numbers<[1], [0], [0], [1], [0, 0, 1, 1], [], []>} : vector<8x64xf32>, vector<64x128xf32>, vector<8x128xf32> -> vector<8x128xf32>
    %1058 = vector.broadcast %1055 : vector<1x128xf32> to vector<8x128xf32>
    %1059 = arith.addf %1057, %1058 : vector<8x128xf32>
    %1060 = vector.extract_strided_slice %1059 {offsets = [0, 0], sizes = [8, 32], strides = [1, 1]} : vector<8x128xf32> to vector<8x32xf32>
    %1061 = arith.negf %1060 : vector<8x32xf32>
    %1062 = math.exp %1061 : vector<8x32xf32>
    %cst_400 = arith.constant 1.000000e+00 : f32
    %1063 = vector.broadcast %cst_400 : f32 to vector<8x32xf32>
    %1064 = arith.addf %1063, %1062 : vector<8x32xf32>
    %1065 = arith.divf %1063, %1064 : vector<8x32xf32>
    %1066 = vector.extract_strided_slice %1059 {offsets = [0, 32], sizes = [8, 32], strides = [1, 1]} : vector<8x128xf32> to vector<8x32xf32>
    %1067 = arith.negf %1066 : vector<8x32xf32>
    %1068 = math.exp %1067 : vector<8x32xf32>
    %cst_401 = arith.constant 1.000000e+00 : f32
    %1069 = vector.broadcast %cst_401 : f32 to vector<8x32xf32>
    %1070 = arith.addf %1069, %1068 : vector<8x32xf32>
    %1071 = arith.divf %1069, %1070 : vector<8x32xf32>
    %1072 = vector.extract_strided_slice %1059 {offsets = [0, 64], sizes = [8, 32], strides = [1, 1]} : vector<8x128xf32> to vector<8x32xf32>
    %1073 = math.tanh %1072 : vector<8x32xf32>
    %1074 = vector.extract_strided_slice %1059 {offsets = [0, 96], sizes = [8, 32], strides = [1, 1]} : vector<8x128xf32> to vector<8x32xf32>
    %1075 = arith.negf %1074 : vector<8x32xf32>
    %1076 = math.exp %1075 : vector<8x32xf32>
    %cst_402 = arith.constant 1.000000e+00 : f32
    %1077 = vector.broadcast %cst_402 : f32 to vector<8x32xf32>
    %1078 = arith.addf %1077, %1076 : vector<8x32xf32>
    %1079 = arith.divf %1077, %1078 : vector<8x32xf32>
    %1080 = arith.mulf %1071, %983 : vector<8x32xf32>
    %1081 = arith.mulf %1065, %1073 : vector<8x32xf32>
    %1082 = arith.addf %1080, %1081 : vector<8x32xf32>
    %1083 = math.tanh %1082 : vector<8x32xf32>
    %1084 = arith.mulf %1079, %1083 : vector<8x32xf32>
    %c1_403 = arith.constant 1 : index
    %c0_404 = arith.constant 0 : index
    %c0_405 = arith.constant 0 : index
    %1085 = vector.load %arg5[%c1_403, %c0_404, %c0_405] : memref<2x64x128xf32, #tpu.memory_space<vmem>>, vector<1x64x128xf32>
    %1086 = vector.shape_cast %1085 : vector<1x64x128xf32> to vector<64x128xf32>
    %c1_406 = arith.constant 1 : index
    %c0_407 = arith.constant 0 : index
    %c0_408 = arith.constant 0 : index
    %1087 = vector.load %arg6[%c1_406, %c0_407, %c0_408] : memref<2x1x128xf32, #tpu.memory_space<vmem>>, vector<1x1x128xf32>
    %1088 = vector.shape_cast %1087 : vector<1x1x128xf32> to vector<1x128xf32>
    %1089 = tpu.concatenate %1084, %1018 in 1 : vector<8x32xf32>, vector<8x32xf32> -> vector<8x64xf32>
    %cst_409 = arith.constant dense<0.000000e+00> : vector<8x128xf32>
    %1090 = tpu.matmul %1089, %1086, %cst_409 {dimension_numbers = #tpu.dot_dimension_numbers<[1], [0], [0], [1], [0, 0, 1, 1], [], []>} : vector<8x64xf32>, vector<64x128xf32>, vector<8x128xf32> -> vector<8x128xf32>
    %1091 = vector.broadcast %1088 : vector<1x128xf32> to vector<8x128xf32>
    %1092 = arith.addf %1090, %1091 : vector<8x128xf32>
    %1093 = vector.extract_strided_slice %1092 {offsets = [0, 0], sizes = [8, 32], strides = [1, 1]} : vector<8x128xf32> to vector<8x32xf32>
    %1094 = arith.negf %1093 : vector<8x32xf32>
    %1095 = math.exp %1094 : vector<8x32xf32>
    %cst_410 = arith.constant 1.000000e+00 : f32
    %1096 = vector.broadcast %cst_410 : f32 to vector<8x32xf32>
    %1097 = arith.addf %1096, %1095 : vector<8x32xf32>
    %1098 = arith.divf %1096, %1097 : vector<8x32xf32>
    %1099 = vector.extract_strided_slice %1092 {offsets = [0, 32], sizes = [8, 32], strides = [1, 1]} : vector<8x128xf32> to vector<8x32xf32>
    %1100 = arith.negf %1099 : vector<8x32xf32>
    %1101 = math.exp %1100 : vector<8x32xf32>
    %cst_411 = arith.constant 1.000000e+00 : f32
    %1102 = vector.broadcast %cst_411 : f32 to vector<8x32xf32>
    %1103 = arith.addf %1102, %1101 : vector<8x32xf32>
    %1104 = arith.divf %1102, %1103 : vector<8x32xf32>
    %1105 = vector.extract_strided_slice %1092 {offsets = [0, 64], sizes = [8, 32], strides = [1, 1]} : vector<8x128xf32> to vector<8x32xf32>
    %1106 = math.tanh %1105 : vector<8x32xf32>
    %1107 = vector.extract_strided_slice %1092 {offsets = [0, 96], sizes = [8, 32], strides = [1, 1]} : vector<8x128xf32> to vector<8x32xf32>
    %1108 = arith.negf %1107 : vector<8x32xf32>
    %1109 = math.exp %1108 : vector<8x32xf32>
    %cst_412 = arith.constant 1.000000e+00 : f32
    %1110 = vector.broadcast %cst_412 : f32 to vector<8x32xf32>
    %1111 = arith.addf %1110, %1109 : vector<8x32xf32>
    %1112 = arith.divf %1110, %1111 : vector<8x32xf32>
    %1113 = arith.mulf %1104, %1016 : vector<8x32xf32>
    %1114 = arith.mulf %1098, %1106 : vector<8x32xf32>
    %1115 = arith.addf %1113, %1114 : vector<8x32xf32>
    %1116 = math.tanh %1115 : vector<8x32xf32>
    %1117 = arith.mulf %1112, %1116 : vector<8x32xf32>
    %c0_413 = arith.constant 0 : index
    %c0_414 = arith.constant 0 : index
    %1118 = vector.load %arg8[%c0_413, %c0_414] : memref<32x128xf32, #tpu.memory_space<vmem>>, vector<32x128xf32>
    %cst_415 = arith.constant dense<0.000000e+00> : vector<8x128xf32>
    %1119 = tpu.matmul %1117, %1118, %cst_415 {dimension_numbers = #tpu.dot_dimension_numbers<[1], [0], [0], [1], [0, 0, 1, 1], [], []>} : vector<8x32xf32>, vector<32x128xf32>, vector<8x128xf32> -> vector<8x128xf32>
    %c0_416 = arith.constant 0 : index
    %c0_417 = arith.constant 0 : index
    %1120 = vector.load %arg9[%c0_416, %c0_417] : memref<1x128xf32, #tpu.memory_space<vmem>>, vector<1x128xf32>
    %1121 = vector.broadcast %1120 : vector<1x128xf32> to vector<8x128xf32>
    %1122 = arith.addf %1119, %1121 : vector<8x128xf32>
    %c6_418 = arith.constant 6 : index
    %c0_419 = arith.constant 0 : index
    %c0_420 = arith.constant 0 : index
    %1123 = vector.load %arg10[%c6_418, %c0_419, %c0_420] : memref<8x8x128xf32, #tpu.memory_space<vmem>>, vector<1x8x128xf32>
    %1124 = vector.shape_cast %1123 : vector<1x8x128xf32> to vector<8x128xf32>
    %1125 = vector.shape_cast %1122 : vector<8x128xf32> to vector<1x8x128xf32>
    tpu.vector_store %arg10[%c6_418, %c0_419, %c0_420], %1125 {strides = array<i32>} : memref<8x8x128xf32, #tpu.memory_space<vmem>>, vector<1x8x128xf32>,
    %cst_421 = arith.constant dense<0xFF800000> : vector<8xf32>
    %1126 = vector.multi_reduction <maximumf>, %1122, %cst_421 [1] : vector<8x128xf32> to vector<8xf32>
    %1127 = vector.shape_cast %1126 : vector<8xf32> to vector<8x1xf32>
    %1128 = vector.broadcast %1127 : vector<8x1xf32> to vector<8x128xf32>
    %1129 = arith.cmpf oeq, %1122, %1128 : vector<8x128xf32>
    %c128_i32_422 = arith.constant 128 : i32
    %1130 = vector.broadcast %c128_i32_422 : i32 to vector<8x128xi32>
    %1131 = arith.select %1129, %552, %1130 : vector<8x128xi1>, vector<8x128xi32>
    %cst_423 = arith.constant dense<2147483647> : vector<8xi32>
    %1132 = vector.multi_reduction <minsi>, %1131, %cst_423 [1] : vector<8x128xi32> to vector<8xi32>
    %1133 = vector.shape_cast %1132 : vector<8xi32> to vector<8x1xi32>
    %1134 = vector.broadcast %1133 : vector<8x1xi32> to vector<8x128xi32>
    %1135 = arith.cmpi eq, %552, %1134 : vector<8x128xi32>
    %1136 = arith.extui %1135 : vector<8x128xi1> to vector<8x128xi32>
    %1137 = arith.sitofp %1136 : vector<8x128xi32> to vector<8x128xf32>
    %c6_424 = arith.constant 6 : index
    %c0_425 = arith.constant 0 : index
    %c0_426 = arith.constant 0 : index
    %1138 = vector.load %arg2[%c6_424, %c0_425, %c0_426] : memref<8x1x1xf32, #tpu.memory_space<vmem>>, vector<1x1x1xf32>
    %1139 = vector.shape_cast %1138 : vector<1x1x1xf32> to vector<1x1xf32>
    %c6_427 = arith.constant 6 : index
    %c0_428 = arith.constant 0 : index
    %c0_429 = arith.constant 0 : index
    %1140 = vector.load %arg1[%c6_427, %c0_428, %c0_429] : memref<8x8x128xf32, #tpu.memory_space<vmem>>, vector<1x8x128xf32>
    %1141 = vector.shape_cast %1140 : vector<1x8x128xf32> to vector<8x128xf32>
    %1142 = vector.broadcast %1139 : vector<1x1xf32> to vector<8x128xf32>
    %1143 = arith.mulf %1142, %1141 : vector<8x128xf32>
    %cst_430 = arith.constant 1.000000e+00 : f32
    %1144 = vector.broadcast %cst_430 : f32 to vector<1x1xf32>
    %1145 = arith.subf %1144, %1139 : vector<1x1xf32>
    %1146 = vector.broadcast %1145 : vector<1x1xf32> to vector<8x128xf32>
    %1147 = arith.mulf %1146, %1137 : vector<8x128xf32>
    %1148 = arith.addf %1143, %1147 : vector<8x128xf32>
    %c0_431 = arith.constant 0 : index
    %c0_432 = arith.constant 0 : index
    %1149 = vector.load %arg7[%c0_431, %c0_432] : memref<128x32xf32, #tpu.memory_space<vmem>>, vector<128x32xf32>
    %cst_433 = arith.constant dense<0.000000e+00> : vector<8x32xf32>
    %1150 = tpu.matmul %1148, %1149, %cst_433 {dimension_numbers = #tpu.dot_dimension_numbers<[1], [0], [0], [1], [0, 0, 1, 1], [], []>} : vector<8x128xf32>, vector<128x32xf32>, vector<8x32xf32> -> vector<8x32xf32>
    %c0_434 = arith.constant 0 : index
    %c0_435 = arith.constant 0 : index
    %c0_436 = arith.constant 0 : index
    %1151 = vector.load %arg5[%c0_434, %c0_435, %c0_436] : memref<2x64x128xf32, #tpu.memory_space<vmem>>, vector<1x64x128xf32>
    %1152 = vector.shape_cast %1151 : vector<1x64x128xf32> to vector<64x128xf32>
    %c0_437 = arith.constant 0 : index
    %c0_438 = arith.constant 0 : index
    %c0_439 = arith.constant 0 : index
    %1153 = vector.load %arg6[%c0_437, %c0_438, %c0_439] : memref<2x1x128xf32, #tpu.memory_space<vmem>>, vector<1x1x128xf32>
    %1154 = vector.shape_cast %1153 : vector<1x1x128xf32> to vector<1x128xf32>
    %1155 = tpu.concatenate %1150, %1084 in 1 : vector<8x32xf32>, vector<8x32xf32> -> vector<8x64xf32>
    %cst_440 = arith.constant dense<0.000000e+00> : vector<8x128xf32>
    %1156 = tpu.matmul %1155, %1152, %cst_440 {dimension_numbers = #tpu.dot_dimension_numbers<[1], [0], [0], [1], [0, 0, 1, 1], [], []>} : vector<8x64xf32>, vector<64x128xf32>, vector<8x128xf32> -> vector<8x128xf32>
    %1157 = vector.broadcast %1154 : vector<1x128xf32> to vector<8x128xf32>
    %1158 = arith.addf %1156, %1157 : vector<8x128xf32>
    %1159 = vector.extract_strided_slice %1158 {offsets = [0, 0], sizes = [8, 32], strides = [1, 1]} : vector<8x128xf32> to vector<8x32xf32>
    %1160 = arith.negf %1159 : vector<8x32xf32>
    %1161 = math.exp %1160 : vector<8x32xf32>
    %cst_441 = arith.constant 1.000000e+00 : f32
    %1162 = vector.broadcast %cst_441 : f32 to vector<8x32xf32>
    %1163 = arith.addf %1162, %1161 : vector<8x32xf32>
    %1164 = arith.divf %1162, %1163 : vector<8x32xf32>
    %1165 = vector.extract_strided_slice %1158 {offsets = [0, 32], sizes = [8, 32], strides = [1, 1]} : vector<8x128xf32> to vector<8x32xf32>
    %1166 = arith.negf %1165 : vector<8x32xf32>
    %1167 = math.exp %1166 : vector<8x32xf32>
    %cst_442 = arith.constant 1.000000e+00 : f32
    %1168 = vector.broadcast %cst_442 : f32 to vector<8x32xf32>
    %1169 = arith.addf %1168, %1167 : vector<8x32xf32>
    %1170 = arith.divf %1168, %1169 : vector<8x32xf32>
    %1171 = vector.extract_strided_slice %1158 {offsets = [0, 64], sizes = [8, 32], strides = [1, 1]} : vector<8x128xf32> to vector<8x32xf32>
    %1172 = math.tanh %1171 : vector<8x32xf32>
    %1173 = vector.extract_strided_slice %1158 {offsets = [0, 96], sizes = [8, 32], strides = [1, 1]} : vector<8x128xf32> to vector<8x32xf32>
    %1174 = arith.negf %1173 : vector<8x32xf32>
    %1175 = math.exp %1174 : vector<8x32xf32>
    %cst_443 = arith.constant 1.000000e+00 : f32
    %1176 = vector.broadcast %cst_443 : f32 to vector<8x32xf32>
    %1177 = arith.addf %1176, %1175 : vector<8x32xf32>
    %1178 = arith.divf %1176, %1177 : vector<8x32xf32>
    %1179 = arith.mulf %1170, %1082 : vector<8x32xf32>
    %1180 = arith.mulf %1164, %1172 : vector<8x32xf32>
    %1181 = arith.addf %1179, %1180 : vector<8x32xf32>
    %1182 = math.tanh %1181 : vector<8x32xf32>
    %1183 = arith.mulf %1178, %1182 : vector<8x32xf32>
    %c1_444 = arith.constant 1 : index
    %c0_445 = arith.constant 0 : index
    %c0_446 = arith.constant 0 : index
    %1184 = vector.load %arg5[%c1_444, %c0_445, %c0_446] : memref<2x64x128xf32, #tpu.memory_space<vmem>>, vector<1x64x128xf32>
    %1185 = vector.shape_cast %1184 : vector<1x64x128xf32> to vector<64x128xf32>
    %c1_447 = arith.constant 1 : index
    %c0_448 = arith.constant 0 : index
    %c0_449 = arith.constant 0 : index
    %1186 = vector.load %arg6[%c1_447, %c0_448, %c0_449] : memref<2x1x128xf32, #tpu.memory_space<vmem>>, vector<1x1x128xf32>
    %1187 = vector.shape_cast %1186 : vector<1x1x128xf32> to vector<1x128xf32>
    %1188 = tpu.concatenate %1183, %1117 in 1 : vector<8x32xf32>, vector<8x32xf32> -> vector<8x64xf32>
    %cst_450 = arith.constant dense<0.000000e+00> : vector<8x128xf32>
    %1189 = tpu.matmul %1188, %1185, %cst_450 {dimension_numbers = #tpu.dot_dimension_numbers<[1], [0], [0], [1], [0, 0, 1, 1], [], []>} : vector<8x64xf32>, vector<64x128xf32>, vector<8x128xf32> -> vector<8x128xf32>
    %1190 = vector.broadcast %1187 : vector<1x128xf32> to vector<8x128xf32>
    %1191 = arith.addf %1189, %1190 : vector<8x128xf32>
    %1192 = vector.extract_strided_slice %1191 {offsets = [0, 0], sizes = [8, 32], strides = [1, 1]} : vector<8x128xf32> to vector<8x32xf32>
    %1193 = arith.negf %1192 : vector<8x32xf32>
    %1194 = math.exp %1193 : vector<8x32xf32>
    %cst_451 = arith.constant 1.000000e+00 : f32
    %1195 = vector.broadcast %cst_451 : f32 to vector<8x32xf32>
    %1196 = arith.addf %1195, %1194 : vector<8x32xf32>
    %1197 = arith.divf %1195, %1196 : vector<8x32xf32>
    %1198 = vector.extract_strided_slice %1191 {offsets = [0, 32], sizes = [8, 32], strides = [1, 1]} : vector<8x128xf32> to vector<8x32xf32>
    %1199 = arith.negf %1198 : vector<8x32xf32>
    %1200 = math.exp %1199 : vector<8x32xf32>
    %cst_452 = arith.constant 1.000000e+00 : f32
    %1201 = vector.broadcast %cst_452 : f32 to vector<8x32xf32>
    %1202 = arith.addf %1201, %1200 : vector<8x32xf32>
    %1203 = arith.divf %1201, %1202 : vector<8x32xf32>
    %1204 = vector.extract_strided_slice %1191 {offsets = [0, 64], sizes = [8, 32], strides = [1, 1]} : vector<8x128xf32> to vector<8x32xf32>
    %1205 = math.tanh %1204 : vector<8x32xf32>
    %1206 = vector.extract_strided_slice %1191 {offsets = [0, 96], sizes = [8, 32], strides = [1, 1]} : vector<8x128xf32> to vector<8x32xf32>
    %1207 = arith.negf %1206 : vector<8x32xf32>
    %1208 = math.exp %1207 : vector<8x32xf32>
    %cst_453 = arith.constant 1.000000e+00 : f32
    %1209 = vector.broadcast %cst_453 : f32 to vector<8x32xf32>
    %1210 = arith.addf %1209, %1208 : vector<8x32xf32>
    %1211 = arith.divf %1209, %1210 : vector<8x32xf32>
    %1212 = arith.mulf %1203, %1115 : vector<8x32xf32>
    %1213 = arith.mulf %1197, %1205 : vector<8x32xf32>
    %1214 = arith.addf %1212, %1213 : vector<8x32xf32>
    %1215 = math.tanh %1214 : vector<8x32xf32>
    %1216 = arith.mulf %1211, %1215 : vector<8x32xf32>
    %c0_454 = arith.constant 0 : index
    %c0_455 = arith.constant 0 : index
    %1217 = vector.load %arg8[%c0_454, %c0_455] : memref<32x128xf32, #tpu.memory_space<vmem>>, vector<32x128xf32>
    %cst_456 = arith.constant dense<0.000000e+00> : vector<8x128xf32>
    %1218 = tpu.matmul %1216, %1217, %cst_456 {dimension_numbers = #tpu.dot_dimension_numbers<[1], [0], [0], [1], [0, 0, 1, 1], [], []>} : vector<8x32xf32>, vector<32x128xf32>, vector<8x128xf32> -> vector<8x128xf32>
    %c0_457 = arith.constant 0 : index
    %c0_458 = arith.constant 0 : index
    %1219 = vector.load %arg9[%c0_457, %c0_458] : memref<1x128xf32, #tpu.memory_space<vmem>>, vector<1x128xf32>
    %1220 = vector.broadcast %1219 : vector<1x128xf32> to vector<8x128xf32>
    %1221 = arith.addf %1218, %1220 : vector<8x128xf32>
    %c7_459 = arith.constant 7 : index
    %c0_460 = arith.constant 0 : index
    %c0_461 = arith.constant 0 : index
    %1222 = vector.load %arg10[%c7_459, %c0_460, %c0_461] : memref<8x8x128xf32, #tpu.memory_space<vmem>>, vector<1x8x128xf32>
    %1223 = vector.shape_cast %1222 : vector<1x8x128xf32> to vector<8x128xf32>
    %1224 = vector.shape_cast %1221 : vector<8x128xf32> to vector<1x8x128xf32>
    tpu.vector_store %arg10[%c7_459, %c0_460, %c0_461], %1224 {strides = array<i32>} : memref<8x8x128xf32, #tpu.memory_space<vmem>>, vector<1x8x128xf32>,
    return
  }
}

</mosaic_0001>

<llo_original>
// kernel: seq2seq_forward.1
$region0: #{seq2seq_forward.1}
  #allocation0 [shape = 'u32[]', space=smem, size = 0x4, offset = 0x4, fixed_abs, tag = 'smem constant byte address 0x4 - core index']
  #allocation1 [shape = 'u32[72,128]{1,0:T(1,128)}', space=vmem, size = 0x9000, scoped, tag = 'internal scratch']
  %s0 = inlined_call_operand.vmem [shape: f32[8,8,32], index: 0, kind: input, shape index: {}]
  %s1 = inlined_call_operand.vmem [shape: f32[8,8,128], index: 1, kind: input, shape index: {}]
  %s2 = inlined_call_operand.vmem [shape: f32[8,1,1], index: 2, kind: input, shape index: {}]
  %s3 = inlined_call_operand.vmem [shape: f32[2,64,128], index: 3, kind: input, shape index: {}]
  %s4 = inlined_call_operand.vmem [shape: f32[2,1,128], index: 4, kind: input, shape index: {}]
  %s5 = inlined_call_operand.vmem [shape: f32[2,64,128], index: 5, kind: input, shape index: {}]
  %s6 = inlined_call_operand.vmem [shape: f32[2,1,128], index: 6, kind: input, shape index: {}]
  %s7 = inlined_call_operand.vmem [shape: f32[128,32], index: 7, kind: input, shape index: {}]
  %s8 = inlined_call_operand.vmem [shape: f32[32,128], index: 8, kind: input, shape index: {}]
  %s9 = inlined_call_operand.vmem [shape: f32[1,128], index: 9, kind: input, shape index: {}]
  %s10 = inlined_call_operand.vmem [shape: f32[8,8,128], index: 10, kind: output, shape index: {}]
  %s11 = sld [smem:[#allocation0]]
  $region50: #{seq2seq_forward.1} parent=0
    _
  %s13 = ssub.s32 1, %s11
  %s14 = scalar_select 0, %s13, %s11
  // Predicated region
  $region2: #{seq2seq_forward.1} parent=0 // pred_check
    _
  $region3: #{seq2seq_forward.1} parent=0 // pred_check_branch
    %16 = sbr.rel (0) target = $region5
  $region4: #{seq2seq_forward.1} parent=0 // pred_region
    _
  $region5: #{seq2seq_forward.1} parent=0 // pred_fallthru
    _
  // Predicated region
  $region6: #{seq2seq_forward.1} parent=0 // pred_check
    _
  $region7: #{seq2seq_forward.1} parent=0 // pred_check_branch
    %18 = sbr.rel (0) target = $region9
  $region8: #{seq2seq_forward.1} parent=0 // pred_region
    _
  $region9: #{seq2seq_forward.1} parent=0 // pred_fallthru
    _
  // Predicated region
  $region10: #{seq2seq_forward.1} parent=0 // pred_check
    _
  $region11: #{seq2seq_forward.1} parent=0 // pred_check_branch
    %20 = sbr.rel (0) target = $region13
  $region12: #{seq2seq_forward.1} parent=0 // pred_region
    _
  $region13: #{seq2seq_forward.1} parent=0 // pred_fallthru
    _
  // Predicated region
  $region14: #{seq2seq_forward.1} parent=0 // pred_check
    _
  $region15: #{seq2seq_forward.1} parent=0 // pred_check_branch
    %22 = sbr.rel (0) target = $region17
  $region16: #{seq2seq_forward.1} parent=0 // pred_region
    _
  $region17: #{seq2seq_forward.1} parent=0 // pred_fallthru
    _
  // Predicated region
  $region18: #{seq2seq_forward.1} parent=0 // pred_check
    _
  $region19: #{seq2seq_forward.1} parent=0 // pred_check_branch
    %24 = sbr.rel (0) target = $region21
  $region20: #{seq2seq_forward.1} parent=0 // pred_region
    _
  $region21: #{seq2seq_forward.1} parent=0 // pred_fallthru
    _
  // Predicated region
  $region22: #{seq2seq_forward.1} parent=0 // pred_check
    _
  $region23: #{seq2seq_forward.1} parent=0 // pred_check_branch
    %26 = sbr.rel (0) target = $region25
  $region24: #{seq2seq_forward.1} parent=0 // pred_region
    _
  $region25: #{seq2seq_forward.1} parent=0 // pred_fallthru
    _
  // Predicated region
  $region26: #{seq2seq_forward.1} parent=0 // pred_check
    _
  $region27: #{seq2seq_forward.1} parent=0 // pred_check_branch
    %28 = sbr.rel (0) target = $region29
  $region28: #{seq2seq_forward.1} parent=0 // pred_region
    _
  $region29: #{seq2seq_forward.1} parent=0 // pred_fallthru
    _
  // Predicated region
  $region30: #{seq2seq_forward.1} parent=0 // pred_check
    _
  $region31: #{seq2seq_forward.1} parent=0 // pred_check_branch
    %30 = sbr.rel (0) target = $region33
  $region32: #{seq2seq_forward.1} parent=0 // pred_region
    _
  $region33: #{seq2seq_forward.1} parent=0 // pred_fallthru
    _
  // Predicated region
  $region34: #{seq2seq_forward.1} parent=0 // pred_check
    _
  $region35: #{seq2seq_forward.1} parent=0 // pred_check_branch
    %32 = sbr.rel (0) target = $region37
  $region36: #{seq2seq_forward.1} parent=0 // pred_region
    _
  $region37: #{seq2seq_forward.1} parent=0 // pred_fallthru
    _
  // Predicated region
  $region38: #{seq2seq_forward.1} parent=0 // pred_check
    _
  $region39: #{seq2seq_forward.1} parent=0 // pred_check_branch
    %34 = sbr.rel (0) target = $region41
  $region40: #{seq2seq_forward.1} parent=0 // pred_region
    _
  $region41: #{seq2seq_forward.1} parent=0 // pred_fallthru
    _
  %v35 = vld [vmem:[%s0] sm:$0xff]
  %v36 = vld [vmem:[%s3] sm:$0xff]
  %v37 = vld [vmem:[%s3 + $0x8] sm:$0xff]
  %v38 = vld [vmem:[%s3 + $0x10] sm:$0xff]
  %v39 = vld [vmem:[%s3 + $0x18] sm:$0xff]
  %v40 = vld [vmem:[%s3 + $0x20] sm:$0xff]
  %v41 = vld [vmem:[%s3 + $0x28] sm:$0xff]
  %v42 = vld [vmem:[%s3 + $0x30] sm:$0xff]
  %v43 = vld [vmem:[%s3 + $0x38] sm:$0xff]
  %v44 = vld [vmem:[%s4] sm:$0x1]
  %vm45 = vcmask 261120
  %v46 = vsel %vm45, %v35, 0.0
  %v48 = vperm.slane %v44, 0
  %vm50 = vcmask 523264
  %v52 = vsel %vm50, %v46, 0
  %54 = vmatpush.msra.mxu0 0.0
  %55 = vmatpush.msra.mxu0 0.0
  %56 = vmatpush.msra.mxu0 0.0
  %57 = vmatpush.msra.mxu0 0.0
  %58 = vmatpush.msra.mxu0 0.0
  %59 = vmatpush.msra.mxu0 0.0
  %60 = vmatpush.msra.mxu0 0.0
  %61 = vmatpush.msra.mxu0 0.0
  %62 = vmatpush.msra.mxu0 %v43
  %63 = vmatpush.msra.mxu0 %v42
  %64 = vmatpush.msra.mxu0 %v41
  %65 = vmatpush.msra.mxu0 %v40
  %66 = vmatpush.msra.mxu0 %v39
  %67 = vmatpush.msra.mxu0 %v38
  %68 = vmatpush.msra.mxu0 %v37
  %69 = vmatpush.msra.mxu0 %v36
  %70 = vmatmul.f32.gmra.mxu0 %v52
  %v71 = vpop.f32.mrf.mxu0
  %v72 = vadd.f32 %v48, %v71
  %73 = vdwg.mxu0
  %v74 = vxor.u32 %v72, 2147483648
  %v75 = vmul.f32 %v74, 1.442695
  %v76 = vpow.pop %v75
  %v77 = vadd.f32 %v76, 1.0
  %v78 = vrcp.pop %v77
  %v79 = vmul.f32 %v77, %v78
  %v80 = vsub.f32 1.0, %v79
  %v81 = vmul.f32 %v78, %v80
  %v82 = vadd.f32 %v78, %v81
  %vm83 = vweird.f32 %v77
  %vm84 = vweird.f32 %v78
  %vm85 = vmor %vm83, %vm84
  %v86 = vsel %vm85, %v78, %v82
  %v87 = vand.u32 2147483647, %v77
  %vm88 = vcmp.eq.f32.partialorder %v87, 8.507059e+37
  %v89 = vand.u32 %v77, 2147483648
  %v90 = vor.u32 1.1754944e-38, %v89
  %v91 = vsel %vm88, %v90, %v86
  %v92 = vmul.f32 1.0, %v91
  %v93 = vtanh.pop %v72
  %v94 = vmul.f32 %v92, 0.0
  %96 = vrot.lane.b32.xlu0 %v93, 64
  %v97 = vpop.permute.xlu0 %96
  %v99 = vmul.f32 %v92, %v97
  %101 = vrot.lane.b32.xlu0 %v99, 32
  %v102 = vpop.permute.xlu0 %101
  %v104 = vadd.f32 %v94, %v102
  %v105 = vtanh.pop %v104
  %107 = vrot.lane.b32.xlu0 %v105, 64
  %v108 = vpop.permute.xlu0 %107
  %v110 = vmul.f32 %v92, %v108
  %s111 = scalar_lea.vmem %s3, 64
  %v112 = vld [vmem:[%s111] sm:$0xff]
  %v113 = vld [vmem:[%s111 + $0x8] sm:$0xff]
  %v114 = vld [vmem:[%s111 + $0x10] sm:$0xff]
  %v115 = vld [vmem:[%s111 + $0x18] sm:$0xff]
  %v116 = vld [vmem:[%s111 + $0x20] sm:$0xff]
  %v117 = vld [vmem:[%s111 + $0x28] sm:$0xff]
  %v118 = vld [vmem:[%s111 + $0x30] sm:$0xff]
  %v119 = vld [vmem:[%s111 + $0x38] sm:$0xff]
  %s120 = scalar_lea.vmem %s4, 1
  %v121 = vld [vmem:[%s120] sm:$0x1]
  %123 = vrot.lane.b32.xlu0 %v110, 32
  %v124 = vpop.permute.xlu0 %123
  %v126 = vsel %vm45, %v124, 0.0
  %v128 = vperm.slane %v121, 0
  %v131 = vsel %vm50, %v126, 0
  %133 = vmatpush.msra.mxu0 0.0
  %134 = vmatpush.msra.mxu0 0.0
  %135 = vmatpush.msra.mxu0 0.0
  %136 = vmatpush.msra.mxu0 0.0
  %137 = vmatpush.msra.mxu0 0.0
  %138 = vmatpush.msra.mxu0 0.0
  %139 = vmatpush.msra.mxu0 0.0
  %140 = vmatpush.msra.mxu0 0.0
  %141 = vmatpush.msra.mxu0 %v119
  %142 = vmatpush.msra.mxu0 %v118
  %143 = vmatpush.msra.mxu0 %v117
  %144 = vmatpush.msra.mxu0 %v116
  %145 = vmatpush.msra.mxu0 %v115
  %146 = vmatpush.msra.mxu0 %v114
  %147 = vmatpush.msra.mxu0 %v113
  %148 = vmatpush.msra.mxu0 %v112
  %149 = vmatmul.f32.gmra.mxu0 %v131
  %v150 = vpop.f32.mrf.mxu0
  %v151 = vadd.f32 %v128, %v150
  %152 = vdwg.mxu0
  %v153 = vxor.u32 %v151, 2147483648
  %v154 = vmul.f32 %v153, 1.442695
  %v155 = vpow.pop %v154
  %v156 = vadd.f32 %v155, 1.0
  %v157 = vrcp.pop %v156
  %v158 = vmul.f32 %v156, %v157
  %v159 = vsub.f32 1.0, %v158
  %v160 = vmul.f32 %v157, %v159
  %v161 = vadd.f32 %v157, %v160
  %vm162 = vweird.f32 %v156
  %vm163 = vweird.f32 %v157
  %vm164 = vmor %vm162, %vm163
  %v165 = vsel %vm164, %v157, %v161
  %v166 = vand.u32 2147483647, %v156
  %vm167 = vcmp.eq.f32.partialorder %v166, 8.507059e+37
  %v168 = vand.u32 %v156, 2147483648
  %v169 = vor.u32 1.1754944e-38, %v168
  %v170 = vsel %vm167, %v169, %v165
  %v171 = vmul.f32 1.0, %v170
  %v172 = vtanh.pop %v151
  %v173 = vmul.f32 %v171, 0.0
  %175 = vrot.lane.b32.xlu0 %v172, 64
  %v176 = vpop.permute.xlu0 %175
  %v178 = vmul.f32 %v171, %v176
  %180 = vrot.lane.b32.xlu0 %v178, 32
  %v181 = vpop.permute.xlu0 %180
  %v183 = vadd.f32 %v173, %v181
  %v184 = vtanh.pop %v183
  %186 = vrot.lane.b32.xlu0 %v184, 64
  %v187 = vpop.permute.xlu0 %186
  %v189 = vmul.f32 %v171, %v187
  %s190 = scalar_lea.vmem %s0, 8
  %v191 = vld [vmem:[%s190] sm:$0xff]
  %192 = vrot.lane.b32.xlu0 %v110, 64
  %v193 = vpop.permute.xlu0 %192
  %v195 = vsel %vm45, %v191, %v193
  %v197 = vsel %vm50, %v195, 0
  %199 = vmatpush.msra.mxu0 0.0
  %200 = vmatpush.msra.mxu0 0.0
  %201 = vmatpush.msra.mxu0 0.0
  %202 = vmatpush.msra.mxu0 0.0
  %203 = vmatpush.msra.mxu0 0.0
  %204 = vmatpush.msra.mxu0 0.0
  %205 = vmatpush.msra.mxu0 0.0
  %206 = vmatpush.msra.mxu0 0.0
  %207 = vmatpush.msra.mxu0 %v43
  %208 = vmatpush.msra.mxu0 %v42
  %209 = vmatpush.msra.mxu0 %v41
  %210 = vmatpush.msra.mxu0 %v40
  %211 = vmatpush.msra.mxu0 %v39
  %212 = vmatpush.msra.mxu0 %v38
  %213 = vmatpush.msra.mxu0 %v37
  %214 = vmatpush.msra.mxu0 %v36
  %215 = vmatmul.f32.gmra.mxu0 %v197
  %v216 = vpop.f32.mrf.mxu0
  %v217 = vadd.f32 %v48, %v216
  %218 = vdwg.mxu0
  %v219 = vxor.u32 %v217, 2147483648
  %v220 = vmul.f32 %v219, 1.442695
  %v221 = vpow.pop %v220
  %v222 = vadd.f32 %v221, 1.0
  %v223 = vrcp.pop %v222
  %v224 = vmul.f32 %v222, %v223
  %v225 = vsub.f32 1.0, %v224
  %v226 = vmul.f32 %v223, %v225
  %v227 = vadd.f32 %v223, %v226
  %vm228 = vweird.f32 %v222
  %vm229 = vweird.f32 %v223
  %vm230 = vmor %vm228, %vm229
  %v231 = vsel %vm230, %v223, %v227
  %v232 = vand.u32 2147483647, %v222
  %vm233 = vcmp.eq.f32.partialorder %v232, 8.507059e+37
  %v234 = vand.u32 %v222, 2147483648
  %v235 = vor.u32 1.1754944e-38, %v234
  %v236 = vsel %vm233, %v235, %v231
  %v237 = vmul.f32 1.0, %v236
  %v238 = vtanh.pop %v217
  %v239 = vmul.f32 %v237, %v104
  %241 = vrot.lane.b32.xlu0 %v238, 64
  %v242 = vpop.permute.xlu0 %241
  %v244 = vmul.f32 %v237, %v242
  %246 = vrot.lane.b32.xlu0 %v244, 32
  %v247 = vpop.permute.xlu0 %246
  %v249 = vadd.f32 %v239, %v247
  %v250 = vtanh.pop %v249
  %252 = vrot.lane.b32.xlu0 %v250, 64
  %v253 = vpop.permute.xlu0 %252
  %v255 = vmul.f32 %v237, %v253
  %257 = vrot.lane.b32.xlu0 %v255, 32
  %v258 = vpop.permute.xlu0 %257
  %261 = vrot.lane.b32.xlu0 %v189, 64
  %v262 = vpop.permute.xlu0 %261
  %v264 = vsel %vm45, %v258, %v262
  %v266 = vsel %vm50, %v264, 0
  %268 = vmatpush.msra.mxu0 0.0
  %269 = vmatpush.msra.mxu0 0.0
  %270 = vmatpush.msra.mxu0 0.0
  %271 = vmatpush.msra.mxu0 0.0
  %272 = vmatpush.msra.mxu0 0.0
  %273 = vmatpush.msra.mxu0 0.0
  %274 = vmatpush.msra.mxu0 0.0
  %275 = vmatpush.msra.mxu0 0.0
  %276 = vmatpush.msra.mxu0 %v119
  %277 = vmatpush.msra.mxu0 %v118
  %278 = vmatpush.msra.mxu0 %v117
  %279 = vmatpush.msra.mxu0 %v116
  %280 = vmatpush.msra.mxu0 %v115
  %281 = vmatpush.msra.mxu0 %v114
  %282 = vmatpush.msra.mxu0 %v113
  %283 = vmatpush.msra.mxu0 %v112
  %284 = vmatmul.f32.gmra.mxu0 %v266
  %v285 = vpop.f32.mrf.mxu0
  %v286 = vadd.f32 %v128, %v285
  %287 = vdwg.mxu0
  %v288 = vxor.u32 %v286, 2147483648
  %v289 = vmul.f32 %v288, 1.442695
  %v290 = vpow.pop %v289
  %v291 = vadd.f32 %v290, 1.0
  %v292 = vrcp.pop %v291
  %v293 = vmul.f32 %v291, %v292
  %v294 = vsub.f32 1.0, %v293
  %v295 = vmul.f32 %v292, %v294
  %v296 = vadd.f32 %v292, %v295
  %vm297 = vweird.f32 %v291
  %vm298 = vweird.f32 %v292
  %vm299 = vmor %vm297, %vm298
  %v300 = vsel %vm299, %v292, %v296
  %v301 = vand.u32 2147483647, %v291
  %vm302 = vcmp.eq.f32.partialorder %v301, 8.507059e+37
  %v303 = vand.u32 %v291, 2147483648
  %v304 = vor.u32 1.1754944e-38, %v303
  %v305 = vsel %vm302, %v304, %v300
  %v306 = vmul.f32 1.0, %v305
  %v307 = vtanh.pop %v286
  %v308 = vmul.f32 %v306, %v183
  %310 = vrot.lane.b32.xlu0 %v307, 64
  %v311 = vpop.permute.xlu0 %310
  %v313 = vmul.f32 %v306, %v311
  %315 = vrot.lane.b32.xlu0 %v313, 32
  %v316 = vpop.permute.xlu0 %315
  %v318 = vadd.f32 %v308, %v316
  %v319 = vtanh.pop %v318
  %321 = vrot.lane.b32.xlu0 %v319, 64
  %v322 = vpop.permute.xlu0 %321
  %v324 = vmul.f32 %v306, %v322
  %s325 = scalar_lea.vmem %s0, 16
  %v326 = vld [vmem:[%s325] sm:$0xff]
  %327 = vrot.lane.b32.xlu0 %v255, 64
  %v328 = vpop.permute.xlu0 %327
  %v330 = vsel %vm45, %v326, %v328
  %v332 = vsel %vm50, %v330, 0
  %334 = vmatpush.msra.mxu0 0.0
  %335 = vmatpush.msra.mxu0 0.0
  %336 = vmatpush.msra.mxu0 0.0
  %337 = vmatpush.msra.mxu0 0.0
  %338 = vmatpush.msra.mxu0 0.0
  %339 = vmatpush.msra.mxu0 0.0
  %340 = vmatpush.msra.mxu0 0.0
  %341 = vmatpush.msra.mxu0 0.0
  %342 = vmatpush.msra.mxu0 %v43
  %343 = vmatpush.msra.mxu0 %v42
  %344 = vmatpush.msra.mxu0 %v41
  %345 = vmatpush.msra.mxu0 %v40
  %346 = vmatpush.msra.mxu0 %v39
  %347 = vmatpush.msra.mxu0 %v38
  %348 = vmatpush.msra.mxu0 %v37
  %349 = vmatpush.msra.mxu0 %v36
  %350 = vmatmul.f32.gmra.mxu0 %v332
  %v351 = vpop.f32.mrf.mxu0
  %v352 = vadd.f32 %v48, %v351
  %353 = vdwg.mxu0
  %v354 = vxor.u32 %v352, 2147483648
  %v355 = vmul.f32 %v354, 1.442695
  %v356 = vpow.pop %v355
  %v357 = vadd.f32 %v356, 1.0
  %v358 = vrcp.pop %v357
  %v359 = vmul.f32 %v357, %v358
  %v360 = vsub.f32 1.0, %v359
  %v361 = vmul.f32 %v358, %v360
  %v362 = vadd.f32 %v358, %v361
  %vm363 = vweird.f32 %v357
  %vm364 = vweird.f32 %v358
  %vm365 = vmor %vm363, %vm364
  %v366 = vsel %vm365, %v358, %v362
  %v367 = vand.u32 2147483647, %v357
  %vm368 = vcmp.eq.f32.partialorder %v367, 8.507059e+37
  %v369 = vand.u32 %v357, 2147483648
  %v370 = vor.u32 1.1754944e-38, %v369
  %v371 = vsel %vm368, %v370, %v366
  %v372 = vmul.f32 1.0, %v371
  %v373 = vtanh.pop %v352
  %v374 = vmul.f32 %v372, %v249
  %376 = vrot.lane.b32.xlu0 %v373, 64
  %v377 = vpop.permute.xlu0 %376
  %v379 = vmul.f32 %v372, %v377
  %381 = vrot.lane.b32.xlu0 %v379, 32
  %v382 = vpop.permute.xlu0 %381
  %v384 = vadd.f32 %v374, %v382
  %v385 = vtanh.pop %v384
  %387 = vrot.lane.b32.xlu0 %v385, 64
  %v388 = vpop.permute.xlu0 %387
  %v390 = vmul.f32 %v372, %v388
  %392 = vrot.lane.b32.xlu0 %v390, 32
  %v393 = vpop.permute.xlu0 %392
  %396 = vrot.lane.b32.xlu0 %v324, 64
  %v397 = vpop.permute.xlu0 %396
  %v399 = vsel %vm45, %v393, %v397
  %v401 = vsel %vm50, %v399, 0
  %403 = vmatpush.msra.mxu0 0.0
  %404 = vmatpush.msra.mxu0 0.0
  %405 = vmatpush.msra.mxu0 0.0
  %406 = vmatpush.msra.mxu0 0.0
  %407 = vmatpush.msra.mxu0 0.0
  %408 = vmatpush.msra.mxu0 0.0
  %409 = vmatpush.msra.mxu0 0.0
  %410 = vmatpush.msra.mxu0 0.0
  %411 = vmatpush.msra.mxu0 %v119
  %412 = vmatpush.msra.mxu0 %v118
  %413 = vmatpush.msra.mxu0 %v117
  %414 = vmatpush.msra.mxu0 %v116
  %415 = vmatpush.msra.mxu0 %v115
  %416 = vmatpush.msra.mxu0 %v114
  %417 = vmatpush.msra.mxu0 %v113
  %418 = vmatpush.msra.mxu0 %v112
  %419 = vmatmul.f32.gmra.mxu0 %v401
  %v420 = vpop.f32.mrf.mxu0
  %v421 = vadd.f32 %v128, %v420
  %422 = vdwg.mxu0
  %v423 = vxor.u32 %v421, 2147483648
  %v424 = vmul.f32 %v423, 1.442695
  %v425 = vpow.pop %v424
  %v426 = vadd.f32 %v425, 1.0
  %v427 = vrcp.pop %v426
  %v428 = vmul.f32 %v426, %v427
  %v429 = vsub.f32 1.0, %v428
  %v430 = vmul.f32 %v427, %v429
  %v431 = vadd.f32 %v427, %v430
  %vm432 = vweird.f32 %v426
  %vm433 = vweird.f32 %v427
  %vm434 = vmor %vm432, %vm433
  %v435 = vsel %vm434, %v427, %v431
  %v436 = vand.u32 2147483647, %v426
  %vm437 = vcmp.eq.f32.partialorder %v436, 8.507059e+37
  %v438 = vand.u32 %v426, 2147483648
  %v439 = vor.u32 1.1754944e-38, %v438
  %v440 = vsel %vm437, %v439, %v435
  %v441 = vmul.f32 1.0, %v440
  %v442 = vtanh.pop %v421
  %v443 = vmul.f32 %v441, %v318
  %445 = vrot.lane.b32.xlu0 %v442, 64
  %v446 = vpop.permute.xlu0 %445
  %v448 = vmul.f32 %v441, %v446
  %450 = vrot.lane.b32.xlu0 %v448, 32
  %v451 = vpop.permute.xlu0 %450
  %v453 = vadd.f32 %v443, %v451
  %v454 = vtanh.pop %v453
  %456 = vrot.lane.b32.xlu0 %v454, 64
  %v457 = vpop.permute.xlu0 %456
  %v459 = vmul.f32 %v441, %v457
  %s460 = scalar_lea.vmem %s0, 24
  %v461 = vld [vmem:[%s460] sm:$0xff]
  %462 = vrot.lane.b32.xlu0 %v390, 64
  %v463 = vpop.permute.xlu0 %462
  %v465 = vsel %vm45, %v461, %v463
  %v467 = vsel %vm50, %v465, 0
  %469 = vmatpush.msra.mxu0 0.0
  %470 = vmatpush.msra.mxu0 0.0
  %471 = vmatpush.msra.mxu0 0.0
  %472 = vmatpush.msra.mxu0 0.0
  %473 = vmatpush.msra.mxu0 0.0
  %474 = vmatpush.msra.mxu0 0.0
  %475 = vmatpush.msra.mxu0 0.0
  %476 = vmatpush.msra.mxu0 0.0
  %477 = vmatpush.msra.mxu0 %v43
  %478 = vmatpush.msra.mxu0 %v42
  %479 = vmatpush.msra.mxu0 %v41
  %480 = vmatpush.msra.mxu0 %v40
  %481 = vmatpush.msra.mxu0 %v39
  %482 = vmatpush.msra.mxu0 %v38
  %483 = vmatpush.msra.mxu0 %v37
  %484 = vmatpush.msra.mxu0 %v36
  %485 = vmatmul.f32.gmra.mxu0 %v467
  %v486 = vpop.f32.mrf.mxu0
  %v487 = vadd.f32 %v48, %v486
  %488 = vdwg.mxu0
  %v489 = vxor.u32 %v487, 2147483648
  %v490 = vmul.f32 %v489, 1.442695
  %v491 = vpow.pop %v490
  %v492 = vadd.f32 %v491, 1.0
  %v493 = vrcp.pop %v492
  %v494 = vmul.f32 %v492, %v493
  %v495 = vsub.f32 1.0, %v494
  %v496 = vmul.f32 %v493, %v495
  %v497 = vadd.f32 %v493, %v496
  %vm498 = vweird.f32 %v492
  %vm499 = vweird.f32 %v493
  %vm500 = vmor %vm498, %vm499
  %v501 = vsel %vm500, %v493, %v497
  %v502 = vand.u32 2147483647, %v492
  %vm503 = vcmp.eq.f32.partialorder %v502, 8.507059e+37
  %v504 = vand.u32 %v492, 2147483648
  %v505 = vor.u32 1.1754944e-38, %v504
  %v506 = vsel %vm503, %v505, %v501
  %v507 = vmul.f32 1.0, %v506
  %v508 = vtanh.pop %v487
  %v509 = vmul.f32 %v507, %v384
  %511 = vrot.lane.b32.xlu0 %v508, 64
  %v512 = vpop.permute.xlu0 %511
  %v514 = vmul.f32 %v507, %v512
  %516 = vrot.lane.b32.xlu0 %v514, 32
  %v517 = vpop.permute.xlu0 %516
  %v519 = vadd.f32 %v509, %v517
  %v520 = vtanh.pop %v519
  %522 = vrot.lane.b32.xlu0 %v520, 64
  %v523 = vpop.permute.xlu0 %522
  %v525 = vmul.f32 %v507, %v523
  %527 = vrot.lane.b32.xlu0 %v525, 32
  %v528 = vpop.permute.xlu0 %527
  %531 = vrot.lane.b32.xlu0 %v459, 64
  %v532 = vpop.permute.xlu0 %531
  %v534 = vsel %vm45, %v528, %v532
  %v536 = vsel %vm50, %v534, 0
  %538 = vmatpush.msra.mxu0 0.0
  %539 = vmatpush.msra.mxu0 0.0
  %540 = vmatpush.msra.mxu0 0.0
  %541 = vmatpush.msra.mxu0 0.0
  %542 = vmatpush.msra.mxu0 0.0
  %543 = vmatpush.msra.mxu0 0.0
  %544 = vmatpush.msra.mxu0 0.0
  %545 = vmatpush.msra.mxu0 0.0
  %546 = vmatpush.msra.mxu0 %v119
  %547 = vmatpush.msra.mxu0 %v118
  %548 = vmatpush.msra.mxu0 %v117
  %549 = vmatpush.msra.mxu0 %v116
  %550 = vmatpush.msra.mxu0 %v115
  %551 = vmatpush.msra.mxu0 %v114
  %552 = vmatpush.msra.mxu0 %v113
  %553 = vmatpush.msra.mxu0 %v112
  %554 = vmatmul.f32.gmra.mxu0 %v536
  %v555 = vpop.f32.mrf.mxu0
  %v556 = vadd.f32 %v128, %v555
  %557 = vdwg.mxu0
  %v558 = vxor.u32 %v556, 2147483648
  %v559 = vmul.f32 %v558, 1.442695
  %v560 = vpow.pop %v559
  %v561 = vadd.f32 %v560, 1.0
  %v562 = vrcp.pop %v561
  %v563 = vmul.f32 %v561, %v562
  %v564 = vsub.f32 1.0, %v563
  %v565 = vmul.f32 %v562, %v564
  %v566 = vadd.f32 %v562, %v565
  %vm567 = vweird.f32 %v561
  %vm568 = vweird.f32 %v562
  %vm569 = vmor %vm567, %vm568
  %v570 = vsel %vm569, %v562, %v566
  %v571 = vand.u32 2147483647, %v561
  %vm572 = vcmp.eq.f32.partialorder %v571, 8.507059e+37
  %v573 = vand.u32 %v561, 2147483648
  %v574 = vor.u32 1.1754944e-38, %v573
  %v575 = vsel %vm572, %v574, %v570
  %v576 = vmul.f32 1.0, %v575
  %v577 = vtanh.pop %v556
  %v578 = vmul.f32 %v576, %v453
  %580 = vrot.lane.b32.xlu0 %v577, 64
  %v581 = vpop.permute.xlu0 %580
  %v583 = vmul.f32 %v576, %v581
  %585 = vrot.lane.b32.xlu0 %v583, 32
  %v586 = vpop.permute.xlu0 %585
  %v588 = vadd.f32 %v578, %v586
  %v589 = vtanh.pop %v588
  %591 = vrot.lane.b32.xlu0 %v589, 64
  %v592 = vpop.permute.xlu0 %591
  %v594 = vmul.f32 %v576, %v592
  %s595 = scalar_lea.vmem %s0, 32
  %v596 = vld [vmem:[%s595] sm:$0xff]
  %597 = vrot.lane.b32.xlu0 %v525, 64
  %v598 = vpop.permute.xlu0 %597
  %v600 = vsel %vm45, %v596, %v598
  %v602 = vsel %vm50, %v600, 0
  %604 = vmatpush.msra.mxu0 0.0
  %605 = vmatpush.msra.mxu0 0.0
  %606 = vmatpush.msra.mxu0 0.0
  %607 = vmatpush.msra.mxu0 0.0
  %608 = vmatpush.msra.mxu0 0.0
  %609 = vmatpush.msra.mxu0 0.0
  %610 = vmatpush.msra.mxu0 0.0
  %611 = vmatpush.msra.mxu0 0.0
  %612 = vmatpush.msra.mxu0 %v43
  %613 = vmatpush.msra.mxu0 %v42
  %614 = vmatpush.msra.mxu0 %v41
  %615 = vmatpush.msra.mxu0 %v40
  %616 = vmatpush.msra.mxu0 %v39
  %617 = vmatpush.msra.mxu0 %v38
  %618 = vmatpush.msra.mxu0 %v37
  %619 = vmatpush.msra.mxu0 %v36
  %620 = vmatmul.f32.gmra.mxu0 %v602
  %v621 = vpop.f32.mrf.mxu0
  %v622 = vadd.f32 %v48, %v621
  %623 = vdwg.mxu0
  %v624 = vxor.u32 %v622, 2147483648
  %v625 = vmul.f32 %v624, 1.442695
  %v626 = vpow.pop %v625
  %v627 = vadd.f32 %v626, 1.0
  %v628 = vrcp.pop %v627
  %v629 = vmul.f32 %v627, %v628
  %v630 = vsub.f32 1.0, %v629
  %v631 = vmul.f32 %v628, %v630
  %v632 = vadd.f32 %v628, %v631
  %vm633 = vweird.f32 %v627
  %vm634 = vweird.f32 %v628
  %vm635 = vmor %vm633, %vm634
  %v636 = vsel %vm635, %v628, %v632
  %v637 = vand.u32 2147483647, %v627
  %vm638 = vcmp.eq.f32.partialorder %v637, 8.507059e+37
  %v639 = vand.u32 %v627, 2147483648
  %v640 = vor.u32 1.1754944e-38, %v639
  %v641 = vsel %vm638, %v640, %v636
  %v642 = vmul.f32 1.0, %v641
  %v643 = vtanh.pop %v622
  %v644 = vmul.f32 %v642, %v519
  %646 = vrot.lane.b32.xlu0 %v643, 64
  %v647 = vpop.permute.xlu0 %646
  %v649 = vmul.f32 %v642, %v647
  %651 = vrot.lane.b32.xlu0 %v649, 32
  %v652 = vpop.permute.xlu0 %651
  %v654 = vadd.f32 %v644, %v652
  %v655 = vtanh.pop %v654
  %657 = vrot.lane.b32.xlu0 %v655, 64
  %v658 = vpop.permute.xlu0 %657
  %v660 = vmul.f32 %v642, %v658
  %662 = vrot.lane.b32.xlu0 %v660, 32
  %v663 = vpop.permute.xlu0 %662
  %666 = vrot.lane.b32.xlu0 %v594, 64
  %v667 = vpop.permute.xlu0 %666
  %v669 = vsel %vm45, %v663, %v667
  %v671 = vsel %vm50, %v669, 0
  %673 = vmatpush.msra.mxu0 0.0
  %674 = vmatpush.msra.mxu0 0.0
  %675 = vmatpush.msra.mxu0 0.0
  %676 = vmatpush.msra.mxu0 0.0
  %677 = vmatpush.msra.mxu0 0.0
  %678 = vmatpush.msra.mxu0 0.0
  %679 = vmatpush.msra.mxu0 0.0
  %680 = vmatpush.msra.mxu0 0.0
  %681 = vmatpush.msra.mxu0 %v119
  %682 = vmatpush.msra.mxu0 %v118
  %683 = vmatpush.msra.mxu0 %v117
  %684 = vmatpush.msra.mxu0 %v116
  %685 = vmatpush.msra.mxu0 %v115
  %686 = vmatpush.msra.mxu0 %v114
  %687 = vmatpush.msra.mxu0 %v113
  %688 = vmatpush.msra.mxu0 %v112
  %689 = vmatmul.f32.gmra.mxu0 %v671
  %v690 = vpop.f32.mrf.mxu0
  %v691 = vadd.f32 %v128, %v690
  %692 = vdwg.mxu0
  %v693 = vxor.u32 %v691, 2147483648
  %v694 = vmul.f32 %v693, 1.442695
  %v695 = vpow.pop %v694
  %v696 = vadd.f32 %v695, 1.0
  %v697 = vrcp.pop %v696
  %v698 = vmul.f32 %v696, %v697
  %v699 = vsub.f32 1.0, %v698
  %v700 = vmul.f32 %v697, %v699
  %v701 = vadd.f32 %v697, %v700
  %vm702 = vweird.f32 %v696
  %vm703 = vweird.f32 %v697
  %vm704 = vmor %vm702, %vm703
  %v705 = vsel %vm704, %v697, %v701
  %v706 = vand.u32 2147483647, %v696
  %vm707 = vcmp.eq.f32.partialorder %v706, 8.507059e+37
  %v708 = vand.u32 %v696, 2147483648
  %v709 = vor.u32 1.1754944e-38, %v708
  %v710 = vsel %vm707, %v709, %v705
  %v711 = vmul.f32 1.0, %v710
  %v712 = vtanh.pop %v691
  %v713 = vmul.f32 %v711, %v588
  %715 = vrot.lane.b32.xlu0 %v712, 64
  %v716 = vpop.permute.xlu0 %715
  %v718 = vmul.f32 %v711, %v716
  %720 = vrot.lane.b32.xlu0 %v718, 32
  %v721 = vpop.permute.xlu0 %720
  %v723 = vadd.f32 %v713, %v721
  %v724 = vtanh.pop %v723
  %726 = vrot.lane.b32.xlu0 %v724, 64
  %v727 = vpop.permute.xlu0 %726
  %v729 = vmul.f32 %v711, %v727
  %s730 = scalar_lea.vmem %s0, 40
  %v731 = vld [vmem:[%s730] sm:$0xff]
  %732 = vrot.lane.b32.xlu0 %v660, 64
  %v733 = vpop.permute.xlu0 %732
  %v735 = vsel %vm45, %v731, %v733
  %v737 = vsel %vm50, %v735, 0
  %739 = vmatpush.msra.mxu0 0.0
  %740 = vmatpush.msra.mxu0 0.0
  %741 = vmatpush.msra.mxu0 0.0
  %742 = vmatpush.msra.mxu0 0.0
  %743 = vmatpush.msra.mxu0 0.0
  %744 = vmatpush.msra.mxu0 0.0
  %745 = vmatpush.msra.mxu0 0.0
  %746 = vmatpush.msra.mxu0 0.0
  %747 = vmatpush.msra.mxu0 %v43
  %748 = vmatpush.msra.mxu0 %v42
  %749 = vmatpush.msra.mxu0 %v41
  %750 = vmatpush.msra.mxu0 %v40
  %751 = vmatpush.msra.mxu0 %v39
  %752 = vmatpush.msra.mxu0 %v38
  %753 = vmatpush.msra.mxu0 %v37
  %754 = vmatpush.msra.mxu0 %v36
  %755 = vmatmul.f32.gmra.mxu0 %v737
  %v756 = vpop.f32.mrf.mxu0
  %v757 = vadd.f32 %v48, %v756
  %758 = vdwg.mxu0
  %v759 = vxor.u32 %v757, 2147483648
  %v760 = vmul.f32 %v759, 1.442695
  %v761 = vpow.pop %v760
  %v762 = vadd.f32 %v761, 1.0
  %v763 = vrcp.pop %v762
  %v764 = vmul.f32 %v762, %v763
  %v765 = vsub.f32 1.0, %v764
  %v766 = vmul.f32 %v763, %v765
  %v767 = vadd.f32 %v763, %v766
  %vm768 = vweird.f32 %v762
  %vm769 = vweird.f32 %v763
  %vm770 = vmor %vm768, %vm769
  %v771 = vsel %vm770, %v763, %v767
  %v772 = vand.u32 2147483647, %v762
  %vm773 = vcmp.eq.f32.partialorder %v772, 8.507059e+37
  %v774 = vand.u32 %v762, 2147483648
  %v775 = vor.u32 1.1754944e-38, %v774
  %v776 = vsel %vm773, %v775, %v771
  %v777 = vmul.f32 1.0, %v776
  %v778 = vtanh.pop %v757
  %v779 = vmul.f32 %v777, %v654
  %781 = vrot.lane.b32.xlu0 %v778, 64
  %v782 = vpop.permute.xlu0 %781
  %v784 = vmul.f32 %v777, %v782
  %786 = vrot.lane.b32.xlu0 %v784, 32
  %v787 = vpop.permute.xlu0 %786
  %v789 = vadd.f32 %v779, %v787
  %v790 = vtanh.pop %v789
  %792 = vrot.lane.b32.xlu0 %v790, 64
  %v793 = vpop.permute.xlu0 %792
  %v795 = vmul.f32 %v777, %v793
  %797 = vrot.lane.b32.xlu0 %v795, 32
  %v798 = vpop.permute.xlu0 %797
  %801 = vrot.lane.b32.xlu0 %v729, 64
  %v802 = vpop.permute.xlu0 %801
  %v804 = vsel %vm45, %v798, %v802
  %v806 = vsel %vm50, %v804, 0
  %808 = vmatpush.msra.mxu0 0.0
  %809 = vmatpush.msra.mxu0 0.0
  %810 = vmatpush.msra.mxu0 0.0
  %811 = vmatpush.msra.mxu0 0.0
  %812 = vmatpush.msra.mxu0 0.0
  %813 = vmatpush.msra.mxu0 0.0
  %814 = vmatpush.msra.mxu0 0.0
  %815 = vmatpush.msra.mxu0 0.0
  %816 = vmatpush.msra.mxu0 %v119
  %817 = vmatpush.msra.mxu0 %v118
  %818 = vmatpush.msra.mxu0 %v117
  %819 = vmatpush.msra.mxu0 %v116
  %820 = vmatpush.msra.mxu0 %v115
  %821 = vmatpush.msra.mxu0 %v114
  %822 = vmatpush.msra.mxu0 %v113
  %823 = vmatpush.msra.mxu0 %v112
  %824 = vmatmul.f32.gmra.mxu0 %v806
  %v825 = vpop.f32.mrf.mxu0
  %v826 = vadd.f32 %v128, %v825
  %827 = vdwg.mxu0
  %v828 = vxor.u32 %v826, 2147483648
  %v829 = vmul.f32 %v828, 1.442695
  %v830 = vpow.pop %v829
  %v831 = vadd.f32 %v830, 1.0
  %v832 = vrcp.pop %v831
  %v833 = vmul.f32 %v831, %v832
  %v834 = vsub.f32 1.0, %v833
  %v835 = vmul.f32 %v832, %v834
  %v836 = vadd.f32 %v832, %v835
  %vm837 = vweird.f32 %v831
  %vm838 = vweird.f32 %v832
  %vm839 = vmor %vm837, %vm838
  %v840 = vsel %vm839, %v832, %v836
  %v841 = vand.u32 2147483647, %v831
  %vm842 = vcmp.eq.f32.partialorder %v841, 8.507059e+37
  %v843 = vand.u32 %v831, 2147483648
  %v844 = vor.u32 1.1754944e-38, %v843
  %v845 = vsel %vm842, %v844, %v840
  %v846 = vmul.f32 1.0, %v845
  %v847 = vtanh.pop %v826
  %v848 = vmul.f32 %v846, %v723
  %850 = vrot.lane.b32.xlu0 %v847, 64
  %v851 = vpop.permute.xlu0 %850
  %v853 = vmul.f32 %v846, %v851
  %855 = vrot.lane.b32.xlu0 %v853, 32
  %v856 = vpop.permute.xlu0 %855
  %v858 = vadd.f32 %v848, %v856
  %v859 = vtanh.pop %v858
  %861 = vrot.lane.b32.xlu0 %v859, 64
  %v862 = vpop.permute.xlu0 %861
  %v864 = vmul.f32 %v846, %v862
  %s865 = scalar_lea.vmem %s0, 48
  %v866 = vld [vmem:[%s865] sm:$0xff]
  %867 = vrot.lane.b32.xlu0 %v795, 64
  %v868 = vpop.permute.xlu0 %867
  %v870 = vsel %vm45, %v866, %v868
  %v872 = vsel %vm50, %v870, 0
  %874 = vmatpush.msra.mxu0 0.0
  %875 = vmatpush.msra.mxu0 0.0
  %876 = vmatpush.msra.mxu0 0.0
  %877 = vmatpush.msra.mxu0 0.0
  %878 = vmatpush.msra.mxu0 0.0
  %879 = vmatpush.msra.mxu0 0.0
  %880 = vmatpush.msra.mxu0 0.0
  %881 = vmatpush.msra.mxu0 0.0
  %882 = vmatpush.msra.mxu0 %v43
  %883 = vmatpush.msra.mxu0 %v42
  %884 = vmatpush.msra.mxu0 %v41
  %885 = vmatpush.msra.mxu0 %v40
  %886 = vmatpush.msra.mxu0 %v39
  %887 = vmatpush.msra.mxu0 %v38
  %888 = vmatpush.msra.mxu0 %v37
  %889 = vmatpush.msra.mxu0 %v36
  %890 = vmatmul.f32.gmra.mxu0 %v872
  %v891 = vpop.f32.mrf.mxu0
  %v892 = vadd.f32 %v48, %v891
  %893 = vdwg.mxu0
  %v894 = vxor.u32 %v892, 2147483648
  %v895 = vmul.f32 %v894, 1.442695
  %v896 = vpow.pop %v895
  %v897 = vadd.f32 %v896, 1.0
  %v898 = vrcp.pop %v897
  %v899 = vmul.f32 %v897, %v898
  %v900 = vsub.f32 1.0, %v899
  %v901 = vmul.f32 %v898, %v900
  %v902 = vadd.f32 %v898, %v901
  %vm903 = vweird.f32 %v897
  %vm904 = vweird.f32 %v898
  %vm905 = vmor %vm903, %vm904
  %v906 = vsel %vm905, %v898, %v902
  %v907 = vand.u32 2147483647, %v897
  %vm908 = vcmp.eq.f32.partialorder %v907, 8.507059e+37
  %v909 = vand.u32 %v897, 2147483648
  %v910 = vor.u32 1.1754944e-38, %v909
  %v911 = vsel %vm908, %v910, %v906
  %v912 = vmul.f32 1.0, %v911
  %v913 = vtanh.pop %v892
  %v914 = vmul.f32 %v912, %v789
  %916 = vrot.lane.b32.xlu0 %v913, 64
  %v917 = vpop.permute.xlu0 %916
  %v919 = vmul.f32 %v912, %v917
  %921 = vrot.lane.b32.xlu0 %v919, 32
  %v922 = vpop.permute.xlu0 %921
  %v924 = vadd.f32 %v914, %v922
  %v925 = vtanh.pop %v924
  %927 = vrot.lane.b32.xlu0 %v925, 64
  %v928 = vpop.permute.xlu0 %927
  %v930 = vmul.f32 %v912, %v928
  %932 = vrot.lane.b32.xlu0 %v930, 32
  %v933 = vpop.permute.xlu0 %932
  %936 = vrot.lane.b32.xlu0 %v864, 64
  %v937 = vpop.permute.xlu0 %936
  %v939 = vsel %vm45, %v933, %v937
  %v941 = vsel %vm50, %v939, 0
  %943 = vmatpush.msra.mxu0 0.0
  %944 = vmatpush.msra.mxu0 0.0
  %945 = vmatpush.msra.mxu0 0.0
  %946 = vmatpush.msra.mxu0 0.0
  %947 = vmatpush.msra.mxu0 0.0
  %948 = vmatpush.msra.mxu0 0.0
  %949 = vmatpush.msra.mxu0 0.0
  %950 = vmatpush.msra.mxu0 0.0
  %951 = vmatpush.msra.mxu0 %v119
  %952 = vmatpush.msra.mxu0 %v118
  %953 = vmatpush.msra.mxu0 %v117
  %954 = vmatpush.msra.mxu0 %v116
  %955 = vmatpush.msra.mxu0 %v115
  %956 = vmatpush.msra.mxu0 %v114
  %957 = vmatpush.msra.mxu0 %v113
  %958 = vmatpush.msra.mxu0 %v112
  %959 = vmatmul.f32.gmra.mxu0 %v941
  %v960 = vpop.f32.mrf.mxu0
  %v961 = vadd.f32 %v128, %v960
  %962 = vdwg.mxu0
  %v963 = vxor.u32 %v961, 2147483648
  %v964 = vmul.f32 %v963, 1.442695
  %v965 = vpow.pop %v964
  %v966 = vadd.f32 %v965, 1.0
  %v967 = vrcp.pop %v966
  %v968 = vmul.f32 %v966, %v967
  %v969 = vsub.f32 1.0, %v968
  %v970 = vmul.f32 %v967, %v969
  %v971 = vadd.f32 %v967, %v970
  %vm972 = vweird.f32 %v966
  %vm973 = vweird.f32 %v967
  %vm974 = vmor %vm972, %vm973
  %v975 = vsel %vm974, %v967, %v971
  %v976 = vand.u32 2147483647, %v966
  %vm977 = vcmp.eq.f32.partialorder %v976, 8.507059e+37
  %v978 = vand.u32 %v966, 2147483648
  %v979 = vor.u32 1.1754944e-38, %v978
  %v980 = vsel %vm977, %v979, %v975
  %v981 = vmul.f32 1.0, %v980
  %v982 = vtanh.pop %v961
  %v983 = vmul.f32 %v981, %v858
  %985 = vrot.lane.b32.xlu0 %v982, 64
  %v986 = vpop.permute.xlu0 %985
  %v988 = vmul.f32 %v981, %v986
  %990 = vrot.lane.b32.xlu0 %v988, 32
  %v991 = vpop.permute.xlu0 %990
  %v993 = vadd.f32 %v983, %v991
  %v994 = vtanh.pop %v993
  %996 = vrot.lane.b32.xlu0 %v994, 64
  %v997 = vpop.permute.xlu0 %996
  %v999 = vmul.f32 %v981, %v997
  %s1000 = scalar_lea.vmem %s0, 56
  %v1001 = vld [vmem:[%s1000] sm:$0xff]
  %1002 = vrot.lane.b32.xlu0 %v930, 64
  %v1003 = vpop.permute.xlu0 %1002
  %v1005 = vsel %vm45, %v1001, %v1003
  %v1007 = vsel %vm50, %v1005, 0
  %1009 = vmatpush.msra.mxu0 0.0
  %1010 = vmatpush.msra.mxu0 0.0
  %1011 = vmatpush.msra.mxu0 0.0
  %1012 = vmatpush.msra.mxu0 0.0
  %1013 = vmatpush.msra.mxu0 0.0
  %1014 = vmatpush.msra.mxu0 0.0
  %1015 = vmatpush.msra.mxu0 0.0
  %1016 = vmatpush.msra.mxu0 0.0
  %1017 = vmatpush.msra.mxu0 %v43
  %1018 = vmatpush.msra.mxu0 %v42
  %1019 = vmatpush.msra.mxu0 %v41
  %1020 = vmatpush.msra.mxu0 %v40
  %1021 = vmatpush.msra.mxu0 %v39
  %1022 = vmatpush.msra.mxu0 %v38
  %1023 = vmatpush.msra.mxu0 %v37
  %1024 = vmatpush.msra.mxu0 %v36
  %1025 = vmatmul.f32.gmra.mxu0 %v1007
  %v1026 = vpop.f32.mrf.mxu0
  %v1027 = vadd.f32 %v48, %v1026
  %1028 = vdwg.mxu0
  %v1029 = vxor.u32 %v1027, 2147483648
  %v1030 = vmul.f32 %v1029, 1.442695
  %v1031 = vpow.pop %v1030
  %v1032 = vadd.f32 %v1031, 1.0
  %v1033 = vrcp.pop %v1032
  %v1034 = vmul.f32 %v1032, %v1033
  %v1035 = vsub.f32 1.0, %v1034
  %v1036 = vmul.f32 %v1033, %v1035
  %v1037 = vadd.f32 %v1033, %v1036
  %vm1038 = vweird.f32 %v1032
  %vm1039 = vweird.f32 %v1033
  %vm1040 = vmor %vm1038, %vm1039
  %v1041 = vsel %vm1040, %v1033, %v1037
  %v1042 = vand.u32 2147483647, %v1032
  %vm1043 = vcmp.eq.f32.partialorder %v1042, 8.507059e+37
  %v1044 = vand.u32 %v1032, 2147483648
  %v1045 = vor.u32 1.1754944e-38, %v1044
  %v1046 = vsel %vm1043, %v1045, %v1041
  %v1047 = vmul.f32 1.0, %v1046
  %v1048 = vtanh.pop %v1027
  %v1049 = vmul.f32 %v1047, %v924
  %1051 = vrot.lane.b32.xlu0 %v1048, 64
  %v1052 = vpop.permute.xlu0 %1051
  %v1054 = vmul.f32 %v1047, %v1052
  %1056 = vrot.lane.b32.xlu0 %v1054, 32
  %v1057 = vpop.permute.xlu0 %1056
  %v1059 = vadd.f32 %v1049, %v1057
  %v1060 = vtanh.pop %v1059
  %1062 = vrot.lane.b32.xlu0 %v1060, 64
  %v1063 = vpop.permute.xlu0 %1062
  %v1065 = vmul.f32 %v1047, %v1063
  %1067 = vrot.lane.b32.xlu0 %v1065, 32
  %v1068 = vpop.permute.xlu0 %1067
  %1071 = vrot.lane.b32.xlu0 %v999, 64
  %v1072 = vpop.permute.xlu0 %1071
  %v1074 = vsel %vm45, %v1068, %v1072
  %v1076 = vsel %vm50, %v1074, 0
  %1078 = vmatpush.msra.mxu0 0.0
  %1079 = vmatpush.msra.mxu0 0.0
  %1080 = vmatpush.msra.mxu0 0.0
  %1081 = vmatpush.msra.mxu0 0.0
  %1082 = vmatpush.msra.mxu0 0.0
  %1083 = vmatpush.msra.mxu0 0.0
  %1084 = vmatpush.msra.mxu0 0.0
  %1085 = vmatpush.msra.mxu0 0.0
  %1086 = vmatpush.msra.mxu0 %v119
  %1087 = vmatpush.msra.mxu0 %v118
  %1088 = vmatpush.msra.mxu0 %v117
  %1089 = vmatpush.msra.mxu0 %v116
  %1090 = vmatpush.msra.mxu0 %v115
  %1091 = vmatpush.msra.mxu0 %v114
  %1092 = vmatpush.msra.mxu0 %v113
  %1093 = vmatpush.msra.mxu0 %v112
  %1094 = vmatmul.f32.gmra.mxu0 %v1076
  %v1095 = vpop.f32.mrf.mxu0
  %v1096 = vadd.f32 %v128, %v1095
  %1097 = vdwg.mxu0
  %v1098 = vxor.u32 %v1096, 2147483648
  %v1099 = vmul.f32 %v1098, 1.442695
  %v1100 = vpow.pop %v1099
  %v1101 = vadd.f32 %v1100, 1.0
  %v1102 = vrcp.pop %v1101
  %v1103 = vmul.f32 %v1101, %v1102
  %v1104 = vsub.f32 1.0, %v1103
  %v1105 = vmul.f32 %v1102, %v1104
  %v1106 = vadd.f32 %v1102, %v1105
  %vm1107 = vweird.f32 %v1101
  %vm1108 = vweird.f32 %v1102
  %vm1109 = vmor %vm1107, %vm1108
  %v1110 = vsel %vm1109, %v1102, %v1106
  %v1111 = vand.u32 2147483647, %v1101
  %vm1112 = vcmp.eq.f32.partialorder %v1111, 8.507059e+37
  %v1113 = vand.u32 %v1101, 2147483648
  %v1114 = vor.u32 1.1754944e-38, %v1113
  %v1115 = vsel %vm1112, %v1114, %v1110
  %v1116 = vmul.f32 1.0, %v1115
  %v1117 = vtanh.pop %v1096
  %v1118 = vmul.f32 %v1116, %v993
  %1120 = vrot.lane.b32.xlu0 %v1117, 64
  %v1121 = vpop.permute.xlu0 %1120
  %v1123 = vmul.f32 %v1116, %v1121
  %1125 = vrot.lane.b32.xlu0 %v1123, 32
  %v1126 = vpop.permute.xlu0 %1125
  %v1128 = vadd.f32 %v1118, %v1126
  %v1129 = vtanh.pop %v1128
  %1131 = vrot.lane.b32.xlu0 %v1129, 64
  %v1132 = vpop.permute.xlu0 %1131
  %v1134 = vmul.f32 %v1116, %v1132
  %1135 = vst [vmem:[%s10] sm:$0xff] 0.0
  %v1136 = vlaneseq
  %v1137 = vand.u32 %v1136, 127
  %v1138 = vld [vmem:[%s1] sm:$0xff]
  %v1139 = vld [vmem:[%s7] sm:$0xff]
  %v1140 = vld [vmem:[%s7 + $0x8] sm:$0xff]
  %v1141 = vld [vmem:[%s7 + $0x10] sm:$0xff]
  %v1142 = vld [vmem:[%s7 + $0x18] sm:$0xff]
  %v1143 = vld [vmem:[%s7 + $0x20] sm:$0xff]
  %v1144 = vld [vmem:[%s7 + $0x28] sm:$0xff]
  %v1145 = vld [vmem:[%s7 + $0x30] sm:$0xff]
  %v1146 = vld [vmem:[%s7 + $0x38] sm:$0xff]
  %v1147 = vld [vmem:[%s7 + $0x40] sm:$0xff]
  %v1148 = vld [vmem:[%s7 + $0x48] sm:$0xff]
  %v1149 = vld [vmem:[%s7 + $0x50] sm:$0xff]
  %v1150 = vld [vmem:[%s7 + $0x58] sm:$0xff]
  %v1151 = vld [vmem:[%s7 + $0x60] sm:$0xff]
  %v1152 = vld [vmem:[%s7 + $0x68] sm:$0xff]
  %v1153 = vld [vmem:[%s7 + $0x70] sm:$0xff]
  %v1154 = vld [vmem:[%s7 + $0x78] sm:$0xff]
  %1155 = vmatpush.msra.mxu0 %v1154
  %1156 = vmatpush.msra.mxu0 %v1153
  %1157 = vmatpush.msra.mxu0 %v1152
  %1158 = vmatpush.msra.mxu0 %v1151
  %1159 = vmatpush.msra.mxu0 %v1150
  %1160 = vmatpush.msra.mxu0 %v1149
  %1161 = vmatpush.msra.mxu0 %v1148
  %1162 = vmatpush.msra.mxu0 %v1147
  %1163 = vmatpush.msra.mxu0 %v1146
  %1164 = vmatpush.msra.mxu0 %v1145
  %1165 = vmatpush.msra.mxu0 %v1144
  %1166 = vmatpush.msra.mxu0 %v1143
  %1167 = vmatpush.msra.mxu0 %v1142
  %1168 = vmatpush.msra.mxu0 %v1141
  %1169 = vmatpush.msra.mxu0 %v1140
  %1170 = vmatpush.msra.mxu0 %v1139
  %1171 = vmatmul.f32.gmra.mxu0 %v1138
  %v1172 = vpop.f32.mrf.mxu0
  %v1173 = vadd.f32 0.0, %v1172
  %1174 = vdwg.mxu0
  %v1175 = vld [vmem:[%s5] sm:$0xff]
  %v1176 = vld [vmem:[%s5 + $0x8] sm:$0xff]
  %v1177 = vld [vmem:[%s5 + $0x10] sm:$0xff]
  %v1178 = vld [vmem:[%s5 + $0x18] sm:$0xff]
  %v1179 = vld [vmem:[%s5 + $0x20] sm:$0xff]
  %v1180 = vld [vmem:[%s5 + $0x28] sm:$0xff]
  %v1181 = vld [vmem:[%s5 + $0x30] sm:$0xff]
  %v1182 = vld [vmem:[%s5 + $0x38] sm:$0xff]
  %v1183 = vld [vmem:[%s6] sm:$0x1]
  %1184 = vrot.lane.b32.xlu0 %v1065, 64
  %v1185 = vpop.permute.xlu0 %1184
  %v1187 = vsel %vm45, %v1173, %v1185
  %v1189 = vperm.slane %v1183, 0
  %v1192 = vsel %vm50, %v1187, 0
  %1194 = vmatpush.msra.mxu0 0.0
  %1195 = vmatpush.msra.mxu0 0.0
  %1196 = vmatpush.msra.mxu0 0.0
  %1197 = vmatpush.msra.mxu0 0.0
  %1198 = vmatpush.msra.mxu0 0.0
  %1199 = vmatpush.msra.mxu0 0.0
  %1200 = vmatpush.msra.mxu0 0.0
  %1201 = vmatpush.msra.mxu0 0.0
  %1202 = vmatpush.msra.mxu0 %v1182
  %1203 = vmatpush.msra.mxu0 %v1181
  %1204 = vmatpush.msra.mxu0 %v1180
  %1205 = vmatpush.msra.mxu0 %v1179
  %1206 = vmatpush.msra.mxu0 %v1178
  %1207 = vmatpush.msra.mxu0 %v1177
  %1208 = vmatpush.msra.mxu0 %v1176
  %1209 = vmatpush.msra.mxu0 %v1175
  %1210 = vmatmul.f32.gmra.mxu0 %v1192
  %v1211 = vpop.f32.mrf.mxu0
  %v1212 = vadd.f32 %v1189, %v1211
  %1213 = vdwg.mxu0
  %v1214 = vxor.u32 %v1212, 2147483648
  %v1215 = vmul.f32 %v1214, 1.442695
  %v1216 = vpow.pop %v1215
  %v1217 = vadd.f32 %v1216, 1.0
  %v1218 = vrcp.pop %v1217
  %v1219 = vmul.f32 %v1217, %v1218
  %v1220 = vsub.f32 1.0, %v1219
  %v1221 = vmul.f32 %v1218, %v1220
  %v1222 = vadd.f32 %v1218, %v1221
  %vm1223 = vweird.f32 %v1217
  %vm1224 = vweird.f32 %v1218
  %vm1225 = vmor %vm1223, %vm1224
  %v1226 = vsel %vm1225, %v1218, %v1222
  %v1227 = vand.u32 2147483647, %v1217
  %vm1228 = vcmp.eq.f32.partialorder %v1227, 8.507059e+37
  %v1229 = vand.u32 %v1217, 2147483648
  %v1230 = vor.u32 1.1754944e-38, %v1229
  %v1231 = vsel %vm1228, %v1230, %v1226
  %v1232 = vmul.f32 1.0, %v1231
  %v1233 = vtanh.pop %v1212
  %v1234 = vmul.f32 %v1232, %v1059
  %1236 = vrot.lane.b32.xlu0 %v1233, 64
  %v1237 = vpop.permute.xlu0 %1236
  %v1239 = vmul.f32 %v1232, %v1237
  %1241 = vrot.lane.b32.xlu0 %v1239, 32
  %v1242 = vpop.permute.xlu0 %1241
  %v1244 = vadd.f32 %v1234, %v1242
  %v1245 = vtanh.pop %v1244
  %1247 = vrot.lane.b32.xlu0 %v1245, 64
  %v1248 = vpop.permute.xlu0 %1247
  %v1250 = vmul.f32 %v1232, %v1248
  %s1251 = scalar_lea.vmem %s5, 64
  %v1252 = vld [vmem:[%s1251] sm:$0xff]
  %v1253 = vld [vmem:[%s1251 + $0x8] sm:$0xff]
  %v1254 = vld [vmem:[%s1251 + $0x10] sm:$0xff]
  %v1255 = vld [vmem:[%s1251 + $0x18] sm:$0xff]
  %v1256 = vld [vmem:[%s1251 + $0x20] sm:$0xff]
  %v1257 = vld [vmem:[%s1251 + $0x28] sm:$0xff]
  %v1258 = vld [vmem:[%s1251 + $0x30] sm:$0xff]
  %v1259 = vld [vmem:[%s1251 + $0x38] sm:$0xff]
  %s1260 = scalar_lea.vmem %s6, 1
  %v1261 = vld [vmem:[%s1260] sm:$0x1]
  %1263 = vrot.lane.b32.xlu0 %v1250, 32
  %v1264 = vpop.permute.xlu0 %1263
  %1267 = vrot.lane.b32.xlu0 %v1134, 64
  %v1268 = vpop.permute.xlu0 %1267
  %v1270 = vsel %vm45, %v1264, %v1268
  %v1272 = vperm.slane %v1261, 0
  %v1275 = vsel %vm50, %v1270, 0
  %1277 = vmatpush.msra.mxu0 0.0
  %1278 = vmatpush.msra.mxu0 0.0
  %1279 = vmatpush.msra.mxu0 0.0
  %1280 = vmatpush.msra.mxu0 0.0
  %1281 = vmatpush.msra.mxu0 0.0
  %1282 = vmatpush.msra.mxu0 0.0
  %1283 = vmatpush.msra.mxu0 0.0
  %1284 = vmatpush.msra.mxu0 0.0
  %1285 = vmatpush.msra.mxu0 %v1259
  %1286 = vmatpush.msra.mxu0 %v1258
  %1287 = vmatpush.msra.mxu0 %v1257
  %1288 = vmatpush.msra.mxu0 %v1256
  %1289 = vmatpush.msra.mxu0 %v1255
  %1290 = vmatpush.msra.mxu0 %v1254
  %1291 = vmatpush.msra.mxu0 %v1253
  %1292 = vmatpush.msra.mxu0 %v1252
  %1293 = vmatmul.f32.gmra.mxu0 %v1275
  %v1294 = vpop.f32.mrf.mxu0
  %v1295 = vadd.f32 %v1272, %v1294
  %1296 = vdwg.mxu0
  %v1297 = vxor.u32 %v1295, 2147483648
  %v1298 = vmul.f32 %v1297, 1.442695
  %v1299 = vpow.pop %v1298
  %v1300 = vadd.f32 %v1299, 1.0
  %v1301 = vrcp.pop %v1300
  %v1302 = vmul.f32 %v1300, %v1301
  %v1303 = vsub.f32 1.0, %v1302
  %v1304 = vmul.f32 %v1301, %v1303
  %v1305 = vadd.f32 %v1301, %v1304
  %vm1306 = vweird.f32 %v1300
  %vm1307 = vweird.f32 %v1301
  %vm1308 = vmor %vm1306, %vm1307
  %v1309 = vsel %vm1308, %v1301, %v1305
  %v1310 = vand.u32 2147483647, %v1300
  %vm1311 = vcmp.eq.f32.partialorder %v1310, 8.507059e+37
  %v1312 = vand.u32 %v1300, 2147483648
  %v1313 = vor.u32 1.1754944e-38, %v1312
  %v1314 = vsel %vm1311, %v1313, %v1309
  %v1315 = vmul.f32 1.0, %v1314
  %v1316 = vtanh.pop %v1295
  %v1317 = vmul.f32 %v1315, %v1128
  %1319 = vrot.lane.b32.xlu0 %v1316, 64
  %v1320 = vpop.permute.xlu0 %1319
  %v1322 = vmul.f32 %v1315, %v1320
  %1324 = vrot.lane.b32.xlu0 %v1322, 32
  %v1325 = vpop.permute.xlu0 %1324
  %v1327 = vadd.f32 %v1317, %v1325
  %v1328 = vtanh.pop %v1327
  %1330 = vrot.lane.b32.xlu0 %v1328, 64
  %v1331 = vpop.permute.xlu0 %1330
  %v1333 = vmul.f32 %v1315, %v1331
  %v1334 = vld [vmem:[%s8] sm:$0xff]
  %v1335 = vld [vmem:[%s8 + $0x8] sm:$0xff]
  %v1336 = vld [vmem:[%s8 + $0x10] sm:$0xff]
  %v1337 = vld [vmem:[%s8 + $0x18] sm:$0xff]
  %v1338 = vld [vmem:[%s9] sm:$0x1]
  %v1340 = vperm.slane %v1338, 0
  %1343 = vrot.lane.b32.xlu0 %v1333, 32
  %v1344 = vpop.permute.xlu0 %1343
  %v1345 = vsel %vm45, %v1344, 0
  %1347 = vmatpush.msra.mxu0 0.0
  %1348 = vmatpush.msra.mxu0 0.0
  %1349 = vmatpush.msra.mxu0 0.0
  %1350 = vmatpush.msra.mxu0 0.0
  %1351 = vmatpush.msra.mxu0 0.0
  %1352 = vmatpush.msra.mxu0 0.0
  %1353 = vmatpush.msra.mxu0 0.0
  %1354 = vmatpush.msra.mxu0 0.0
  %1355 = vmatpush.msra.mxu0 0.0
  %1356 = vmatpush.msra.mxu0 0.0
  %1357 = vmatpush.msra.mxu0 0.0
  %1358 = vmatpush.msra.mxu0 0.0
  %1359 = vmatpush.msra.mxu0 %v1337
  %1360 = vmatpush.msra.mxu0 %v1336
  %1361 = vmatpush.msra.mxu0 %v1335
  %1362 = vmatpush.msra.mxu0 %v1334
  %1363 = vmatmul.f32.gmra.mxu0 %v1345
  %v1364 = vpop.f32.mrf.mxu0
  %v1365 = vadd.f32 %v1340, %v1364
  %1366 = vdwg.mxu0
  %s1367 = scalar_lea.vmem %s10, 8
  %1368 = vst [vmem:[%s1367] sm:$0xff] %v1365
  %1369 = vmax.xlane.f32.xlu0 %v1365
  %v1370 = vpop.xlane.xlu0 %1369
  %vm1371 = vcmp.eq.f32.partialorder %v1365, %v1370
  %v1372 = vsel %vm1371, %v1137, 128
  %v1373 = vand.u32 %v1372, 65535
  %v1374 = vshra.s32 %v1372, 16
  %v1375 = vcvt.s32.f32 %v1373
  %v1376 = vcvt.s32.f32 %v1374
  %1377 = vmin.xlane.f32.xlu0 %v1376
  %v1378 = vpop.xlane.xlu0 %1377
  %vm1379 = vcmp.eq.f32.partialorder %v1376, %v1378
  %v1380 = vsel %vm1379, %v1375, inf
  %1381 = vmin.xlane.f32.xlu0 %v1380
  %v1382 = vpop.xlane.xlu0 %1381
  %v1383 = vcvt.f32.s32 %v1382
  %v1384 = vcvt.f32.s32 %v1378
  %v1385 = vshll.u32 %v1384, 16
  %v1386 = vadd.s32 %v1385, %v1383
  %vm1387 = vcmp.eq.s32.totalorder %v1137, %v1386
  %v1388 = vsel %vm1387, 1, 0
  %v1389 = vcvt.s32.f32 %v1388
  %s1390 = scalar_lea.vmem %s2, 1
  %v1391 = vld [vmem:[%s1390] sm:$0x1]
  %s1392 = scalar_lea.vmem %s1, 8
  %v1393 = vld [vmem:[%s1392] sm:$0xff]
  %v1395 = vperm.slane %v1391, 0
  %1396 = vset.pattern.permute.xlu0 0
  %1397 = vperm.xlu0 %1396, %v1395
  %v1398 = vpop.permute.xlu0 %1397
  %v1400 = vmul.f32 %v1398, %v1393
  %v1401 = vsub.f32 1.0, %v1391
  %v1403 = vperm.slane %v1401, 0
  %1404 = vset.pattern.permute.xlu0 0
  %1405 = vperm.xlu0 %1404, %v1403
  %v1406 = vpop.permute.xlu0 %1405
  %v1408 = vmul.f32 %v1406, %v1389
  %v1409 = vadd.f32 %v1400, %v1408
  %v1410 = vld [vmem:[%s7] sm:$0xff]
  %v1411 = vld [vmem:[%s7 + $0x8] sm:$0xff]
  %v1412 = vld [vmem:[%s7 + $0x10] sm:$0xff]
  %v1413 = vld [vmem:[%s7 + $0x18] sm:$0xff]
  %v1414 = vld [vmem:[%s7 + $0x20] sm:$0xff]
  %v1415 = vld [vmem:[%s7 + $0x28] sm:$0xff]
  %v1416 = vld [vmem:[%s7 + $0x30] sm:$0xff]
  %v1417 = vld [vmem:[%s7 + $0x38] sm:$0xff]
  %v1418 = vld [vmem:[%s7 + $0x40] sm:$0xff]
  %v1419 = vld [vmem:[%s7 + $0x48] sm:$0xff]
  %v1420 = vld [vmem:[%s7 + $0x50] sm:$0xff]
  %v1421 = vld [vmem:[%s7 + $0x58] sm:$0xff]
  %v1422 = vld [vmem:[%s7 + $0x60] sm:$0xff]
  %v1423 = vld [vmem:[%s7 + $0x68] sm:$0xff]
  %v1424 = vld [vmem:[%s7 + $0x70] sm:$0xff]
  %v1425 = vld [vmem:[%s7 + $0x78] sm:$0xff]
  %1426 = vmatpush.msra.mxu0 %v1425
  %1427 = vmatpush.msra.mxu0 %v1424
  %1428 = vmatpush.msra.mxu0 %v1423
  %1429 = vmatpush.msra.mxu0 %v1422
  %1430 = vmatpush.msra.mxu0 %v1421
  %1431 = vmatpush.msra.mxu0 %v1420
  %1432 = vmatpush.msra.mxu0 %v1419
  %1433 = vmatpush.msra.mxu0 %v1418
  %1434 = vmatpush.msra.mxu0 %v1417
  %1435 = vmatpush.msra.mxu0 %v1416
  %1436 = vmatpush.msra.mxu0 %v1415
  %1437 = vmatpush.msra.mxu0 %v1414
  %1438 = vmatpush.msra.mxu0 %v1413
  %1439 = vmatpush.msra.mxu0 %v1412
  %1440 = vmatpush.msra.mxu0 %v1411
  %1441 = vmatpush.msra.mxu0 %v1410
  %1442 = vmatmul.f32.gmra.mxu0 %v1409
  %v1443 = vpop.f32.mrf.mxu0
  %v1444 = vadd.f32 0.0, %v1443
  %1445 = vdwg.mxu0
  %v1446 = vld [vmem:[%s5] sm:$0xff]
  %v1447 = vld [vmem:[%s5 + $0x8] sm:$0xff]
  %v1448 = vld [vmem:[%s5 + $0x10] sm:$0xff]
  %v1449 = vld [vmem:[%s5 + $0x18] sm:$0xff]
  %v1450 = vld [vmem:[%s5 + $0x20] sm:$0xff]
  %v1451 = vld [vmem:[%s5 + $0x28] sm:$0xff]
  %v1452 = vld [vmem:[%s5 + $0x30] sm:$0xff]
  %v1453 = vld [vmem:[%s5 + $0x38] sm:$0xff]
  %v1454 = vld [vmem:[%s6] sm:$0x1]
  %1455 = vrot.lane.b32.xlu0 %v1250, 64
  %v1456 = vpop.permute.xlu0 %1455
  %v1458 = vsel %vm45, %v1444, %v1456
  %v1460 = vperm.slane %v1454, 0
  %v1463 = vsel %vm50, %v1458, 0
  %1465 = vmatpush.msra.mxu0 0.0
  %1466 = vmatpush.msra.mxu0 0.0
  %1467 = vmatpush.msra.mxu0 0.0
  %1468 = vmatpush.msra.mxu0 0.0
  %1469 = vmatpush.msra.mxu0 0.0
  %1470 = vmatpush.msra.mxu0 0.0
  %1471 = vmatpush.msra.mxu0 0.0
  %1472 = vmatpush.msra.mxu0 0.0
  %1473 = vmatpush.msra.mxu0 %v1453
  %1474 = vmatpush.msra.mxu0 %v1452
  %1475 = vmatpush.msra.mxu0 %v1451
  %1476 = vmatpush.msra.mxu0 %v1450
  %1477 = vmatpush.msra.mxu0 %v1449
  %1478 = vmatpush.msra.mxu0 %v1448
  %1479 = vmatpush.msra.mxu0 %v1447
  %1480 = vmatpush.msra.mxu0 %v1446
  %1481 = vmatmul.f32.gmra.mxu0 %v1463
  %v1482 = vpop.f32.mrf.mxu0
  %v1483 = vadd.f32 %v1460, %v1482
  %1484 = vdwg.mxu0
  %v1485 = vxor.u32 %v1483, 2147483648
  %v1486 = vmul.f32 %v1485, 1.442695
  %v1487 = vpow.pop %v1486
  %v1488 = vadd.f32 %v1487, 1.0
  %v1489 = vrcp.pop %v1488
  %v1490 = vmul.f32 %v1488, %v1489
  %v1491 = vsub.f32 1.0, %v1490
  %v1492 = vmul.f32 %v1489, %v1491
  %v1493 = vadd.f32 %v1489, %v1492
  %vm1494 = vweird.f32 %v1488
  %vm1495 = vweird.f32 %v1489
  %vm1496 = vmor %vm1494, %vm1495
  %v1497 = vsel %vm1496, %v1489, %v1493
  %v1498 = vand.u32 2147483647, %v1488
  %vm1499 = vcmp.eq.f32.partialorder %v1498, 8.507059e+37
  %v1500 = vand.u32 %v1488, 2147483648
  %v1501 = vor.u32 1.1754944e-38, %v1500
  %v1502 = vsel %vm1499, %v1501, %v1497
  %v1503 = vmul.f32 1.0, %v1502
  %v1504 = vtanh.pop %v1483
  %v1505 = vmul.f32 %v1503, %v1244
  %1507 = vrot.lane.b32.xlu0 %v1504, 64
  %v1508 = vpop.permute.xlu0 %1507
  %v1510 = vmul.f32 %v1503, %v1508
  %1512 = vrot.lane.b32.xlu0 %v1510, 32
  %v1513 = vpop.permute.xlu0 %1512
  %v1515 = vadd.f32 %v1505, %v1513
  %v1516 = vtanh.pop %v1515
  %1518 = vrot.lane.b32.xlu0 %v1516, 64
  %v1519 = vpop.permute.xlu0 %1518
  %v1521 = vmul.f32 %v1503, %v1519
  %v1522 = vld [vmem:[%s1251] sm:$0xff]
  %v1523 = vld [vmem:[%s1251 + $0x8] sm:$0xff]
  %v1524 = vld [vmem:[%s1251 + $0x10] sm:$0xff]
  %v1525 = vld [vmem:[%s1251 + $0x18] sm:$0xff]
  %v1526 = vld [vmem:[%s1251 + $0x20] sm:$0xff]
  %v1527 = vld [vmem:[%s1251 + $0x28] sm:$0xff]
  %v1528 = vld [vmem:[%s1251 + $0x30] sm:$0xff]
  %v1529 = vld [vmem:[%s1251 + $0x38] sm:$0xff]
  %v1530 = vld [vmem:[%s1260] sm:$0x1]
  %1532 = vrot.lane.b32.xlu0 %v1521, 32
  %v1533 = vpop.permute.xlu0 %1532
  %1535 = vrot.lane.b32.xlu0 %v1333, 64
  %v1536 = vpop.permute.xlu0 %1535
  %v1538 = vsel %vm45, %v1533, %v1536
  %v1540 = vperm.slane %v1530, 0
  %v1543 = vsel %vm50, %v1538, 0
  %1545 = vmatpush.msra.mxu0 0.0
  %1546 = vmatpush.msra.mxu0 0.0
  %1547 = vmatpush.msra.mxu0 0.0
  %1548 = vmatpush.msra.mxu0 0.0
  %1549 = vmatpush.msra.mxu0 0.0
  %1550 = vmatpush.msra.mxu0 0.0
  %1551 = vmatpush.msra.mxu0 0.0
  %1552 = vmatpush.msra.mxu0 0.0
  %1553 = vmatpush.msra.mxu0 %v1529
  %1554 = vmatpush.msra.mxu0 %v1528
  %1555 = vmatpush.msra.mxu0 %v1527
  %1556 = vmatpush.msra.mxu0 %v1526
  %1557 = vmatpush.msra.mxu0 %v1525
  %1558 = vmatpush.msra.mxu0 %v1524
  %1559 = vmatpush.msra.mxu0 %v1523
  %1560 = vmatpush.msra.mxu0 %v1522
  %1561 = vmatmul.f32.gmra.mxu0 %v1543
  %v1562 = vpop.f32.mrf.mxu0
  %v1563 = vadd.f32 %v1540, %v1562
  %1564 = vdwg.mxu0
  %v1565 = vxor.u32 %v1563, 2147483648
  %v1566 = vmul.f32 %v1565, 1.442695
  %v1567 = vpow.pop %v1566
  %v1568 = vadd.f32 %v1567, 1.0
  %v1569 = vrcp.pop %v1568
  %v1570 = vmul.f32 %v1568, %v1569
  %v1571 = vsub.f32 1.0, %v1570
  %v1572 = vmul.f32 %v1569, %v1571
  %v1573 = vadd.f32 %v1569, %v1572
  %vm1574 = vweird.f32 %v1568
  %vm1575 = vweird.f32 %v1569
  %vm1576 = vmor %vm1574, %vm1575
  %v1577 = vsel %vm1576, %v1569, %v1573
  %v1578 = vand.u32 2147483647, %v1568
  %vm1579 = vcmp.eq.f32.partialorder %v1578, 8.507059e+37
  %v1580 = vand.u32 %v1568, 2147483648
  %v1581 = vor.u32 1.1754944e-38, %v1580
  %v1582 = vsel %vm1579, %v1581, %v1577
  %v1583 = vmul.f32 1.0, %v1582
  %v1584 = vtanh.pop %v1563
  %v1585 = vmul.f32 %v1583, %v1327
  %1587 = vrot.lane.b32.xlu0 %v1584, 64
  %v1588 = vpop.permute.xlu0 %1587
  %v1590 = vmul.f32 %v1583, %v1588
  %1592 = vrot.lane.b32.xlu0 %v1590, 32
  %v1593 = vpop.permute.xlu0 %1592
  %v1595 = vadd.f32 %v1585, %v1593
  %v1596 = vtanh.pop %v1595
  %1598 = vrot.lane.b32.xlu0 %v1596, 64
  %v1599 = vpop.permute.xlu0 %1598
  %v1601 = vmul.f32 %v1583, %v1599
  %v1602 = vld [vmem:[%s8] sm:$0xff]
  %v1603 = vld [vmem:[%s8 + $0x8] sm:$0xff]
  %v1604 = vld [vmem:[%s8 + $0x10] sm:$0xff]
  %v1605 = vld [vmem:[%s8 + $0x18] sm:$0xff]
  %v1606 = vld [vmem:[%s9] sm:$0x1]
  %v1608 = vperm.slane %v1606, 0
  %1611 = vrot.lane.b32.xlu0 %v1601, 32
  %v1612 = vpop.permute.xlu0 %1611
  %v1613 = vsel %vm45, %v1612, 0
  %1615 = vmatpush.msra.mxu0 0.0
  %1616 = vmatpush.msra.mxu0 0.0
  %1617 = vmatpush.msra.mxu0 0.0
  %1618 = vmatpush.msra.mxu0 0.0
  %1619 = vmatpush.msra.mxu0 0.0
  %1620 = vmatpush.msra.mxu0 0.0
  %1621 = vmatpush.msra.mxu0 0.0
  %1622 = vmatpush.msra.mxu0 0.0
  %1623 = vmatpush.msra.mxu0 0.0
  %1624 = vmatpush.msra.mxu0 0.0
  %1625 = vmatpush.msra.mxu0 0.0
  %1626 = vmatpush.msra.mxu0 0.0
  %1627 = vmatpush.msra.mxu0 %v1605
  %1628 = vmatpush.msra.mxu0 %v1604
  %1629 = vmatpush.msra.mxu0 %v1603
  %1630 = vmatpush.msra.mxu0 %v1602
  %1631 = vmatmul.f32.gmra.mxu0 %v1613
  %v1632 = vpop.f32.mrf.mxu0
  %v1633 = vadd.f32 %v1608, %v1632
  %1634 = vdwg.mxu0
  %s1635 = scalar_lea.vmem %s10, 16
  %1636 = vst [vmem:[%s1635] sm:$0xff] %v1633
  %1637 = vmax.xlane.f32.xlu0 %v1633
  %v1638 = vpop.xlane.xlu0 %1637
  %vm1639 = vcmp.eq.f32.partialorder %v1633, %v1638
  %v1640 = vsel %vm1639, %v1137, 128
  %v1641 = vand.u32 %v1640, 65535
  %v1642 = vshra.s32 %v1640, 16
  %v1643 = vcvt.s32.f32 %v1641
  %v1644 = vcvt.s32.f32 %v1642
  %1645 = vmin.xlane.f32.xlu0 %v1644
  %v1646 = vpop.xlane.xlu0 %1645
  %vm1647 = vcmp.eq.f32.partialorder %v1644, %v1646
  %v1648 = vsel %vm1647, %v1643, inf
  %1649 = vmin.xlane.f32.xlu0 %v1648
  %v1650 = vpop.xlane.xlu0 %1649
  %v1651 = vcvt.f32.s32 %v1650
  %v1652 = vcvt.f32.s32 %v1646
  %v1653 = vshll.u32 %v1652, 16
  %v1654 = vadd.s32 %v1653, %v1651
  %vm1655 = vcmp.eq.s32.totalorder %v1137, %v1654
  %v1656 = vsel %vm1655, 1, 0
  %v1657 = vcvt.s32.f32 %v1656
  %s1658 = scalar_lea.vmem %s2, 2
  %v1659 = vld [vmem:[%s1658] sm:$0x1]
  %s1660 = scalar_lea.vmem %s1, 16
  %v1661 = vld [vmem:[%s1660] sm:$0xff]
  %v1663 = vperm.slane %v1659, 0
  %1664 = vset.pattern.permute.xlu0 0
  %1665 = vperm.xlu0 %1664, %v1663
  %v1666 = vpop.permute.xlu0 %1665
  %v1668 = vmul.f32 %v1666, %v1661
  %v1669 = vsub.f32 1.0, %v1659
  %v1671 = vperm.slane %v1669, 0
  %1672 = vset.pattern.permute.xlu0 0
  %1673 = vperm.xlu0 %1672, %v1671
  %v1674 = vpop.permute.xlu0 %1673
  %v1676 = vmul.f32 %v1674, %v1657
  %v1677 = vadd.f32 %v1668, %v1676
  %v1678 = vld [vmem:[%s7] sm:$0xff]
  %v1679 = vld [vmem:[%s7 + $0x8] sm:$0xff]
  %v1680 = vld [vmem:[%s7 + $0x10] sm:$0xff]
  %v1681 = vld [vmem:[%s7 + $0x18] sm:$0xff]
  %v1682 = vld [vmem:[%s7 + $0x20] sm:$0xff]
  %v1683 = vld [vmem:[%s7 + $0x28] sm:$0xff]
  %v1684 = vld [vmem:[%s7 + $0x30] sm:$0xff]
  %v1685 = vld [vmem:[%s7 + $0x38] sm:$0xff]
  %v1686 = vld [vmem:[%s7 + $0x40] sm:$0xff]
  %v1687 = vld [vmem:[%s7 + $0x48] sm:$0xff]
  %v1688 = vld [vmem:[%s7 + $0x50] sm:$0xff]
  %v1689 = vld [vmem:[%s7 + $0x58] sm:$0xff]
  %v1690 = vld [vmem:[%s7 + $0x60] sm:$0xff]
  %v1691 = vld [vmem:[%s7 + $0x68] sm:$0xff]
  %v1692 = vld [vmem:[%s7 + $0x70] sm:$0xff]
  %v1693 = vld [vmem:[%s7 + $0x78] sm:$0xff]
  %1694 = vmatpush.msra.mxu0 %v1693
  %1695 = vmatpush.msra.mxu0 %v1692
  %1696 = vmatpush.msra.mxu0 %v1691
  %1697 = vmatpush.msra.mxu0 %v1690
  %1698 = vmatpush.msra.mxu0 %v1689
  %1699 = vmatpush.msra.mxu0 %v1688
  %1700 = vmatpush.msra.mxu0 %v1687
  %1701 = vmatpush.msra.mxu0 %v1686
  %1702 = vmatpush.msra.mxu0 %v1685
  %1703 = vmatpush.msra.mxu0 %v1684
  %1704 = vmatpush.msra.mxu0 %v1683
  %1705 = vmatpush.msra.mxu0 %v1682
  %1706 = vmatpush.msra.mxu0 %v1681
  %1707 = vmatpush.msra.mxu0 %v1680
  %1708 = vmatpush.msra.mxu0 %v1679
  %1709 = vmatpush.msra.mxu0 %v1678
  %1710 = vmatmul.f32.gmra.mxu0 %v1677
  %v1711 = vpop.f32.mrf.mxu0
  %v1712 = vadd.f32 0.0, %v1711
  %1713 = vdwg.mxu0
  %v1714 = vld [vmem:[%s5] sm:$0xff]
  %v1715 = vld [vmem:[%s5 + $0x8] sm:$0xff]
  %v1716 = vld [vmem:[%s5 + $0x10] sm:$0xff]
  %v1717 = vld [vmem:[%s5 + $0x18] sm:$0xff]
  %v1718 = vld [vmem:[%s5 + $0x20] sm:$0xff]
  %v1719 = vld [vmem:[%s5 + $0x28] sm:$0xff]
  %v1720 = vld [vmem:[%s5 + $0x30] sm:$0xff]
  %v1721 = vld [vmem:[%s5 + $0x38] sm:$0xff]
  %v1722 = vld [vmem:[%s6] sm:$0x1]
  %1723 = vrot.lane.b32.xlu0 %v1521, 64
  %v1724 = vpop.permute.xlu0 %1723
  %v1726 = vsel %vm45, %v1712, %v1724
  %v1728 = vperm.slane %v1722, 0
  %v1731 = vsel %vm50, %v1726, 0
  %1733 = vmatpush.msra.mxu0 0.0
  %1734 = vmatpush.msra.mxu0 0.0
  %1735 = vmatpush.msra.mxu0 0.0
  %1736 = vmatpush.msra.mxu0 0.0
  %1737 = vmatpush.msra.mxu0 0.0
  %1738 = vmatpush.msra.mxu0 0.0
  %1739 = vmatpush.msra.mxu0 0.0
  %1740 = vmatpush.msra.mxu0 0.0
  %1741 = vmatpush.msra.mxu0 %v1721
  %1742 = vmatpush.msra.mxu0 %v1720
  %1743 = vmatpush.msra.mxu0 %v1719
  %1744 = vmatpush.msra.mxu0 %v1718
  %1745 = vmatpush.msra.mxu0 %v1717
  %1746 = vmatpush.msra.mxu0 %v1716
  %1747 = vmatpush.msra.mxu0 %v1715
  %1748 = vmatpush.msra.mxu0 %v1714
  %1749 = vmatmul.f32.gmra.mxu0 %v1731
  %v1750 = vpop.f32.mrf.mxu0
  %v1751 = vadd.f32 %v1728, %v1750
  %1752 = vdwg.mxu0
  %v1753 = vxor.u32 %v1751, 2147483648
  %v1754 = vmul.f32 %v1753, 1.442695
  %v1755 = vpow.pop %v1754
  %v1756 = vadd.f32 %v1755, 1.0
  %v1757 = vrcp.pop %v1756
  %v1758 = vmul.f32 %v1756, %v1757
  %v1759 = vsub.f32 1.0, %v1758
  %v1760 = vmul.f32 %v1757, %v1759
  %v1761 = vadd.f32 %v1757, %v1760
  %vm1762 = vweird.f32 %v1756
  %vm1763 = vweird.f32 %v1757
  %vm1764 = vmor %vm1762, %vm1763
  %v1765 = vsel %vm1764, %v1757, %v1761
  %v1766 = vand.u32 2147483647, %v1756
  %vm1767 = vcmp.eq.f32.partialorder %v1766, 8.507059e+37
  %v1768 = vand.u32 %v1756, 2147483648
  %v1769 = vor.u32 1.1754944e-38, %v1768
  %v1770 = vsel %vm1767, %v1769, %v1765
  %v1771 = vmul.f32 1.0, %v1770
  %v1772 = vtanh.pop %v1751
  %v1773 = vmul.f32 %v1771, %v1515
  %1775 = vrot.lane.b32.xlu0 %v1772, 64
  %v1776 = vpop.permute.xlu0 %1775
  %v1778 = vmul.f32 %v1771, %v1776
  %1780 = vrot.lane.b32.xlu0 %v1778, 32
  %v1781 = vpop.permute.xlu0 %1780
  %v1783 = vadd.f32 %v1773, %v1781
  %v1784 = vtanh.pop %v1783
  %1786 = vrot.lane.b32.xlu0 %v1784, 64
  %v1787 = vpop.permute.xlu0 %1786
  %v1789 = vmul.f32 %v1771, %v1787
  %v1790 = vld [vmem:[%s1251] sm:$0xff]
  %v1791 = vld [vmem:[%s1251 + $0x8] sm:$0xff]
  %v1792 = vld [vmem:[%s1251 + $0x10] sm:$0xff]
  %v1793 = vld [vmem:[%s1251 + $0x18] sm:$0xff]
  %v1794 = vld [vmem:[%s1251 + $0x20] sm:$0xff]
  %v1795 = vld [vmem:[%s1251 + $0x28] sm:$0xff]
  %v1796 = vld [vmem:[%s1251 + $0x30] sm:$0xff]
  %v1797 = vld [vmem:[%s1251 + $0x38] sm:$0xff]
  %v1798 = vld [vmem:[%s1260] sm:$0x1]
  %1800 = vrot.lane.b32.xlu0 %v1789, 32
  %v1801 = vpop.permute.xlu0 %1800
  %1803 = vrot.lane.b32.xlu0 %v1601, 64
  %v1804 = vpop.permute.xlu0 %1803
  %v1806 = vsel %vm45, %v1801, %v1804
  %v1808 = vperm.slane %v1798, 0
  %v1811 = vsel %vm50, %v1806, 0
  %1813 = vmatpush.msra.mxu0 0.0
  %1814 = vmatpush.msra.mxu0 0.0
  %1815 = vmatpush.msra.mxu0 0.0
  %1816 = vmatpush.msra.mxu0 0.0
  %1817 = vmatpush.msra.mxu0 0.0
  %1818 = vmatpush.msra.mxu0 0.0
  %1819 = vmatpush.msra.mxu0 0.0
  %1820 = vmatpush.msra.mxu0 0.0
  %1821 = vmatpush.msra.mxu0 %v1797
  %1822 = vmatpush.msra.mxu0 %v1796
  %1823 = vmatpush.msra.mxu0 %v1795
  %1824 = vmatpush.msra.mxu0 %v1794
  %1825 = vmatpush.msra.mxu0 %v1793
  %1826 = vmatpush.msra.mxu0 %v1792
  %1827 = vmatpush.msra.mxu0 %v1791
  %1828 = vmatpush.msra.mxu0 %v1790
  %1829 = vmatmul.f32.gmra.mxu0 %v1811
  %v1830 = vpop.f32.mrf.mxu0
  %v1831 = vadd.f32 %v1808, %v1830
  %1832 = vdwg.mxu0
  %v1833 = vxor.u32 %v1831, 2147483648
  %v1834 = vmul.f32 %v1833, 1.442695
  %v1835 = vpow.pop %v1834
  %v1836 = vadd.f32 %v1835, 1.0
  %v1837 = vrcp.pop %v1836
  %v1838 = vmul.f32 %v1836, %v1837
  %v1839 = vsub.f32 1.0, %v1838
  %v1840 = vmul.f32 %v1837, %v1839
  %v1841 = vadd.f32 %v1837, %v1840
  %vm1842 = vweird.f32 %v1836
  %vm1843 = vweird.f32 %v1837
  %vm1844 = vmor %vm1842, %vm1843
  %v1845 = vsel %vm1844, %v1837, %v1841
  %v1846 = vand.u32 2147483647, %v1836
  %vm1847 = vcmp.eq.f32.partialorder %v1846, 8.507059e+37
  %v1848 = vand.u32 %v1836, 2147483648
  %v1849 = vor.u32 1.1754944e-38, %v1848
  %v1850 = vsel %vm1847, %v1849, %v1845
  %v1851 = vmul.f32 1.0, %v1850
  %v1852 = vtanh.pop %v1831
  %v1853 = vmul.f32 %v1851, %v1595
  %1855 = vrot.lane.b32.xlu0 %v1852, 64
  %v1856 = vpop.permute.xlu0 %1855
  %v1858 = vmul.f32 %v1851, %v1856
  %1860 = vrot.lane.b32.xlu0 %v1858, 32
  %v1861 = vpop.permute.xlu0 %1860
  %v1863 = vadd.f32 %v1853, %v1861
  %v1864 = vtanh.pop %v1863
  %1866 = vrot.lane.b32.xlu0 %v1864, 64
  %v1867 = vpop.permute.xlu0 %1866
  %v1869 = vmul.f32 %v1851, %v1867
  %v1870 = vld [vmem:[%s8] sm:$0xff]
  %v1871 = vld [vmem:[%s8 + $0x8] sm:$0xff]
  %v1872 = vld [vmem:[%s8 + $0x10] sm:$0xff]
  %v1873 = vld [vmem:[%s8 + $0x18] sm:$0xff]
  %v1874 = vld [vmem:[%s9] sm:$0x1]
  %v1876 = vperm.slane %v1874, 0
  %1879 = vrot.lane.b32.xlu0 %v1869, 32
  %v1880 = vpop.permute.xlu0 %1879
  %v1881 = vsel %vm45, %v1880, 0
  %1883 = vmatpush.msra.mxu0 0.0
  %1884 = vmatpush.msra.mxu0 0.0
  %1885 = vmatpush.msra.mxu0 0.0
  %1886 = vmatpush.msra.mxu0 0.0
  %1887 = vmatpush.msra.mxu0 0.0
  %1888 = vmatpush.msra.mxu0 0.0
  %1889 = vmatpush.msra.mxu0 0.0
  %1890 = vmatpush.msra.mxu0 0.0
  %1891 = vmatpush.msra.mxu0 0.0
  %1892 = vmatpush.msra.mxu0 0.0
  %1893 = vmatpush.msra.mxu0 0.0
  %1894 = vmatpush.msra.mxu0 0.0
  %1895 = vmatpush.msra.mxu0 %v1873
  %1896 = vmatpush.msra.mxu0 %v1872
  %1897 = vmatpush.msra.mxu0 %v1871
  %1898 = vmatpush.msra.mxu0 %v1870
  %1899 = vmatmul.f32.gmra.mxu0 %v1881
  %v1900 = vpop.f32.mrf.mxu0
  %v1901 = vadd.f32 %v1876, %v1900
  %1902 = vdwg.mxu0
  %s1903 = scalar_lea.vmem %s10, 24
  %1904 = vst [vmem:[%s1903] sm:$0xff] %v1901
  %1905 = vmax.xlane.f32.xlu0 %v1901
  %v1906 = vpop.xlane.xlu0 %1905
  %vm1907 = vcmp.eq.f32.partialorder %v1901, %v1906
  %v1908 = vsel %vm1907, %v1137, 128
  %v1909 = vand.u32 %v1908, 65535
  %v1910 = vshra.s32 %v1908, 16
  %v1911 = vcvt.s32.f32 %v1909
  %v1912 = vcvt.s32.f32 %v1910
  %1913 = vmin.xlane.f32.xlu0 %v1912
  %v1914 = vpop.xlane.xlu0 %1913
  %vm1915 = vcmp.eq.f32.partialorder %v1912, %v1914
  %v1916 = vsel %vm1915, %v1911, inf
  %1917 = vmin.xlane.f32.xlu0 %v1916
  %v1918 = vpop.xlane.xlu0 %1917
  %v1919 = vcvt.f32.s32 %v1918
  %v1920 = vcvt.f32.s32 %v1914
  %v1921 = vshll.u32 %v1920, 16
  %v1922 = vadd.s32 %v1921, %v1919
  %vm1923 = vcmp.eq.s32.totalorder %v1137, %v1922
  %v1924 = vsel %vm1923, 1, 0
  %v1925 = vcvt.s32.f32 %v1924
  %s1926 = scalar_lea.vmem %s2, 3
  %v1927 = vld [vmem:[%s1926] sm:$0x1]
  %s1928 = scalar_lea.vmem %s1, 24
  %v1929 = vld [vmem:[%s1928] sm:$0xff]
  %v1931 = vperm.slane %v1927, 0
  %1932 = vset.pattern.permute.xlu0 0
  %1933 = vperm.xlu0 %1932, %v1931
  %v1934 = vpop.permute.xlu0 %1933
  %v1936 = vmul.f32 %v1934, %v1929
  %v1937 = vsub.f32 1.0, %v1927
  %v1939 = vperm.slane %v1937, 0
  %1940 = vset.pattern.permute.xlu0 0
  %1941 = vperm.xlu0 %1940, %v1939
  %v1942 = vpop.permute.xlu0 %1941
  %v1944 = vmul.f32 %v1942, %v1925
  %v1945 = vadd.f32 %v1936, %v1944
  %v1946 = vld [vmem:[%s7] sm:$0xff]
  %v1947 = vld [vmem:[%s7 + $0x8] sm:$0xff]
  %v1948 = vld [vmem:[%s7 + $0x10] sm:$0xff]
  %v1949 = vld [vmem:[%s7 + $0x18] sm:$0xff]
  %v1950 = vld [vmem:[%s7 + $0x20] sm:$0xff]
  %v1951 = vld [vmem:[%s7 + $0x28] sm:$0xff]
  %v1952 = vld [vmem:[%s7 + $0x30] sm:$0xff]
  %v1953 = vld [vmem:[%s7 + $0x38] sm:$0xff]
  %v1954 = vld [vmem:[%s7 + $0x40] sm:$0xff]
  %v1955 = vld [vmem:[%s7 + $0x48] sm:$0xff]
  %v1956 = vld [vmem:[%s7 + $0x50] sm:$0xff]
  %v1957 = vld [vmem:[%s7 + $0x58] sm:$0xff]
  %v1958 = vld [vmem:[%s7 + $0x60] sm:$0xff]
  %v1959 = vld [vmem:[%s7 + $0x68] sm:$0xff]
  %v1960 = vld [vmem:[%s7 + $0x70] sm:$0xff]
  %v1961 = vld [vmem:[%s7 + $0x78] sm:$0xff]
  %1962 = vmatpush.msra.mxu0 %v1961
  %1963 = vmatpush.msra.mxu0 %v1960
  %1964 = vmatpush.msra.mxu0 %v1959
  %1965 = vmatpush.msra.mxu0 %v1958
  %1966 = vmatpush.msra.mxu0 %v1957
  %1967 = vmatpush.msra.mxu0 %v1956
  %1968 = vmatpush.msra.mxu0 %v1955
  %1969 = vmatpush.msra.mxu0 %v1954
  %1970 = vmatpush.msra.mxu0 %v1953
  %1971 = vmatpush.msra.mxu0 %v1952
  %1972 = vmatpush.msra.mxu0 %v1951
  %1973 = vmatpush.msra.mxu0 %v1950
  %1974 = vmatpush.msra.mxu0 %v1949
  %1975 = vmatpush.msra.mxu0 %v1948
  %1976 = vmatpush.msra.mxu0 %v1947
  %1977 = vmatpush.msra.mxu0 %v1946
  %1978 = vmatmul.f32.gmra.mxu0 %v1945
  %v1979 = vpop.f32.mrf.mxu0
  %v1980 = vadd.f32 0.0, %v1979
  %1981 = vdwg.mxu0
  %v1982 = vld [vmem:[%s5] sm:$0xff]
  %v1983 = vld [vmem:[%s5 + $0x8] sm:$0xff]
  %v1984 = vld [vmem:[%s5 + $0x10] sm:$0xff]
  %v1985 = vld [vmem:[%s5 + $0x18] sm:$0xff]
  %v1986 = vld [vmem:[%s5 + $0x20] sm:$0xff]
  %v1987 = vld [vmem:[%s5 + $0x28] sm:$0xff]
  %v1988 = vld [vmem:[%s5 + $0x30] sm:$0xff]
  %v1989 = vld [vmem:[%s5 + $0x38] sm:$0xff]
  %v1990 = vld [vmem:[%s6] sm:$0x1]
  %1991 = vrot.lane.b32.xlu0 %v1789, 64
  %v1992 = vpop.permute.xlu0 %1991
  %v1994 = vsel %vm45, %v1980, %v1992
  %v1996 = vperm.slane %v1990, 0
  %v1999 = vsel %vm50, %v1994, 0
  %2001 = vmatpush.msra.mxu0 0.0
  %2002 = vmatpush.msra.mxu0 0.0
  %2003 = vmatpush.msra.mxu0 0.0
  %2004 = vmatpush.msra.mxu0 0.0
  %2005 = vmatpush.msra.mxu0 0.0
  %2006 = vmatpush.msra.mxu0 0.0
  %2007 = vmatpush.msra.mxu0 0.0
  %2008 = vmatpush.msra.mxu0 0.0
  %2009 = vmatpush.msra.mxu0 %v1989
  %2010 = vmatpush.msra.mxu0 %v1988
  %2011 = vmatpush.msra.mxu0 %v1987
  %2012 = vmatpush.msra.mxu0 %v1986
  %2013 = vmatpush.msra.mxu0 %v1985
  %2014 = vmatpush.msra.mxu0 %v1984
  %2015 = vmatpush.msra.mxu0 %v1983
  %2016 = vmatpush.msra.mxu0 %v1982
  %2017 = vmatmul.f32.gmra.mxu0 %v1999
  %v2018 = vpop.f32.mrf.mxu0
  %v2019 = vadd.f32 %v1996, %v2018
  %2020 = vdwg.mxu0
  %v2021 = vxor.u32 %v2019, 2147483648
  %v2022 = vmul.f32 %v2021, 1.442695
  %v2023 = vpow.pop %v2022
  %v2024 = vadd.f32 %v2023, 1.0
  %v2025 = vrcp.pop %v2024
  %v2026 = vmul.f32 %v2024, %v2025
  %v2027 = vsub.f32 1.0, %v2026
  %v2028 = vmul.f32 %v2025, %v2027
  %v2029 = vadd.f32 %v2025, %v2028
  %vm2030 = vweird.f32 %v2024
  %vm2031 = vweird.f32 %v2025
  %vm2032 = vmor %vm2030, %vm2031
  %v2033 = vsel %vm2032, %v2025, %v2029
  %v2034 = vand.u32 2147483647, %v2024
  %vm2035 = vcmp.eq.f32.partialorder %v2034, 8.507059e+37
  %v2036 = vand.u32 %v2024, 2147483648
  %v2037 = vor.u32 1.1754944e-38, %v2036
  %v2038 = vsel %vm2035, %v2037, %v2033
  %v2039 = vmul.f32 1.0, %v2038
  %v2040 = vtanh.pop %v2019
  %v2041 = vmul.f32 %v2039, %v1783
  %2043 = vrot.lane.b32.xlu0 %v2040, 64
  %v2044 = vpop.permute.xlu0 %2043
  %v2046 = vmul.f32 %v2039, %v2044
  %2048 = vrot.lane.b32.xlu0 %v2046, 32
  %v2049 = vpop.permute.xlu0 %2048
  %v2051 = vadd.f32 %v2041, %v2049
  %v2052 = vtanh.pop %v2051
  %2054 = vrot.lane.b32.xlu0 %v2052, 64
  %v2055 = vpop.permute.xlu0 %2054
  %v2057 = vmul.f32 %v2039, %v2055
  %v2058 = vld [vmem:[%s1251] sm:$0xff]
  %v2059 = vld [vmem:[%s1251 + $0x8] sm:$0xff]
  %v2060 = vld [vmem:[%s1251 + $0x10] sm:$0xff]
  %v2061 = vld [vmem:[%s1251 + $0x18] sm:$0xff]
  %v2062 = vld [vmem:[%s1251 + $0x20] sm:$0xff]
  %v2063 = vld [vmem:[%s1251 + $0x28] sm:$0xff]
  %v2064 = vld [vmem:[%s1251 + $0x30] sm:$0xff]
  %v2065 = vld [vmem:[%s1251 + $0x38] sm:$0xff]
  %v2066 = vld [vmem:[%s1260] sm:$0x1]
  %2068 = vrot.lane.b32.xlu0 %v2057, 32
  %v2069 = vpop.permute.xlu0 %2068
  %2071 = vrot.lane.b32.xlu0 %v1869, 64
  %v2072 = vpop.permute.xlu0 %2071
  %v2074 = vsel %vm45, %v2069, %v2072
  %v2076 = vperm.slane %v2066, 0
  %v2079 = vsel %vm50, %v2074, 0
  %2081 = vmatpush.msra.mxu0 0.0
  %2082 = vmatpush.msra.mxu0 0.0
  %2083 = vmatpush.msra.mxu0 0.0
  %2084 = vmatpush.msra.mxu0 0.0
  %2085 = vmatpush.msra.mxu0 0.0
  %2086 = vmatpush.msra.mxu0 0.0
  %2087 = vmatpush.msra.mxu0 0.0
  %2088 = vmatpush.msra.mxu0 0.0
  %2089 = vmatpush.msra.mxu0 %v2065
  %2090 = vmatpush.msra.mxu0 %v2064
  %2091 = vmatpush.msra.mxu0 %v2063
  %2092 = vmatpush.msra.mxu0 %v2062
  %2093 = vmatpush.msra.mxu0 %v2061
  %2094 = vmatpush.msra.mxu0 %v2060
  %2095 = vmatpush.msra.mxu0 %v2059
  %2096 = vmatpush.msra.mxu0 %v2058
  %2097 = vmatmul.f32.gmra.mxu0 %v2079
  %v2098 = vpop.f32.mrf.mxu0
  %v2099 = vadd.f32 %v2076, %v2098
  %2100 = vdwg.mxu0
  %v2101 = vxor.u32 %v2099, 2147483648
  %v2102 = vmul.f32 %v2101, 1.442695
  %v2103 = vpow.pop %v2102
  %v2104 = vadd.f32 %v2103, 1.0
  %v2105 = vrcp.pop %v2104
  %v2106 = vmul.f32 %v2104, %v2105
  %v2107 = vsub.f32 1.0, %v2106
  %v2108 = vmul.f32 %v2105, %v2107
  %v2109 = vadd.f32 %v2105, %v2108
  %vm2110 = vweird.f32 %v2104
  %vm2111 = vweird.f32 %v2105
  %vm2112 = vmor %vm2110, %vm2111
  %v2113 = vsel %vm2112, %v2105, %v2109
  %v2114 = vand.u32 2147483647, %v2104
  %vm2115 = vcmp.eq.f32.partialorder %v2114, 8.507059e+37
  %v2116 = vand.u32 %v2104, 2147483648
  %v2117 = vor.u32 1.1754944e-38, %v2116
  %v2118 = vsel %vm2115, %v2117, %v2113
  %v2119 = vmul.f32 1.0, %v2118
  %v2120 = vtanh.pop %v2099
  %v2121 = vmul.f32 %v2119, %v1863
  %2123 = vrot.lane.b32.xlu0 %v2120, 64
  %v2124 = vpop.permute.xlu0 %2123
  %v2126 = vmul.f32 %v2119, %v2124
  %2128 = vrot.lane.b32.xlu0 %v2126, 32
  %v2129 = vpop.permute.xlu0 %2128
  %v2131 = vadd.f32 %v2121, %v2129
  %v2132 = vtanh.pop %v2131
  %2134 = vrot.lane.b32.xlu0 %v2132, 64
  %v2135 = vpop.permute.xlu0 %2134
  %v2137 = vmul.f32 %v2119, %v2135
  %v2138 = vld [vmem:[%s8] sm:$0xff]
  %v2139 = vld [vmem:[%s8 + $0x8] sm:$0xff]
  %v2140 = vld [vmem:[%s8 + $0x10] sm:$0xff]
  %v2141 = vld [vmem:[%s8 + $0x18] sm:$0xff]
  %v2142 = vld [vmem:[%s9] sm:$0x1]
  %v2144 = vperm.slane %v2142, 0
  %2147 = vrot.lane.b32.xlu0 %v2137, 32
  %v2148 = vpop.permute.xlu0 %2147
  %v2149 = vsel %vm45, %v2148, 0
  %2151 = vmatpush.msra.mxu0 0.0
  %2152 = vmatpush.msra.mxu0 0.0
  %2153 = vmatpush.msra.mxu0 0.0
  %2154 = vmatpush.msra.mxu0 0.0
  %2155 = vmatpush.msra.mxu0 0.0
  %2156 = vmatpush.msra.mxu0 0.0
  %2157 = vmatpush.msra.mxu0 0.0
  %2158 = vmatpush.msra.mxu0 0.0
  %2159 = vmatpush.msra.mxu0 0.0
  %2160 = vmatpush.msra.mxu0 0.0
  %2161 = vmatpush.msra.mxu0 0.0
  %2162 = vmatpush.msra.mxu0 0.0
  %2163 = vmatpush.msra.mxu0 %v2141
  %2164 = vmatpush.msra.mxu0 %v2140
  %2165 = vmatpush.msra.mxu0 %v2139
  %2166 = vmatpush.msra.mxu0 %v2138
  %2167 = vmatmul.f32.gmra.mxu0 %v2149
  %v2168 = vpop.f32.mrf.mxu0
  %v2169 = vadd.f32 %v2144, %v2168
  %2170 = vdwg.mxu0
  %s2171 = scalar_lea.vmem %s10, 32
  %2172 = vst [vmem:[%s2171] sm:$0xff] %v2169
  %2173 = vmax.xlane.f32.xlu0 %v2169
  %v2174 = vpop.xlane.xlu0 %2173
  %vm2175 = vcmp.eq.f32.partialorder %v2169, %v2174
  %v2176 = vsel %vm2175, %v1137, 128
  %v2177 = vand.u32 %v2176, 65535
  %v2178 = vshra.s32 %v2176, 16
  %v2179 = vcvt.s32.f32 %v2177
  %v2180 = vcvt.s32.f32 %v2178
  %2181 = vmin.xlane.f32.xlu0 %v2180
  %v2182 = vpop.xlane.xlu0 %2181
  %vm2183 = vcmp.eq.f32.partialorder %v2180, %v2182
  %v2184 = vsel %vm2183, %v2179, inf
  %2185 = vmin.xlane.f32.xlu0 %v2184
  %v2186 = vpop.xlane.xlu0 %2185
  %v2187 = vcvt.f32.s32 %v2186
  %v2188 = vcvt.f32.s32 %v2182
  %v2189 = vshll.u32 %v2188, 16
  %v2190 = vadd.s32 %v2189, %v2187
  %vm2191 = vcmp.eq.s32.totalorder %v1137, %v2190
  %v2192 = vsel %vm2191, 1, 0
  %v2193 = vcvt.s32.f32 %v2192
  %s2194 = scalar_lea.vmem %s2, 4
  %v2195 = vld [vmem:[%s2194] sm:$0x1]
  %s2196 = scalar_lea.vmem %s1, 32
  %v2197 = vld [vmem:[%s2196] sm:$0xff]
  %v2199 = vperm.slane %v2195, 0
  %2200 = vset.pattern.permute.xlu0 0
  %2201 = vperm.xlu0 %2200, %v2199
  %v2202 = vpop.permute.xlu0 %2201
  %v2204 = vmul.f32 %v2202, %v2197
  %v2205 = vsub.f32 1.0, %v2195
  %v2207 = vperm.slane %v2205, 0
  %2208 = vset.pattern.permute.xlu0 0
  %2209 = vperm.xlu0 %2208, %v2207
  %v2210 = vpop.permute.xlu0 %2209
  %v2212 = vmul.f32 %v2210, %v2193
  %v2213 = vadd.f32 %v2204, %v2212
  %v2214 = vld [vmem:[%s7] sm:$0xff]
  %v2215 = vld [vmem:[%s7 + $0x8] sm:$0xff]
  %v2216 = vld [vmem:[%s7 + $0x10] sm:$0xff]
  %v2217 = vld [vmem:[%s7 + $0x18] sm:$0xff]
  %v2218 = vld [vmem:[%s7 + $0x20] sm:$0xff]
  %v2219 = vld [vmem:[%s7 + $0x28] sm:$0xff]
  %v2220 = vld [vmem:[%s7 + $0x30] sm:$0xff]
  %v2221 = vld [vmem:[%s7 + $0x38] sm:$0xff]
  %v2222 = vld [vmem:[%s7 + $0x40] sm:$0xff]
  %v2223 = vld [vmem:[%s7 + $0x48] sm:$0xff]
  %v2224 = vld [vmem:[%s7 + $0x50] sm:$0xff]
  %v2225 = vld [vmem:[%s7 + $0x58] sm:$0xff]
  %v2226 = vld [vmem:[%s7 + $0x60] sm:$0xff]
  %v2227 = vld [vmem:[%s7 + $0x68] sm:$0xff]
  %v2228 = vld [vmem:[%s7 + $0x70] sm:$0xff]
  %v2229 = vld [vmem:[%s7 + $0x78] sm:$0xff]
  %2230 = vmatpush.msra.mxu0 %v2229
  %2231 = vmatpush.msra.mxu0 %v2228
  %2232 = vmatpush.msra.mxu0 %v2227
  %2233 = vmatpush.msra.mxu0 %v2226
  %2234 = vmatpush.msra.mxu0 %v2225
  %2235 = vmatpush.msra.mxu0 %v2224
  %2236 = vmatpush.msra.mxu0 %v2223
  %2237 = vmatpush.msra.mxu0 %v2222
  %2238 = vmatpush.msra.mxu0 %v2221
  %2239 = vmatpush.msra.mxu0 %v2220
  %2240 = vmatpush.msra.mxu0 %v2219
  %2241 = vmatpush.msra.mxu0 %v2218
  %2242 = vmatpush.msra.mxu0 %v2217
  %2243 = vmatpush.msra.mxu0 %v2216
  %2244 = vmatpush.msra.mxu0 %v2215
  %2245 = vmatpush.msra.mxu0 %v2214
  %2246 = vmatmul.f32.gmra.mxu0 %v2213
  %v2247 = vpop.f32.mrf.mxu0
  %v2248 = vadd.f32 0.0, %v2247
  %2249 = vdwg.mxu0
  %v2250 = vld [vmem:[%s5] sm:$0xff]
  %v2251 = vld [vmem:[%s5 + $0x8] sm:$0xff]
  %v2252 = vld [vmem:[%s5 + $0x10] sm:$0xff]
  %v2253 = vld [vmem:[%s5 + $0x18] sm:$0xff]
  %v2254 = vld [vmem:[%s5 + $0x20] sm:$0xff]
  %v2255 = vld [vmem:[%s5 + $0x28] sm:$0xff]
  %v2256 = vld [vmem:[%s5 + $0x30] sm:$0xff]
  %v2257 = vld [vmem:[%s5 + $0x38] sm:$0xff]
  %v2258 = vld [vmem:[%s6] sm:$0x1]
  %2259 = vrot.lane.b32.xlu0 %v2057, 64
  %v2260 = vpop.permute.xlu0 %2259
  %v2262 = vsel %vm45, %v2248, %v2260
  %v2264 = vperm.slane %v2258, 0
  %v2267 = vsel %vm50, %v2262, 0
  %2269 = vmatpush.msra.mxu0 0.0
  %2270 = vmatpush.msra.mxu0 0.0
  %2271 = vmatpush.msra.mxu0 0.0
  %2272 = vmatpush.msra.mxu0 0.0
  %2273 = vmatpush.msra.mxu0 0.0
  %2274 = vmatpush.msra.mxu0 0.0
  %2275 = vmatpush.msra.mxu0 0.0
  %2276 = vmatpush.msra.mxu0 0.0
  %2277 = vmatpush.msra.mxu0 %v2257
  %2278 = vmatpush.msra.mxu0 %v2256
  %2279 = vmatpush.msra.mxu0 %v2255
  %2280 = vmatpush.msra.mxu0 %v2254
  %2281 = vmatpush.msra.mxu0 %v2253
  %2282 = vmatpush.msra.mxu0 %v2252
  %2283 = vmatpush.msra.mxu0 %v2251
  %2284 = vmatpush.msra.mxu0 %v2250
  %2285 = vmatmul.f32.gmra.mxu0 %v2267
  %v2286 = vpop.f32.mrf.mxu0
  %v2287 = vadd.f32 %v2264, %v2286
  %2288 = vdwg.mxu0
  %v2289 = vxor.u32 %v2287, 2147483648
  %v2290 = vmul.f32 %v2289, 1.442695
  %v2291 = vpow.pop %v2290
  %v2292 = vadd.f32 %v2291, 1.0
  %v2293 = vrcp.pop %v2292
  %v2294 = vmul.f32 %v2292, %v2293
  %v2295 = vsub.f32 1.0, %v2294
  %v2296 = vmul.f32 %v2293, %v2295
  %v2297 = vadd.f32 %v2293, %v2296
  %vm2298 = vweird.f32 %v2292
  %vm2299 = vweird.f32 %v2293
  %vm2300 = vmor %vm2298, %vm2299
  %v2301 = vsel %vm2300, %v2293, %v2297
  %v2302 = vand.u32 2147483647, %v2292
  %vm2303 = vcmp.eq.f32.partialorder %v2302, 8.507059e+37
  %v2304 = vand.u32 %v2292, 2147483648
  %v2305 = vor.u32 1.1754944e-38, %v2304
  %v2306 = vsel %vm2303, %v2305, %v2301
  %v2307 = vmul.f32 1.0, %v2306
  %v2308 = vtanh.pop %v2287
  %v2309 = vmul.f32 %v2307, %v2051
  %2311 = vrot.lane.b32.xlu0 %v2308, 64
  %v2312 = vpop.permute.xlu0 %2311
  %v2314 = vmul.f32 %v2307, %v2312
  %2316 = vrot.lane.b32.xlu0 %v2314, 32
  %v2317 = vpop.permute.xlu0 %2316
  %v2319 = vadd.f32 %v2309, %v2317
  %v2320 = vtanh.pop %v2319
  %2322 = vrot.lane.b32.xlu0 %v2320, 64
  %v2323 = vpop.permute.xlu0 %2322
  %v2325 = vmul.f32 %v2307, %v2323
  %v2326 = vld [vmem:[%s1251] sm:$0xff]
  %v2327 = vld [vmem:[%s1251 + $0x8] sm:$0xff]
  %v2328 = vld [vmem:[%s1251 + $0x10] sm:$0xff]
  %v2329 = vld [vmem:[%s1251 + $0x18] sm:$0xff]
  %v2330 = vld [vmem:[%s1251 + $0x20] sm:$0xff]
  %v2331 = vld [vmem:[%s1251 + $0x28] sm:$0xff]
  %v2332 = vld [vmem:[%s1251 + $0x30] sm:$0xff]
  %v2333 = vld [vmem:[%s1251 + $0x38] sm:$0xff]
  %v2334 = vld [vmem:[%s1260] sm:$0x1]
  %2336 = vrot.lane.b32.xlu0 %v2325, 32
  %v2337 = vpop.permute.xlu0 %2336
  %2339 = vrot.lane.b32.xlu0 %v2137, 64
  %v2340 = vpop.permute.xlu0 %2339
  %v2342 = vsel %vm45, %v2337, %v2340
  %v2344 = vperm.slane %v2334, 0
  %v2347 = vsel %vm50, %v2342, 0
  %2349 = vmatpush.msra.mxu0 0.0
  %2350 = vmatpush.msra.mxu0 0.0
  %2351 = vmatpush.msra.mxu0 0.0
  %2352 = vmatpush.msra.mxu0 0.0
  %2353 = vmatpush.msra.mxu0 0.0
  %2354 = vmatpush.msra.mxu0 0.0
  %2355 = vmatpush.msra.mxu0 0.0
  %2356 = vmatpush.msra.mxu0 0.0
  %2357 = vmatpush.msra.mxu0 %v2333
  %2358 = vmatpush.msra.mxu0 %v2332
  %2359 = vmatpush.msra.mxu0 %v2331
  %2360 = vmatpush.msra.mxu0 %v2330
  %2361 = vmatpush.msra.mxu0 %v2329
  %2362 = vmatpush.msra.mxu0 %v2328
  %2363 = vmatpush.msra.mxu0 %v2327
  %2364 = vmatpush.msra.mxu0 %v2326
  %2365 = vmatmul.f32.gmra.mxu0 %v2347
  %v2366 = vpop.f32.mrf.mxu0
  %v2367 = vadd.f32 %v2344, %v2366
  %2368 = vdwg.mxu0
  %v2369 = vxor.u32 %v2367, 2147483648
  %v2370 = vmul.f32 %v2369, 1.442695
  %v2371 = vpow.pop %v2370
  %v2372 = vadd.f32 %v2371, 1.0
  %v2373 = vrcp.pop %v2372
  %v2374 = vmul.f32 %v2372, %v2373
  %v2375 = vsub.f32 1.0, %v2374
  %v2376 = vmul.f32 %v2373, %v2375
  %v2377 = vadd.f32 %v2373, %v2376
  %vm2378 = vweird.f32 %v2372
  %vm2379 = vweird.f32 %v2373
  %vm2380 = vmor %vm2378, %vm2379
  %v2381 = vsel %vm2380, %v2373, %v2377
  %v2382 = vand.u32 2147483647, %v2372
  %vm2383 = vcmp.eq.f32.partialorder %v2382, 8.507059e+37
  %v2384 = vand.u32 %v2372, 2147483648
  %v2385 = vor.u32 1.1754944e-38, %v2384
  %v2386 = vsel %vm2383, %v2385, %v2381
  %v2387 = vmul.f32 1.0, %v2386
  %v2388 = vtanh.pop %v2367
  %v2389 = vmul.f32 %v2387, %v2131
  %2391 = vrot.lane.b32.xlu0 %v2388, 64
  %v2392 = vpop.permute.xlu0 %2391
  %v2394 = vmul.f32 %v2387, %v2392
  %2396 = vrot.lane.b32.xlu0 %v2394, 32
  %v2397 = vpop.permute.xlu0 %2396
  %v2399 = vadd.f32 %v2389, %v2397
  %v2400 = vtanh.pop %v2399
  %2402 = vrot.lane.b32.xlu0 %v2400, 64
  %v2403 = vpop.permute.xlu0 %2402
  %v2405 = vmul.f32 %v2387, %v2403
  %v2406 = vld [vmem:[%s8] sm:$0xff]
  %v2407 = vld [vmem:[%s8 + $0x8] sm:$0xff]
  %v2408 = vld [vmem:[%s8 + $0x10] sm:$0xff]
  %v2409 = vld [vmem:[%s8 + $0x18] sm:$0xff]
  %v2410 = vld [vmem:[%s9] sm:$0x1]
  %v2412 = vperm.slane %v2410, 0
  %2415 = vrot.lane.b32.xlu0 %v2405, 32
  %v2416 = vpop.permute.xlu0 %2415
  %v2417 = vsel %vm45, %v2416, 0
  %2419 = vmatpush.msra.mxu0 0.0
  %2420 = vmatpush.msra.mxu0 0.0
  %2421 = vmatpush.msra.mxu0 0.0
  %2422 = vmatpush.msra.mxu0 0.0
  %2423 = vmatpush.msra.mxu0 0.0
  %2424 = vmatpush.msra.mxu0 0.0
  %2425 = vmatpush.msra.mxu0 0.0
  %2426 = vmatpush.msra.mxu0 0.0
  %2427 = vmatpush.msra.mxu0 0.0
  %2428 = vmatpush.msra.mxu0 0.0
  %2429 = vmatpush.msra.mxu0 0.0
  %2430 = vmatpush.msra.mxu0 0.0
  %2431 = vmatpush.msra.mxu0 %v2409
  %2432 = vmatpush.msra.mxu0 %v2408
  %2433 = vmatpush.msra.mxu0 %v2407
  %2434 = vmatpush.msra.mxu0 %v2406
  %2435 = vmatmul.f32.gmra.mxu0 %v2417
  %v2436 = vpop.f32.mrf.mxu0
  %v2437 = vadd.f32 %v2412, %v2436
  %2438 = vdwg.mxu0
  %s2439 = scalar_lea.vmem %s10, 40
  %2440 = vst [vmem:[%s2439] sm:$0xff] %v2437
  %2441 = vmax.xlane.f32.xlu0 %v2437
  %v2442 = vpop.xlane.xlu0 %2441
  %vm2443 = vcmp.eq.f32.partialorder %v2437, %v2442
  %v2444 = vsel %vm2443, %v1137, 128
  %v2445 = vand.u32 %v2444, 65535
  %v2446 = vshra.s32 %v2444, 16
  %v2447 = vcvt.s32.f32 %v2445
  %v2448 = vcvt.s32.f32 %v2446
  %2449 = vmin.xlane.f32.xlu0 %v2448
  %v2450 = vpop.xlane.xlu0 %2449
  %vm2451 = vcmp.eq.f32.partialorder %v2448, %v2450
  %v2452 = vsel %vm2451, %v2447, inf
  %2453 = vmin.xlane.f32.xlu0 %v2452
  %v2454 = vpop.xlane.xlu0 %2453
  %v2455 = vcvt.f32.s32 %v2454
  %v2456 = vcvt.f32.s32 %v2450
  %v2457 = vshll.u32 %v2456, 16
  %v2458 = vadd.s32 %v2457, %v2455
  %vm2459 = vcmp.eq.s32.totalorder %v1137, %v2458
  %v2460 = vsel %vm2459, 1, 0
  %v2461 = vcvt.s32.f32 %v2460
  %s2462 = scalar_lea.vmem %s2, 5
  %v2463 = vld [vmem:[%s2462] sm:$0x1]
  %s2464 = scalar_lea.vmem %s1, 40
  %v2465 = vld [vmem:[%s2464] sm:$0xff]
  %v2467 = vperm.slane %v2463, 0
  %2468 = vset.pattern.permute.xlu0 0
  %2469 = vperm.xlu0 %2468, %v2467
  %v2470 = vpop.permute.xlu0 %2469
  %v2472 = vmul.f32 %v2470, %v2465
  %v2473 = vsub.f32 1.0, %v2463
  %v2475 = vperm.slane %v2473, 0
  %2476 = vset.pattern.permute.xlu0 0
  %2477 = vperm.xlu0 %2476, %v2475
  %v2478 = vpop.permute.xlu0 %2477
  %v2480 = vmul.f32 %v2478, %v2461
  %v2481 = vadd.f32 %v2472, %v2480
  %v2482 = vld [vmem:[%s7] sm:$0xff]
  %v2483 = vld [vmem:[%s7 + $0x8] sm:$0xff]
  %v2484 = vld [vmem:[%s7 + $0x10] sm:$0xff]
  %v2485 = vld [vmem:[%s7 + $0x18] sm:$0xff]
  %v2486 = vld [vmem:[%s7 + $0x20] sm:$0xff]
  %v2487 = vld [vmem:[%s7 + $0x28] sm:$0xff]
  %v2488 = vld [vmem:[%s7 + $0x30] sm:$0xff]
  %v2489 = vld [vmem:[%s7 + $0x38] sm:$0xff]
  %v2490 = vld [vmem:[%s7 + $0x40] sm:$0xff]
  %v2491 = vld [vmem:[%s7 + $0x48] sm:$0xff]
  %v2492 = vld [vmem:[%s7 + $0x50] sm:$0xff]
  %v2493 = vld [vmem:[%s7 + $0x58] sm:$0xff]
  %v2494 = vld [vmem:[%s7 + $0x60] sm:$0xff]
  %v2495 = vld [vmem:[%s7 + $0x68] sm:$0xff]
  %v2496 = vld [vmem:[%s7 + $0x70] sm:$0xff]
  %v2497 = vld [vmem:[%s7 + $0x78] sm:$0xff]
  %2498 = vmatpush.msra.mxu0 %v2497
  %2499 = vmatpush.msra.mxu0 %v2496
  %2500 = vmatpush.msra.mxu0 %v2495
  %2501 = vmatpush.msra.mxu0 %v2494
  %2502 = vmatpush.msra.mxu0 %v2493
  %2503 = vmatpush.msra.mxu0 %v2492
  %2504 = vmatpush.msra.mxu0 %v2491
  %2505 = vmatpush.msra.mxu0 %v2490
  %2506 = vmatpush.msra.mxu0 %v2489
  %2507 = vmatpush.msra.mxu0 %v2488
  %2508 = vmatpush.msra.mxu0 %v2487
  %2509 = vmatpush.msra.mxu0 %v2486
  %2510 = vmatpush.msra.mxu0 %v2485
  %2511 = vmatpush.msra.mxu0 %v2484
  %2512 = vmatpush.msra.mxu0 %v2483
  %2513 = vmatpush.msra.mxu0 %v2482
  %2514 = vmatmul.f32.gmra.mxu0 %v2481
  %v2515 = vpop.f32.mrf.mxu0
  %v2516 = vadd.f32 0.0, %v2515
  %2517 = vdwg.mxu0
  %v2518 = vld [vmem:[%s5] sm:$0xff]
  %v2519 = vld [vmem:[%s5 + $0x8] sm:$0xff]
  %v2520 = vld [vmem:[%s5 + $0x10] sm:$0xff]
  %v2521 = vld [vmem:[%s5 + $0x18] sm:$0xff]
  %v2522 = vld [vmem:[%s5 + $0x20] sm:$0xff]
  %v2523 = vld [vmem:[%s5 + $0x28] sm:$0xff]
  %v2524 = vld [vmem:[%s5 + $0x30] sm:$0xff]
  %v2525 = vld [vmem:[%s5 + $0x38] sm:$0xff]
  %v2526 = vld [vmem:[%s6] sm:$0x1]
  %2527 = vrot.lane.b32.xlu0 %v2325, 64
  %v2528 = vpop.permute.xlu0 %2527
  %v2530 = vsel %vm45, %v2516, %v2528
  %v2532 = vperm.slane %v2526, 0
  %v2535 = vsel %vm50, %v2530, 0
  %2537 = vmatpush.msra.mxu0 0.0
  %2538 = vmatpush.msra.mxu0 0.0
  %2539 = vmatpush.msra.mxu0 0.0
  %2540 = vmatpush.msra.mxu0 0.0
  %2541 = vmatpush.msra.mxu0 0.0
  %2542 = vmatpush.msra.mxu0 0.0
  %2543 = vmatpush.msra.mxu0 0.0
  %2544 = vmatpush.msra.mxu0 0.0
  %2545 = vmatpush.msra.mxu0 %v2525
  %2546 = vmatpush.msra.mxu0 %v2524
  %2547 = vmatpush.msra.mxu0 %v2523
  %2548 = vmatpush.msra.mxu0 %v2522
  %2549 = vmatpush.msra.mxu0 %v2521
  %2550 = vmatpush.msra.mxu0 %v2520
  %2551 = vmatpush.msra.mxu0 %v2519
  %2552 = vmatpush.msra.mxu0 %v2518
  %2553 = vmatmul.f32.gmra.mxu0 %v2535
  %v2554 = vpop.f32.mrf.mxu0
  %v2555 = vadd.f32 %v2532, %v2554
  %2556 = vdwg.mxu0
  %v2557 = vxor.u32 %v2555, 2147483648
  %v2558 = vmul.f32 %v2557, 1.442695
  %v2559 = vpow.pop %v2558
  %v2560 = vadd.f32 %v2559, 1.0
  %v2561 = vrcp.pop %v2560
  %v2562 = vmul.f32 %v2560, %v2561
  %v2563 = vsub.f32 1.0, %v2562
  %v2564 = vmul.f32 %v2561, %v2563
  %v2565 = vadd.f32 %v2561, %v2564
  %vm2566 = vweird.f32 %v2560
  %vm2567 = vweird.f32 %v2561
  %vm2568 = vmor %vm2566, %vm2567
  %v2569 = vsel %vm2568, %v2561, %v2565
  %v2570 = vand.u32 2147483647, %v2560
  %vm2571 = vcmp.eq.f32.partialorder %v2570, 8.507059e+37
  %v2572 = vand.u32 %v2560, 2147483648
  %v2573 = vor.u32 1.1754944e-38, %v2572
  %v2574 = vsel %vm2571, %v2573, %v2569
  %v2575 = vmul.f32 1.0, %v2574
  %v2576 = vtanh.pop %v2555
  %v2577 = vmul.f32 %v2575, %v2319
  %2579 = vrot.lane.b32.xlu0 %v2576, 64
  %v2580 = vpop.permute.xlu0 %2579
  %v2582 = vmul.f32 %v2575, %v2580
  %2584 = vrot.lane.b32.xlu0 %v2582, 32
  %v2585 = vpop.permute.xlu0 %2584
  %v2587 = vadd.f32 %v2577, %v2585
  %v2588 = vtanh.pop %v2587
  %2590 = vrot.lane.b32.xlu0 %v2588, 64
  %v2591 = vpop.permute.xlu0 %2590
  %v2593 = vmul.f32 %v2575, %v2591
  %v2594 = vld [vmem:[%s1251] sm:$0xff]
  %v2595 = vld [vmem:[%s1251 + $0x8] sm:$0xff]
  %v2596 = vld [vmem:[%s1251 + $0x10] sm:$0xff]
  %v2597 = vld [vmem:[%s1251 + $0x18] sm:$0xff]
  %v2598 = vld [vmem:[%s1251 + $0x20] sm:$0xff]
  %v2599 = vld [vmem:[%s1251 + $0x28] sm:$0xff]
  %v2600 = vld [vmem:[%s1251 + $0x30] sm:$0xff]
  %v2601 = vld [vmem:[%s1251 + $0x38] sm:$0xff]
  %v2602 = vld [vmem:[%s1260] sm:$0x1]
  %2604 = vrot.lane.b32.xlu0 %v2593, 32
  %v2605 = vpop.permute.xlu0 %2604
  %2607 = vrot.lane.b32.xlu0 %v2405, 64
  %v2608 = vpop.permute.xlu0 %2607
  %v2610 = vsel %vm45, %v2605, %v2608
  %v2612 = vperm.slane %v2602, 0
  %v2615 = vsel %vm50, %v2610, 0
  %2617 = vmatpush.msra.mxu0 0.0
  %2618 = vmatpush.msra.mxu0 0.0
  %2619 = vmatpush.msra.mxu0 0.0
  %2620 = vmatpush.msra.mxu0 0.0
  %2621 = vmatpush.msra.mxu0 0.0
  %2622 = vmatpush.msra.mxu0 0.0
  %2623 = vmatpush.msra.mxu0 0.0
  %2624 = vmatpush.msra.mxu0 0.0
  %2625 = vmatpush.msra.mxu0 %v2601
  %2626 = vmatpush.msra.mxu0 %v2600
  %2627 = vmatpush.msra.mxu0 %v2599
  %2628 = vmatpush.msra.mxu0 %v2598
  %2629 = vmatpush.msra.mxu0 %v2597
  %2630 = vmatpush.msra.mxu0 %v2596
  %2631 = vmatpush.msra.mxu0 %v2595
  %2632 = vmatpush.msra.mxu0 %v2594
  %2633 = vmatmul.f32.gmra.mxu0 %v2615
  %v2634 = vpop.f32.mrf.mxu0
  %v2635 = vadd.f32 %v2612, %v2634
  %2636 = vdwg.mxu0
  %v2637 = vxor.u32 %v2635, 2147483648
  %v2638 = vmul.f32 %v2637, 1.442695
  %v2639 = vpow.pop %v2638
  %v2640 = vadd.f32 %v2639, 1.0
  %v2641 = vrcp.pop %v2640
  %v2642 = vmul.f32 %v2640, %v2641
  %v2643 = vsub.f32 1.0, %v2642
  %v2644 = vmul.f32 %v2641, %v2643
  %v2645 = vadd.f32 %v2641, %v2644
  %vm2646 = vweird.f32 %v2640
  %vm2647 = vweird.f32 %v2641
  %vm2648 = vmor %vm2646, %vm2647
  %v2649 = vsel %vm2648, %v2641, %v2645
  %v2650 = vand.u32 2147483647, %v2640
  %vm2651 = vcmp.eq.f32.partialorder %v2650, 8.507059e+37
  %v2652 = vand.u32 %v2640, 2147483648
  %v2653 = vor.u32 1.1754944e-38, %v2652
  %v2654 = vsel %vm2651, %v2653, %v2649
  %v2655 = vmul.f32 1.0, %v2654
  %v2656 = vtanh.pop %v2635
  %v2657 = vmul.f32 %v2655, %v2399
  %2659 = vrot.lane.b32.xlu0 %v2656, 64
  %v2660 = vpop.permute.xlu0 %2659
  %v2662 = vmul.f32 %v2655, %v2660
  %2664 = vrot.lane.b32.xlu0 %v2662, 32
  %v2665 = vpop.permute.xlu0 %2664
  %v2667 = vadd.f32 %v2657, %v2665
  %v2668 = vtanh.pop %v2667
  %2670 = vrot.lane.b32.xlu0 %v2668, 64
  %v2671 = vpop.permute.xlu0 %2670
  %v2673 = vmul.f32 %v2655, %v2671
  %v2674 = vld [vmem:[%s8] sm:$0xff]
  %v2675 = vld [vmem:[%s8 + $0x8] sm:$0xff]
  %v2676 = vld [vmem:[%s8 + $0x10] sm:$0xff]
  %v2677 = vld [vmem:[%s8 + $0x18] sm:$0xff]
  %v2678 = vld [vmem:[%s9] sm:$0x1]
  %v2680 = vperm.slane %v2678, 0
  %2683 = vrot.lane.b32.xlu0 %v2673, 32
  %v2684 = vpop.permute.xlu0 %2683
  %v2685 = vsel %vm45, %v2684, 0
  %2687 = vmatpush.msra.mxu0 0.0
  %2688 = vmatpush.msra.mxu0 0.0
  %2689 = vmatpush.msra.mxu0 0.0
  %2690 = vmatpush.msra.mxu0 0.0
  %2691 = vmatpush.msra.mxu0 0.0
  %2692 = vmatpush.msra.mxu0 0.0
  %2693 = vmatpush.msra.mxu0 0.0
  %2694 = vmatpush.msra.mxu0 0.0
  %2695 = vmatpush.msra.mxu0 0.0
  %2696 = vmatpush.msra.mxu0 0.0
  %2697 = vmatpush.msra.mxu0 0.0
  %2698 = vmatpush.msra.mxu0 0.0
  %2699 = vmatpush.msra.mxu0 %v2677
  %2700 = vmatpush.msra.mxu0 %v2676
  %2701 = vmatpush.msra.mxu0 %v2675
  %2702 = vmatpush.msra.mxu0 %v2674
  %2703 = vmatmul.f32.gmra.mxu0 %v2685
  %v2704 = vpop.f32.mrf.mxu0
  %v2705 = vadd.f32 %v2680, %v2704
  %2706 = vdwg.mxu0
  %s2707 = scalar_lea.vmem %s10, 48
  %2708 = vst [vmem:[%s2707] sm:$0xff] %v2705
  %2709 = vmax.xlane.f32.xlu0 %v2705
  %v2710 = vpop.xlane.xlu0 %2709
  %vm2711 = vcmp.eq.f32.partialorder %v2705, %v2710
  %v2712 = vsel %vm2711, %v1137, 128
  %v2713 = vand.u32 %v2712, 65535
  %v2714 = vshra.s32 %v2712, 16
  %v2715 = vcvt.s32.f32 %v2713
  %v2716 = vcvt.s32.f32 %v2714
  %2717 = vmin.xlane.f32.xlu0 %v2716
  %v2718 = vpop.xlane.xlu0 %2717
  %vm2719 = vcmp.eq.f32.partialorder %v2716, %v2718
  %v2720 = vsel %vm2719, %v2715, inf
  %2721 = vmin.xlane.f32.xlu0 %v2720
  %v2722 = vpop.xlane.xlu0 %2721
  %v2723 = vcvt.f32.s32 %v2722
  %v2724 = vcvt.f32.s32 %v2718
  %v2725 = vshll.u32 %v2724, 16
  %v2726 = vadd.s32 %v2725, %v2723
  %vm2727 = vcmp.eq.s32.totalorder %v1137, %v2726
  %v2728 = vsel %vm2727, 1, 0
  %v2729 = vcvt.s32.f32 %v2728
  %s2730 = scalar_lea.vmem %s2, 6
  %v2731 = vld [vmem:[%s2730] sm:$0x1]
  %s2732 = scalar_lea.vmem %s1, 48
  %v2733 = vld [vmem:[%s2732] sm:$0xff]
  %v2735 = vperm.slane %v2731, 0
  %2736 = vset.pattern.permute.xlu0 0
  %2737 = vperm.xlu0 %2736, %v2735
  %v2738 = vpop.permute.xlu0 %2737
  %v2740 = vmul.f32 %v2738, %v2733
  %v2741 = vsub.f32 1.0, %v2731
  %v2743 = vperm.slane %v2741, 0
  %2744 = vset.pattern.permute.xlu0 0
  %2745 = vperm.xlu0 %2744, %v2743
  %v2746 = vpop.permute.xlu0 %2745
  %v2748 = vmul.f32 %v2746, %v2729
  %v2749 = vadd.f32 %v2740, %v2748
  %v2750 = vld [vmem:[%s7] sm:$0xff]
  %v2751 = vld [vmem:[%s7 + $0x8] sm:$0xff]
  %v2752 = vld [vmem:[%s7 + $0x10] sm:$0xff]
  %v2753 = vld [vmem:[%s7 + $0x18] sm:$0xff]
  %v2754 = vld [vmem:[%s7 + $0x20] sm:$0xff]
  %v2755 = vld [vmem:[%s7 + $0x28] sm:$0xff]
  %v2756 = vld [vmem:[%s7 + $0x30] sm:$0xff]
  %v2757 = vld [vmem:[%s7 + $0x38] sm:$0xff]
  %v2758 = vld [vmem:[%s7 + $0x40] sm:$0xff]
  %v2759 = vld [vmem:[%s7 + $0x48] sm:$0xff]
  %v2760 = vld [vmem:[%s7 + $0x50] sm:$0xff]
  %v2761 = vld [vmem:[%s7 + $0x58] sm:$0xff]
  %v2762 = vld [vmem:[%s7 + $0x60] sm:$0xff]
  %v2763 = vld [vmem:[%s7 + $0x68] sm:$0xff]
  %v2764 = vld [vmem:[%s7 + $0x70] sm:$0xff]
  %v2765 = vld [vmem:[%s7 + $0x78] sm:$0xff]
  %2766 = vmatpush.msra.mxu0 %v2765
  %2767 = vmatpush.msra.mxu0 %v2764
  %2768 = vmatpush.msra.mxu0 %v2763
  %2769 = vmatpush.msra.mxu0 %v2762
  %2770 = vmatpush.msra.mxu0 %v2761
  %2771 = vmatpush.msra.mxu0 %v2760
  %2772 = vmatpush.msra.mxu0 %v2759
  %2773 = vmatpush.msra.mxu0 %v2758
  %2774 = vmatpush.msra.mxu0 %v2757
  %2775 = vmatpush.msra.mxu0 %v2756
  %2776 = vmatpush.msra.mxu0 %v2755
  %2777 = vmatpush.msra.mxu0 %v2754
  %2778 = vmatpush.msra.mxu0 %v2753
  %2779 = vmatpush.msra.mxu0 %v2752
  %2780 = vmatpush.msra.mxu0 %v2751
  %2781 = vmatpush.msra.mxu0 %v2750
  %2782 = vmatmul.f32.gmra.mxu0 %v2749
  %v2783 = vpop.f32.mrf.mxu0
  %v2784 = vadd.f32 0.0, %v2783
  %2785 = vdwg.mxu0
  %v2786 = vld [vmem:[%s5] sm:$0xff]
  %v2787 = vld [vmem:[%s5 + $0x8] sm:$0xff]
  %v2788 = vld [vmem:[%s5 + $0x10] sm:$0xff]
  %v2789 = vld [vmem:[%s5 + $0x18] sm:$0xff]
  %v2790 = vld [vmem:[%s5 + $0x20] sm:$0xff]
  %v2791 = vld [vmem:[%s5 + $0x28] sm:$0xff]
  %v2792 = vld [vmem:[%s5 + $0x30] sm:$0xff]
  %v2793 = vld [vmem:[%s5 + $0x38] sm:$0xff]
  %v2794 = vld [vmem:[%s6] sm:$0x1]
  %2795 = vrot.lane.b32.xlu0 %v2593, 64
  %v2796 = vpop.permute.xlu0 %2795
  %v2798 = vsel %vm45, %v2784, %v2796
  %v2800 = vperm.slane %v2794, 0
  %v2803 = vsel %vm50, %v2798, 0
  %2805 = vmatpush.msra.mxu0 0.0
  %2806 = vmatpush.msra.mxu0 0.0
  %2807 = vmatpush.msra.mxu0 0.0
  %2808 = vmatpush.msra.mxu0 0.0
  %2809 = vmatpush.msra.mxu0 0.0
  %2810 = vmatpush.msra.mxu0 0.0
  %2811 = vmatpush.msra.mxu0 0.0
  %2812 = vmatpush.msra.mxu0 0.0
  %2813 = vmatpush.msra.mxu0 %v2793
  %2814 = vmatpush.msra.mxu0 %v2792
  %2815 = vmatpush.msra.mxu0 %v2791
  %2816 = vmatpush.msra.mxu0 %v2790
  %2817 = vmatpush.msra.mxu0 %v2789
  %2818 = vmatpush.msra.mxu0 %v2788
  %2819 = vmatpush.msra.mxu0 %v2787
  %2820 = vmatpush.msra.mxu0 %v2786
  %2821 = vmatmul.f32.gmra.mxu0 %v2803
  %v2822 = vpop.f32.mrf.mxu0
  %v2823 = vadd.f32 %v2800, %v2822
  %2824 = vdwg.mxu0
  %v2825 = vxor.u32 %v2823, 2147483648
  %v2826 = vmul.f32 %v2825, 1.442695
  %v2827 = vpow.pop %v2826
  %v2828 = vadd.f32 %v2827, 1.0
  %v2829 = vrcp.pop %v2828
  %v2830 = vmul.f32 %v2828, %v2829
  %v2831 = vsub.f32 1.0, %v2830
  %v2832 = vmul.f32 %v2829, %v2831
  %v2833 = vadd.f32 %v2829, %v2832
  %vm2834 = vweird.f32 %v2828
  %vm2835 = vweird.f32 %v2829
  %vm2836 = vmor %vm2834, %vm2835
  %v2837 = vsel %vm2836, %v2829, %v2833
  %v2838 = vand.u32 2147483647, %v2828
  %vm2839 = vcmp.eq.f32.partialorder %v2838, 8.507059e+37
  %v2840 = vand.u32 %v2828, 2147483648
  %v2841 = vor.u32 1.1754944e-38, %v2840
  %v2842 = vsel %vm2839, %v2841, %v2837
  %v2843 = vmul.f32 1.0, %v2842
  %v2844 = vtanh.pop %v2823
  %v2845 = vmul.f32 %v2843, %v2587
  %2847 = vrot.lane.b32.xlu0 %v2844, 64
  %v2848 = vpop.permute.xlu0 %2847
  %v2850 = vmul.f32 %v2843, %v2848
  %2852 = vrot.lane.b32.xlu0 %v2850, 32
  %v2853 = vpop.permute.xlu0 %2852
  %v2855 = vadd.f32 %v2845, %v2853
  %v2856 = vtanh.pop %v2855
  %2858 = vrot.lane.b32.xlu0 %v2856, 64
  %v2859 = vpop.permute.xlu0 %2858
  %v2861 = vmul.f32 %v2843, %v2859
  %v2862 = vld [vmem:[%s1251] sm:$0xff]
  %v2863 = vld [vmem:[%s1251 + $0x8] sm:$0xff]
  %v2864 = vld [vmem:[%s1251 + $0x10] sm:$0xff]
  %v2865 = vld [vmem:[%s1251 + $0x18] sm:$0xff]
  %v2866 = vld [vmem:[%s1251 + $0x20] sm:$0xff]
  %v2867 = vld [vmem:[%s1251 + $0x28] sm:$0xff]
  %v2868 = vld [vmem:[%s1251 + $0x30] sm:$0xff]
  %v2869 = vld [vmem:[%s1251 + $0x38] sm:$0xff]
  %v2870 = vld [vmem:[%s1260] sm:$0x1]
  %2872 = vrot.lane.b32.xlu0 %v2861, 32
  %v2873 = vpop.permute.xlu0 %2872
  %2875 = vrot.lane.b32.xlu0 %v2673, 64
  %v2876 = vpop.permute.xlu0 %2875
  %v2878 = vsel %vm45, %v2873, %v2876
  %v2880 = vperm.slane %v2870, 0
  %v2883 = vsel %vm50, %v2878, 0
  %2885 = vmatpush.msra.mxu0 0.0
  %2886 = vmatpush.msra.mxu0 0.0
  %2887 = vmatpush.msra.mxu0 0.0
  %2888 = vmatpush.msra.mxu0 0.0
  %2889 = vmatpush.msra.mxu0 0.0
  %2890 = vmatpush.msra.mxu0 0.0
  %2891 = vmatpush.msra.mxu0 0.0
  %2892 = vmatpush.msra.mxu0 0.0
  %2893 = vmatpush.msra.mxu0 %v2869
  %2894 = vmatpush.msra.mxu0 %v2868
  %2895 = vmatpush.msra.mxu0 %v2867
  %2896 = vmatpush.msra.mxu0 %v2866
  %2897 = vmatpush.msra.mxu0 %v2865
  %2898 = vmatpush.msra.mxu0 %v2864
  %2899 = vmatpush.msra.mxu0 %v2863
  %2900 = vmatpush.msra.mxu0 %v2862
  %2901 = vmatmul.f32.gmra.mxu0 %v2883
  %v2902 = vpop.f32.mrf.mxu0
  %v2903 = vadd.f32 %v2880, %v2902
  %2904 = vdwg.mxu0
  %v2905 = vxor.u32 %v2903, 2147483648
  %v2906 = vmul.f32 %v2905, 1.442695
  %v2907 = vpow.pop %v2906
  %v2908 = vadd.f32 %v2907, 1.0
  %v2909 = vrcp.pop %v2908
  %v2910 = vmul.f32 %v2908, %v2909
  %v2911 = vsub.f32 1.0, %v2910
  %v2912 = vmul.f32 %v2909, %v2911
  %v2913 = vadd.f32 %v2909, %v2912
  %vm2914 = vweird.f32 %v2908
  %vm2915 = vweird.f32 %v2909
  %vm2916 = vmor %vm2914, %vm2915
  %v2917 = vsel %vm2916, %v2909, %v2913
  %v2918 = vand.u32 2147483647, %v2908
  %vm2919 = vcmp.eq.f32.partialorder %v2918, 8.507059e+37
  %v2920 = vand.u32 %v2908, 2147483648
  %v2921 = vor.u32 1.1754944e-38, %v2920
  %v2922 = vsel %vm2919, %v2921, %v2917
  %v2923 = vmul.f32 1.0, %v2922
  %v2924 = vtanh.pop %v2903
  %v2925 = vmul.f32 %v2923, %v2667
  %2927 = vrot.lane.b32.xlu0 %v2924, 64
  %v2928 = vpop.permute.xlu0 %2927
  %v2930 = vmul.f32 %v2923, %v2928
  %2932 = vrot.lane.b32.xlu0 %v2930, 32
  %v2933 = vpop.permute.xlu0 %2932
  %v2935 = vadd.f32 %v2925, %v2933
  %v2936 = vtanh.pop %v2935
  %2938 = vrot.lane.b32.xlu0 %v2936, 64
  %v2939 = vpop.permute.xlu0 %2938
  %v2941 = vmul.f32 %v2923, %v2939
  %v2942 = vld [vmem:[%s8] sm:$0xff]
  %v2943 = vld [vmem:[%s8 + $0x8] sm:$0xff]
  %v2944 = vld [vmem:[%s8 + $0x10] sm:$0xff]
  %v2945 = vld [vmem:[%s8 + $0x18] sm:$0xff]
  %v2946 = vld [vmem:[%s9] sm:$0x1]
  %v2948 = vperm.slane %v2946, 0
  %2951 = vrot.lane.b32.xlu0 %v2941, 32
  %v2952 = vpop.permute.xlu0 %2951
  %v2953 = vsel %vm45, %v2952, 0
  %2955 = vmatpush.msra.mxu0 0.0
  %2956 = vmatpush.msra.mxu0 0.0
  %2957 = vmatpush.msra.mxu0 0.0
  %2958 = vmatpush.msra.mxu0 0.0
  %2959 = vmatpush.msra.mxu0 0.0
  %2960 = vmatpush.msra.mxu0 0.0
  %2961 = vmatpush.msra.mxu0 0.0
  %2962 = vmatpush.msra.mxu0 0.0
  %2963 = vmatpush.msra.mxu0 0.0
  %2964 = vmatpush.msra.mxu0 0.0
  %2965 = vmatpush.msra.mxu0 0.0
  %2966 = vmatpush.msra.mxu0 0.0
  %2967 = vmatpush.msra.mxu0 %v2945
  %2968 = vmatpush.msra.mxu0 %v2944
  %2969 = vmatpush.msra.mxu0 %v2943
  %2970 = vmatpush.msra.mxu0 %v2942
  %2971 = vmatmul.f32.gmra.mxu0 %v2953
  %v2972 = vpop.f32.mrf.mxu0
  %v2973 = vadd.f32 %v2948, %v2972
  %2974 = vdwg.mxu0
  %s2975 = scalar_lea.vmem %s10, 56
  %2976 = vst [vmem:[%s2975] sm:$0xff] %v2973
  // Predicated region
  $region42: #{seq2seq_forward.1} parent=0 // pred_check
    _
  $region43: #{seq2seq_forward.1} parent=0 // pred_check_branch
    %2978 = sbr.rel (0) target = $region45
  $region44: #{seq2seq_forward.1} parent=0 // pred_region
    _
  $region45: #{seq2seq_forward.1} parent=0 // pred_fallthru
    _
  // Predicated region
  $region46: #{seq2seq_forward.1} parent=0 // pred_check
    _
  $region47: #{seq2seq_forward.1} parent=0 // pred_check_branch
    %2980 = sbr.rel (0) target = $region49
  $region48: #{seq2seq_forward.1} parent=0 // pred_region
    _
  $region49: #{seq2seq_forward.1} parent=0 // pred_fallthru
    _

</llo_original>
